<compile_context>
chip_gen: v7x
topology: tpu7x:2x2x1
jax: 0.10.0
libtpu: 0.0.40
codegen_flags: <defaults>
</compile_context>

<pallas_src>
import functools

import jax
import jax.numpy as jnp
import numpy as np
from jax.experimental import pallas as pl
from jax.experimental.pallas import tpu as pltpu

NEG_SLOPE = 0.01      # nn.LeakyReLU default
N_STAGES = 9          # conv0 is applied 9 times in forward()
_ROW_BUDGET = 256     # activation rows kept live through the 9-stage unroll (~32 vregs)
_LANE = 128           # lane width / padding target for the class dim


def _leaky(x):
    return jnp.where(x > 0, x, NEG_SLOPE * x)


def _choose_hw_tile(hw):
    """Largest multiple-of-8 divisor of hw that is <= _ROW_BUDGET (else full hw)."""
    if hw <= _ROW_BUDGET:
        return hw
    for cand in range(_ROW_BUDGET, 7, -8):
        if hw % cand == 0:
            return cand
    return hw          # fall back to the full spatial extent (still correct)


def _choose_batch_tile(b, thw):
    """Batch elements per grid step.

    TB > 1 only when THW is sublane-aligned so the in-kernel (TB, THW, C) ->
    (TB*THW, C) flatten is layout preserving; also keep >= 2 batch tiles when
    possible so both v7x TensorCores get work via dimension_semantics."""
    if thw % 8 != 0:
        return 1
    tb = max(1, _ROW_BUDGET // thw)
    if b >= 2:
        tb = min(tb, -(-b // 2))
    return max(1, min(tb, b))


def _make_fused_kernel(n_stages, inv_hw, num_classes):
    def kernel(x_ref, cw_ref, cb_ref,
               w1_ref, b1_ref, w2_ref, b2_ref, w3_ref, b3_ref, w4_ref, b4_ref,
               pooled_ref, y_ref):
        h_idx = pl.program_id(1)
        tb, thw, c = x_ref.shape

        # --- 9 shared-weight 1x1-conv stages on the whole batched row tile -------
        x = x_ref[...].reshape(tb * thw, c)          # rows x channels
        w = cw_ref[...]                              # (C_in, C_out)
        b = cb_ref[...]                              # (1, C_out)
        stage_sums = []
        for _ in range(n_stages):                    # static unroll, tiny trip count
            x = _leaky(jnp.dot(x, w, preferred_element_type=jnp.float32) + b)
            stage_sums.append(jnp.sum(x.reshape(tb, thw, c), axis=1))
        part = jnp.stack(stage_sums, axis=1)         # (tb, n_stages, c) partial sums

        # --- accumulate pooled sums in the resident output block across HW tiles --
        @pl.when(h_idx == 0)
        def _():
            pooled_ref[...] = part

        @pl.when(h_idx > 0)
        def _():
            pooled_ref[...] = pooled_ref[...] + part

        # --- last HW tile: finalize mean, run fc0 MLP + softmax, write outputs ----
        @pl.when(h_idx == pl.num_programs(1) - 1)
        def _():
            pooled = pooled_ref[...] * inv_hw        # (tb, n_stages, c) means
            pooled_ref[...] = pooled
            for t in range(tb):                      # static unroll; tb is small
                p = pooled[t]                        # (n_stages, c)
                h1 = _leaky(jnp.dot(p, w1_ref[...],
                                    preferred_element_type=jnp.float32) + b1_ref[...])
                h2 = _leaky(jnp.dot(h1, w2_ref[...],
                                    preferred_element_type=jnp.float32) + b2_ref[...])
                h3 = _leaky(jnp.dot(h2, w3_ref[...],
                                    preferred_element_type=jnp.float32) + b3_ref[...])
                logits = (jnp.dot(h3, w4_ref[...],
                                  preferred_element_type=jnp.float32) + b4_ref[...])
                # class dim is zero-padded to 128 lanes -> mask pads out of softmax
                col = jax.lax.broadcasted_iota(jnp.int32, logits.shape, 1)
                logits = jnp.where(col < num_classes, logits, jnp.float32(-1e30))
                m = jnp.max(logits, axis=-1, keepdims=True)
                e = jnp.exp(logits - m)
                y_ref[t] = e / jnp.sum(e, axis=-1, keepdims=True)

    return kernel


def tcnn_auxcl_forward(x_nchw, params):
    """Returns (y0..y8, x0..x8) matching tCNN_auxcl.forward()."""
    B, C, H, W = x_nchw.shape
    HW = H * W
    NC = params["w4"].shape[1]
    NCP = -(-NC // _LANE) * _LANE            # lane-dense (128-padded) class dim

    THW = _choose_hw_tile(HW)
    n_hw = HW // THW
    TB = _choose_batch_tile(B, THW)
    B_pad = -(-B // TB) * TB

    # NCHW -> (B, HW, C) rows-x-channels; pad batch to a multiple of TB (zeros).
    x_rows = jnp.transpose(x_nchw, (0, 2, 3, 1)).reshape(B, HW, C)
    if B_pad != B:
        x_rows = jnp.pad(x_rows, ((0, B_pad - B), (0, 0), (0, 0)))

    w4p = jnp.pad(params["w4"], ((0, 0), (0, NCP - NC)))
    b4p = jnp.pad(params["b4"], ((0, 0), (0, NCP - NC)))
    weights = (params["conv_w"], params["conv_b"],
               params["w1"], params["b1"], params["w2"], params["b2"],
               params["w3"], params["b3"], w4p, b4p)

    def _full(arr):                                  # resident full-array block
        nd = arr.ndim
        return pl.BlockSpec(arr.shape, lambda bi, hi, _nd=nd: (0,) * _nd)

    kernel = _make_fused_kernel(N_STAGES, 1.0 / HW, NC)

    pooled_pad, y_pad = pl.pallas_call(
        kernel,
        out_shape=(
            jax.ShapeDtypeStruct((B_pad, N_STAGES, C), jnp.float32),
            jax.ShapeDtypeStruct((B_pad, N_STAGES, NCP), jnp.float32),
        ),
        grid=(B_pad // TB, n_hw),                    # (batch tiles, HW tiles)
        in_specs=[pl.BlockSpec((TB, THW, C), lambda bi, hi: (bi, hi, 0))]
                + [_full(wt) for wt in weights],
        out_specs=(
            pl.BlockSpec((TB, N_STAGES, C), lambda bi, hi: (bi, 0, 0)),
            pl.BlockSpec((TB, N_STAGES, NCP), lambda bi, hi: (bi, 0, 0)),
        ),
        compiler_params=pltpu.CompilerParams(
            dimension_semantics=("parallel", "arbitrary")),
    )(x_rows, *weights)

    pooled = pooled_pad[:B]                          # (B, 9, 60)
    y = y_pad[:B, :, :NC]                            # (B, 9, num_classes)
    ys = tuple(y[:, s, :] for s in range(N_STAGES))
    xs = tuple(pooled[:, s, :] for s in range(N_STAGES))
    return ys + xs


# ----------------------------------------------------------------------------
# Plain-JAX reference for sanity checking (same math, no Pallas).
# ----------------------------------------------------------------------------
def reference_forward(x_nchw, params):
    B, C, H, W = x_nchw.shape
    x = jnp.transpose(x_nchw, (0, 2, 3, 1)).reshape(B, H * W, C)
    pooled = []
    for _ in range(N_STAGES):
        x = _leaky(jnp.einsum("bnc,co->bno", x, params["conv_w"])
                   + params["conv_b"][None])
        pooled.append(jnp.mean(x, axis=1))
    ys = []
    for p in pooled:
        h = _leaky(p @ params["w1"] + params["b1"])
        h = _leaky(h @ params["w2"] + params["b2"])
        h = _leaky(h @ params["w3"] + params["b3"])
        logits = h @ params["w4"] + params["b4"]
        ys.append(jax.nn.softmax(logits, axis=-1))
    return tuple(ys) + tuple(pooled)


def init_params(key, num_classes):
    C = 60
    h0, h1, h2 = 512, 256, 128
    ks = jax.random.split(key, 10)

    def lin(k, fan_in, fan_out):
        scale = 1.0 / np.sqrt(fan_in)
        kw, kb = jax.random.split(k)
        w = jax.random.uniform(kw, (fan_in, fan_out), jnp.float32, -scale, scale)
        b = jax.random.uniform(kb, (1, fan_out), jnp.float32, -scale, scale)
        return w, b

    conv_w, conv_b = lin(ks[0], C, C)   # (C_in, C_out) layout for the 1x1 conv
    w1, b1 = lin(ks[1], C, h0)
    w2, b2 = lin(ks[2], h0, h1)
    w3, b3 = lin(ks[3], h1, h2)
    w4, b4 = lin(ks[4], h2, num_classes)
    return dict(conv_w=conv_w, conv_b=conv_b,
                w1=w1, b1=b1, w2=w2, b2=b2, w3=w3, b3=b3, w4=w4, b4=b4)


if __name__ == "__main__":
    num_classes = 10
    B, C, H, W = 2, 60, 8, 8            # channels fixed at 60 by the module

    key = jax.random.PRNGKey(0)
    k_x, k_p = jax.random.split(key)
    x = jax.random.normal(k_x, (B, C, H, W), jnp.float32)
    params = init_params(k_p, num_classes)

    fwd = jax.jit(functools.partial(tcnn_auxcl_forward, params=params))
    outs = jax.block_until_ready(fwd(x))

    refs = reference_forward(x, params)
    for o, r in zip(outs, refs):
        np.testing.assert_allclose(np.asarray(o), np.asarray(r),
                                   rtol=1e-4, atol=1e-5)

    print("KERNEL_OK")
</pallas_src>

<mosaic_0001>
module attributes {stable_mosaic.version = 11 : i64} {
  func.func @kernel(%arg0: i32, %arg1: i32, %arg2: memref<1x64x60xf32, #tpu.memory_space<vmem>>, %arg3: memref<60x60xf32, #tpu.memory_space<vmem>>, %arg4: memref<1x60xf32, #tpu.memory_space<vmem>>, %arg5: memref<60x512xf32, #tpu.memory_space<vmem>>, %arg6: memref<1x512xf32, #tpu.memory_space<vmem>>, %arg7: memref<512x256xf32, #tpu.memory_space<vmem>>, %arg8: memref<1x256xf32, #tpu.memory_space<vmem>>, %arg9: memref<256x128xf32, #tpu.memory_space<vmem>>, %arg10: memref<1x128xf32, #tpu.memory_space<vmem>>, %arg11: memref<128x128xf32, #tpu.memory_space<vmem>>, %arg12: memref<1x128xf32, #tpu.memory_space<vmem>>, %arg13: memref<1x9x60xf32, #tpu.memory_space<vmem>>, %arg14: memref<1x9x128xf32, #tpu.memory_space<vmem>>) attributes {dimension_semantics = [#tpu.dimension_semantics<parallel>, #tpu.dimension_semantics<arbitrary>], iteration_bounds = array<i64: 2, 1>, scalar_prefetch = 0 : i64, scratch_operands = 0 : i64, tpu.core_type = #tpu.core_type<tc>, window_params = [{transform_indices = @transform_0, window_bounds = array<i64: 1, 64, 60>}, {pipeline_mode = #tpu.pipeline_mode<synchronous>, transform_indices = @transform_1, window_bounds = array<i64: 60, 60>}, {pipeline_mode = #tpu.pipeline_mode<synchronous>, transform_indices = @transform_2, window_bounds = array<i64: 1, 60>}, {pipeline_mode = #tpu.pipeline_mode<synchronous>, transform_indices = @transform_3, window_bounds = array<i64: 60, 512>}, {pipeline_mode = #tpu.pipeline_mode<synchronous>, transform_indices = @transform_4, window_bounds = array<i64: 1, 512>}, {pipeline_mode = #tpu.pipeline_mode<synchronous>, transform_indices = @transform_5, window_bounds = array<i64: 512, 256>}, {pipeline_mode = #tpu.pipeline_mode<synchronous>, transform_indices = @transform_6, window_bounds = array<i64: 1, 256>}, {pipeline_mode = #tpu.pipeline_mode<synchronous>, transform_indices = @transform_7, window_bounds = array<i64: 256, 128>}, {pipeline_mode = #tpu.pipeline_mode<synchronous>, transform_indices = @transform_8, window_bounds = array<i64: 1, 128>}, {pipeline_mode = #tpu.pipeline_mode<synchronous>, transform_indices = @transform_9, window_bounds = array<i64: 128, 128>}, {pipeline_mode = #tpu.pipeline_mode<synchronous>, transform_indices = @transform_10, window_bounds = array<i64: 1, 128>}, {transform_indices = @transform_11, window_bounds = array<i64: 1, 9, 60>}, {transform_indices = @transform_12, window_bounds = array<i64: 1, 9, 128>}]} {
    %c0 = arith.constant 0 : index
    %c0_0 = arith.constant 0 : index
    %c0_1 = arith.constant 0 : index
    %0 = vector.load %arg2[%c0, %c0_0, %c0_1] : memref<1x64x60xf32, #tpu.memory_space<vmem>>, vector<1x64x60xf32>
    %1 = vector.shape_cast %0 : vector<1x64x60xf32> to vector<64x60xf32>
    %c0_2 = arith.constant 0 : index
    %c0_3 = arith.constant 0 : index
    %2 = vector.load %arg3[%c0_2, %c0_3] : memref<60x60xf32, #tpu.memory_space<vmem>>, vector<60x60xf32>
    %c0_4 = arith.constant 0 : index
    %c0_5 = arith.constant 0 : index
    %3 = vector.load %arg4[%c0_4, %c0_5] : memref<1x60xf32, #tpu.memory_space<vmem>>, vector<1x60xf32>
    %cst = arith.constant dense<0.000000e+00> : vector<64x60xf32>
    %4 = tpu.matmul %1, %2, %cst {dimension_numbers = #tpu.dot_dimension_numbers<[1], [0], [0], [1], [0, 0, 1, 1], [], []>} : vector<64x60xf32>, vector<60x60xf32>, vector<64x60xf32> -> vector<64x60xf32>
    %5 = vector.broadcast %3 : vector<1x60xf32> to vector<64x60xf32>
    %6 = arith.addf %4, %5 : vector<64x60xf32>
    %cst_6 = arith.constant 0.000000e+00 : f32
    %7 = vector.broadcast %cst_6 : f32 to vector<64x60xf32>
    %8 = arith.cmpf ogt, %6, %7 : vector<64x60xf32>
    %cst_7 = arith.constant 0.00999999977 : f32
    %9 = vector.broadcast %cst_7 : f32 to vector<64x60xf32>
    %10 = arith.mulf %9, %6 : vector<64x60xf32>
    %11 = arith.select %8, %6, %10 : vector<64x60xi1>, vector<64x60xf32>
    %12 = vector.shape_cast %11 : vector<64x60xf32> to vector<1x64x60xf32>
    %cst_8 = arith.constant dense<0.000000e+00> : vector<1x60xf32>
    %13 = vector.multi_reduction <add>, %12, %cst_8 [1] : vector<1x64x60xf32> to vector<1x60xf32>
    %cst_9 = arith.constant dense<0.000000e+00> : vector<64x60xf32>
    %14 = tpu.matmul %11, %2, %cst_9 {dimension_numbers = #tpu.dot_dimension_numbers<[1], [0], [0], [1], [0, 0, 1, 1], [], []>} : vector<64x60xf32>, vector<60x60xf32>, vector<64x60xf32> -> vector<64x60xf32>
    %15 = vector.broadcast %3 : vector<1x60xf32> to vector<64x60xf32>
    %16 = arith.addf %14, %15 : vector<64x60xf32>
    %cst_10 = arith.constant 0.000000e+00 : f32
    %17 = vector.broadcast %cst_10 : f32 to vector<64x60xf32>
    %18 = arith.cmpf ogt, %16, %17 : vector<64x60xf32>
    %cst_11 = arith.constant 0.00999999977 : f32
    %19 = vector.broadcast %cst_11 : f32 to vector<64x60xf32>
    %20 = arith.mulf %19, %16 : vector<64x60xf32>
    %21 = arith.select %18, %16, %20 : vector<64x60xi1>, vector<64x60xf32>
    %22 = vector.shape_cast %21 : vector<64x60xf32> to vector<1x64x60xf32>
    %cst_12 = arith.constant dense<0.000000e+00> : vector<1x60xf32>
    %23 = vector.multi_reduction <add>, %22, %cst_12 [1] : vector<1x64x60xf32> to vector<1x60xf32>
    %cst_13 = arith.constant dense<0.000000e+00> : vector<64x60xf32>
    %24 = tpu.matmul %21, %2, %cst_13 {dimension_numbers = #tpu.dot_dimension_numbers<[1], [0], [0], [1], [0, 0, 1, 1], [], []>} : vector<64x60xf32>, vector<60x60xf32>, vector<64x60xf32> -> vector<64x60xf32>
    %25 = vector.broadcast %3 : vector<1x60xf32> to vector<64x60xf32>
    %26 = arith.addf %24, %25 : vector<64x60xf32>
    %cst_14 = arith.constant 0.000000e+00 : f32
    %27 = vector.broadcast %cst_14 : f32 to vector<64x60xf32>
    %28 = arith.cmpf ogt, %26, %27 : vector<64x60xf32>
    %cst_15 = arith.constant 0.00999999977 : f32
    %29 = vector.broadcast %cst_15 : f32 to vector<64x60xf32>
    %30 = arith.mulf %29, %26 : vector<64x60xf32>
    %31 = arith.select %28, %26, %30 : vector<64x60xi1>, vector<64x60xf32>
    %32 = vector.shape_cast %31 : vector<64x60xf32> to vector<1x64x60xf32>
    %cst_16 = arith.constant dense<0.000000e+00> : vector<1x60xf32>
    %33 = vector.multi_reduction <add>, %32, %cst_16 [1] : vector<1x64x60xf32> to vector<1x60xf32>
    %cst_17 = arith.constant dense<0.000000e+00> : vector<64x60xf32>
    %34 = tpu.matmul %31, %2, %cst_17 {dimension_numbers = #tpu.dot_dimension_numbers<[1], [0], [0], [1], [0, 0, 1, 1], [], []>} : vector<64x60xf32>, vector<60x60xf32>, vector<64x60xf32> -> vector<64x60xf32>
    %35 = vector.broadcast %3 : vector<1x60xf32> to vector<64x60xf32>
    %36 = arith.addf %34, %35 : vector<64x60xf32>
    %cst_18 = arith.constant 0.000000e+00 : f32
    %37 = vector.broadcast %cst_18 : f32 to vector<64x60xf32>
    %38 = arith.cmpf ogt, %36, %37 : vector<64x60xf32>
    %cst_19 = arith.constant 0.00999999977 : f32
    %39 = vector.broadcast %cst_19 : f32 to vector<64x60xf32>
    %40 = arith.mulf %39, %36 : vector<64x60xf32>
    %41 = arith.select %38, %36, %40 : vector<64x60xi1>, vector<64x60xf32>
    %42 = vector.shape_cast %41 : vector<64x60xf32> to vector<1x64x60xf32>
    %cst_20 = arith.constant dense<0.000000e+00> : vector<1x60xf32>
    %43 = vector.multi_reduction <add>, %42, %cst_20 [1] : vector<1x64x60xf32> to vector<1x60xf32>
    %cst_21 = arith.constant dense<0.000000e+00> : vector<64x60xf32>
    %44 = tpu.matmul %41, %2, %cst_21 {dimension_numbers = #tpu.dot_dimension_numbers<[1], [0], [0], [1], [0, 0, 1, 1], [], []>} : vector<64x60xf32>, vector<60x60xf32>, vector<64x60xf32> -> vector<64x60xf32>
    %45 = vector.broadcast %3 : vector<1x60xf32> to vector<64x60xf32>
    %46 = arith.addf %44, %45 : vector<64x60xf32>
    %cst_22 = arith.constant 0.000000e+00 : f32
    %47 = vector.broadcast %cst_22 : f32 to vector<64x60xf32>
    %48 = arith.cmpf ogt, %46, %47 : vector<64x60xf32>
    %cst_23 = arith.constant 0.00999999977 : f32
    %49 = vector.broadcast %cst_23 : f32 to vector<64x60xf32>
    %50 = arith.mulf %49, %46 : vector<64x60xf32>
    %51 = arith.select %48, %46, %50 : vector<64x60xi1>, vector<64x60xf32>
    %52 = vector.shape_cast %51 : vector<64x60xf32> to vector<1x64x60xf32>
    %cst_24 = arith.constant dense<0.000000e+00> : vector<1x60xf32>
    %53 = vector.multi_reduction <add>, %52, %cst_24 [1] : vector<1x64x60xf32> to vector<1x60xf32>
    %cst_25 = arith.constant dense<0.000000e+00> : vector<64x60xf32>
    %54 = tpu.matmul %51, %2, %cst_25 {dimension_numbers = #tpu.dot_dimension_numbers<[1], [0], [0], [1], [0, 0, 1, 1], [], []>} : vector<64x60xf32>, vector<60x60xf32>, vector<64x60xf32> -> vector<64x60xf32>
    %55 = vector.broadcast %3 : vector<1x60xf32> to vector<64x60xf32>
    %56 = arith.addf %54, %55 : vector<64x60xf32>
    %cst_26 = arith.constant 0.000000e+00 : f32
    %57 = vector.broadcast %cst_26 : f32 to vector<64x60xf32>
    %58 = arith.cmpf ogt, %56, %57 : vector<64x60xf32>
    %cst_27 = arith.constant 0.00999999977 : f32
    %59 = vector.broadcast %cst_27 : f32 to vector<64x60xf32>
    %60 = arith.mulf %59, %56 : vector<64x60xf32>
    %61 = arith.select %58, %56, %60 : vector<64x60xi1>, vector<64x60xf32>
    %62 = vector.shape_cast %61 : vector<64x60xf32> to vector<1x64x60xf32>
    %cst_28 = arith.constant dense<0.000000e+00> : vector<1x60xf32>
    %63 = vector.multi_reduction <add>, %62, %cst_28 [1] : vector<1x64x60xf32> to vector<1x60xf32>
    %cst_29 = arith.constant dense<0.000000e+00> : vector<64x60xf32>
    %64 = tpu.matmul %61, %2, %cst_29 {dimension_numbers = #tpu.dot_dimension_numbers<[1], [0], [0], [1], [0, 0, 1, 1], [], []>} : vector<64x60xf32>, vector<60x60xf32>, vector<64x60xf32> -> vector<64x60xf32>
    %65 = vector.broadcast %3 : vector<1x60xf32> to vector<64x60xf32>
    %66 = arith.addf %64, %65 : vector<64x60xf32>
    %cst_30 = arith.constant 0.000000e+00 : f32
    %67 = vector.broadcast %cst_30 : f32 to vector<64x60xf32>
    %68 = arith.cmpf ogt, %66, %67 : vector<64x60xf32>
    %cst_31 = arith.constant 0.00999999977 : f32
    %69 = vector.broadcast %cst_31 : f32 to vector<64x60xf32>
    %70 = arith.mulf %69, %66 : vector<64x60xf32>
    %71 = arith.select %68, %66, %70 : vector<64x60xi1>, vector<64x60xf32>
    %72 = vector.shape_cast %71 : vector<64x60xf32> to vector<1x64x60xf32>
    %cst_32 = arith.constant dense<0.000000e+00> : vector<1x60xf32>
    %73 = vector.multi_reduction <add>, %72, %cst_32 [1] : vector<1x64x60xf32> to vector<1x60xf32>
    %cst_33 = arith.constant dense<0.000000e+00> : vector<64x60xf32>
    %74 = tpu.matmul %71, %2, %cst_33 {dimension_numbers = #tpu.dot_dimension_numbers<[1], [0], [0], [1], [0, 0, 1, 1], [], []>} : vector<64x60xf32>, vector<60x60xf32>, vector<64x60xf32> -> vector<64x60xf32>
    %75 = vector.broadcast %3 : vector<1x60xf32> to vector<64x60xf32>
    %76 = arith.addf %74, %75 : vector<64x60xf32>
    %cst_34 = arith.constant 0.000000e+00 : f32
    %77 = vector.broadcast %cst_34 : f32 to vector<64x60xf32>
    %78 = arith.cmpf ogt, %76, %77 : vector<64x60xf32>
    %cst_35 = arith.constant 0.00999999977 : f32
    %79 = vector.broadcast %cst_35 : f32 to vector<64x60xf32>
    %80 = arith.mulf %79, %76 : vector<64x60xf32>
    %81 = arith.select %78, %76, %80 : vector<64x60xi1>, vector<64x60xf32>
    %82 = vector.shape_cast %81 : vector<64x60xf32> to vector<1x64x60xf32>
    %cst_36 = arith.constant dense<0.000000e+00> : vector<1x60xf32>
    %83 = vector.multi_reduction <add>, %82, %cst_36 [1] : vector<1x64x60xf32> to vector<1x60xf32>
    %cst_37 = arith.constant dense<0.000000e+00> : vector<64x60xf32>
    %84 = tpu.matmul %81, %2, %cst_37 {dimension_numbers = #tpu.dot_dimension_numbers<[1], [0], [0], [1], [0, 0, 1, 1], [], []>} : vector<64x60xf32>, vector<60x60xf32>, vector<64x60xf32> -> vector<64x60xf32>
    %85 = vector.broadcast %3 : vector<1x60xf32> to vector<64x60xf32>
    %86 = arith.addf %84, %85 : vector<64x60xf32>
    %cst_38 = arith.constant 0.000000e+00 : f32
    %87 = vector.broadcast %cst_38 : f32 to vector<64x60xf32>
    %88 = arith.cmpf ogt, %86, %87 : vector<64x60xf32>
    %cst_39 = arith.constant 0.00999999977 : f32
    %89 = vector.broadcast %cst_39 : f32 to vector<64x60xf32>
    %90 = arith.mulf %89, %86 : vector<64x60xf32>
    %91 = arith.select %88, %86, %90 : vector<64x60xi1>, vector<64x60xf32>
    %92 = vector.shape_cast %91 : vector<64x60xf32> to vector<1x64x60xf32>
    %cst_40 = arith.constant dense<0.000000e+00> : vector<1x60xf32>
    %93 = vector.multi_reduction <add>, %92, %cst_40 [1] : vector<1x64x60xf32> to vector<1x60xf32>
    %94 = vector.shape_cast %13 : vector<1x60xf32> to vector<1x1x60xf32>
    %95 = vector.shape_cast %23 : vector<1x60xf32> to vector<1x1x60xf32>
    %96 = vector.shape_cast %33 : vector<1x60xf32> to vector<1x1x60xf32>
    %97 = vector.shape_cast %43 : vector<1x60xf32> to vector<1x1x60xf32>
    %98 = vector.shape_cast %53 : vector<1x60xf32> to vector<1x1x60xf32>
    %99 = vector.shape_cast %63 : vector<1x60xf32> to vector<1x1x60xf32>
    %100 = vector.shape_cast %73 : vector<1x60xf32> to vector<1x1x60xf32>
    %101 = vector.shape_cast %83 : vector<1x60xf32> to vector<1x1x60xf32>
    %102 = vector.shape_cast %93 : vector<1x60xf32> to vector<1x1x60xf32>
    %103 = tpu.concatenate %94, %95, %96, %97, %98, %99, %100, %101, %102 in 1 : vector<1x1x60xf32>, vector<1x1x60xf32>, vector<1x1x60xf32>, vector<1x1x60xf32>, vector<1x1x60xf32>, vector<1x1x60xf32>, vector<1x1x60xf32>, vector<1x1x60xf32>, vector<1x1x60xf32> -> vector<1x9x60xf32>
    %c0_i32 = arith.constant 0 : i32
    %104 = arith.cmpi eq, %arg1, %c0_i32 : i32
    %105 = arith.extui %104 : i1 to i32
    %c0_i32_41 = arith.constant 0 : i32
    %106 = arith.cmpi ne, %105, %c0_i32_41 : i32
    scf.if %106 {
      %c0_46 = arith.constant 0 : index
      %c0_47 = arith.constant 0 : index
      %c0_48 = arith.constant 0 : index
      %113 = vector.load %arg13[%c0_46, %c0_47, %c0_48] : memref<1x9x60xf32, #tpu.memory_space<vmem>>, vector<1x9x60xf32>
      tpu.vector_store %arg13[%c0_46, %c0_47, %c0_48], %103 {strides = array<i32>} : memref<1x9x60xf32, #tpu.memory_space<vmem>>, vector<1x9x60xf32>,
    } else {
    }
    %c0_i32_42 = arith.constant 0 : i32
    %107 = arith.cmpi sgt, %arg1, %c0_i32_42 : i32
    %108 = arith.extui %107 : i1 to i32
    %c0_i32_43 = arith.constant 0 : i32
    %109 = arith.cmpi ne, %108, %c0_i32_43 : i32
    scf.if %109 {
      %c0_46 = arith.constant 0 : index
      %c0_47 = arith.constant 0 : index
      %c0_48 = arith.constant 0 : index
      %113 = vector.load %arg13[%c0_46, %c0_47, %c0_48] : memref<1x9x60xf32, #tpu.memory_space<vmem>>, vector<1x9x60xf32>
      %114 = arith.addf %113, %103 : vector<1x9x60xf32>
      %c0_49 = arith.constant 0 : index
      %c0_50 = arith.constant 0 : index
      %c0_51 = arith.constant 0 : index
      %115 = vector.load %arg13[%c0_49, %c0_50, %c0_51] : memref<1x9x60xf32, #tpu.memory_space<vmem>>, vector<1x9x60xf32>
      tpu.vector_store %arg13[%c0_49, %c0_50, %c0_51], %114 {strides = array<i32>} : memref<1x9x60xf32, #tpu.memory_space<vmem>>, vector<1x9x60xf32>,
    } else {
    }
    %c0_i32_44 = arith.constant 0 : i32
    %110 = arith.cmpi eq, %arg1, %c0_i32_44 : i32
    %111 = arith.extui %110 : i1 to i32
    %c0_i32_45 = arith.constant 0 : i32
    %112 = arith.cmpi ne, %111, %c0_i32_45 : i32
    scf.if %112 {
      %c0_46 = arith.constant 0 : index
      %c0_47 = arith.constant 0 : index
      %c0_48 = arith.constant 0 : index
      %113 = vector.load %arg13[%c0_46, %c0_47, %c0_48] : memref<1x9x60xf32, #tpu.memory_space<vmem>>, vector<1x9x60xf32>
      %cst_49 = arith.constant 1.562500e-02 : f32
      %114 = vector.broadcast %cst_49 : f32 to vector<1x9x60xf32>
      %115 = arith.mulf %113, %114 : vector<1x9x60xf32>
      %c0_50 = arith.constant 0 : index
      %c0_51 = arith.constant 0 : index
      %c0_52 = arith.constant 0 : index
      %116 = vector.load %arg13[%c0_50, %c0_51, %c0_52] : memref<1x9x60xf32, #tpu.memory_space<vmem>>, vector<1x9x60xf32>
      tpu.vector_store %arg13[%c0_50, %c0_51, %c0_52], %115 {strides = array<i32>} : memref<1x9x60xf32, #tpu.memory_space<vmem>>, vector<1x9x60xf32>,
      %117 = vector.shape_cast %115 : vector<1x9x60xf32> to vector<9x60xf32>
      %c0_53 = arith.constant 0 : index
      %c0_54 = arith.constant 0 : index
      %118 = vector.load %arg5[%c0_53, %c0_54] : memref<60x512xf32, #tpu.memory_space<vmem>>, vector<60x512xf32>
      %cst_55 = arith.constant dense<0.000000e+00> : vector<9x512xf32>
      %119 = tpu.matmul %117, %118, %cst_55 {dimension_numbers = #tpu.dot_dimension_numbers<[1], [0], [0], [1], [0, 0, 1, 1], [], []>} : vector<9x60xf32>, vector<60x512xf32>, vector<9x512xf32> -> vector<9x512xf32>
      %c0_56 = arith.constant 0 : index
      %c0_57 = arith.constant 0 : index
      %120 = vector.load %arg6[%c0_56, %c0_57] : memref<1x512xf32, #tpu.memory_space<vmem>>, vector<1x512xf32>
      %121 = vector.broadcast %120 : vector<1x512xf32> to vector<9x512xf32>
      %122 = arith.addf %119, %121 : vector<9x512xf32>
      %cst_58 = arith.constant 0.000000e+00 : f32
      %123 = vector.broadcast %cst_58 : f32 to vector<9x512xf32>
      %124 = arith.cmpf ogt, %122, %123 : vector<9x512xf32>
      %cst_59 = arith.constant 0.00999999977 : f32
      %125 = vector.broadcast %cst_59 : f32 to vector<9x512xf32>
      %126 = arith.mulf %125, %122 : vector<9x512xf32>
      %127 = arith.select %124, %122, %126 : vector<9x512xi1>, vector<9x512xf32>
      %c0_60 = arith.constant 0 : index
      %c0_61 = arith.constant 0 : index
      %128 = vector.load %arg7[%c0_60, %c0_61] : memref<512x256xf32, #tpu.memory_space<vmem>>, vector<512x256xf32>
      %cst_62 = arith.constant dense<0.000000e+00> : vector<9x256xf32>
      %129 = tpu.matmul %127, %128, %cst_62 {dimension_numbers = #tpu.dot_dimension_numbers<[1], [0], [0], [1], [0, 0, 1, 1], [], []>} : vector<9x512xf32>, vector<512x256xf32>, vector<9x256xf32> -> vector<9x256xf32>
      %c0_63 = arith.constant 0 : index
      %c0_64 = arith.constant 0 : index
      %130 = vector.load %arg8[%c0_63, %c0_64] : memref<1x256xf32, #tpu.memory_space<vmem>>, vector<1x256xf32>
      %131 = vector.broadcast %130 : vector<1x256xf32> to vector<9x256xf32>
      %132 = arith.addf %129, %131 : vector<9x256xf32>
      %cst_65 = arith.constant 0.000000e+00 : f32
      %133 = vector.broadcast %cst_65 : f32 to vector<9x256xf32>
      %134 = arith.cmpf ogt, %132, %133 : vector<9x256xf32>
      %cst_66 = arith.constant 0.00999999977 : f32
      %135 = vector.broadcast %cst_66 : f32 to vector<9x256xf32>
      %136 = arith.mulf %135, %132 : vector<9x256xf32>
      %137 = arith.select %134, %132, %136 : vector<9x256xi1>, vector<9x256xf32>
      %c0_67 = arith.constant 0 : index
      %c0_68 = arith.constant 0 : index
      %138 = vector.load %arg9[%c0_67, %c0_68] : memref<256x128xf32, #tpu.memory_space<vmem>>, vector<256x128xf32>
      %cst_69 = arith.constant dense<0.000000e+00> : vector<9x128xf32>
      %139 = tpu.matmul %137, %138, %cst_69 {dimension_numbers = #tpu.dot_dimension_numbers<[1], [0], [0], [1], [0, 0, 1, 1], [], []>} : vector<9x256xf32>, vector<256x128xf32>, vector<9x128xf32> -> vector<9x128xf32>
      %c0_70 = arith.constant 0 : index
      %c0_71 = arith.constant 0 : index
      %140 = vector.load %arg10[%c0_70, %c0_71] : memref<1x128xf32, #tpu.memory_space<vmem>>, vector<1x128xf32>
      %141 = vector.broadcast %140 : vector<1x128xf32> to vector<9x128xf32>
      %142 = arith.addf %139, %141 : vector<9x128xf32>
      %cst_72 = arith.constant 0.000000e+00 : f32
      %143 = vector.broadcast %cst_72 : f32 to vector<9x128xf32>
      %144 = arith.cmpf ogt, %142, %143 : vector<9x128xf32>
      %cst_73 = arith.constant 0.00999999977 : f32
      %145 = vector.broadcast %cst_73 : f32 to vector<9x128xf32>
      %146 = arith.mulf %145, %142 : vector<9x128xf32>
      %147 = arith.select %144, %142, %146 : vector<9x128xi1>, vector<9x128xf32>
      %c0_74 = arith.constant 0 : index
      %c0_75 = arith.constant 0 : index
      %148 = vector.load %arg11[%c0_74, %c0_75] : memref<128x128xf32, #tpu.memory_space<vmem>>, vector<128x128xf32>
      %cst_76 = arith.constant dense<0.000000e+00> : vector<9x128xf32>
      %149 = tpu.matmul %147, %148, %cst_76 {dimension_numbers = #tpu.dot_dimension_numbers<[1], [0], [0], [1], [0, 0, 1, 1], [], []>} : vector<9x128xf32>, vector<128x128xf32>, vector<9x128xf32> -> vector<9x128xf32>
      %c0_77 = arith.constant 0 : index
      %c0_78 = arith.constant 0 : index
      %150 = vector.load %arg12[%c0_77, %c0_78] : memref<1x128xf32, #tpu.memory_space<vmem>>, vector<1x128xf32>
      %151 = vector.broadcast %150 : vector<1x128xf32> to vector<9x128xf32>
      %152 = arith.addf %149, %151 : vector<9x128xf32>
      %153 = tpu.iota {dimensions = array<i32: 1>} : vector<9x128xi32>
      %c10_i32 = arith.constant 10 : i32
      %154 = vector.broadcast %c10_i32 : i32 to vector<9x128xi32>
      %155 = arith.cmpi slt, %153, %154 : vector<9x128xi32>
      %cst_79 = arith.constant -1.000000e+30 : f32
      %156 = vector.broadcast %cst_79 : f32 to vector<9x128xf32>
      %157 = arith.select %155, %152, %156 : vector<9x128xi1>, vector<9x128xf32>
      %cst_80 = arith.constant dense<0xFF800000> : vector<9xf32>
      %158 = vector.multi_reduction <maximumf>, %157, %cst_80 [1] : vector<9x128xf32> to vector<9xf32>
      %159 = vector.shape_cast %158 : vector<9xf32> to vector<9x1xf32>
      %160 = vector.broadcast %159 : vector<9x1xf32> to vector<9x128xf32>
      %161 = arith.subf %157, %160 : vector<9x128xf32>
      %162 = math.exp %161 : vector<9x128xf32>
      %cst_81 = arith.constant dense<0.000000e+00> : vector<9xf32>
      %163 = vector.multi_reduction <add>, %162, %cst_81 [1] : vector<9x128xf32> to vector<9xf32>
      %164 = vector.shape_cast %163 : vector<9xf32> to vector<9x1xf32>
      %165 = vector.broadcast %164 : vector<9x1xf32> to vector<9x128xf32>
      %166 = arith.divf %162, %165 : vector<9x128xf32>
      %c0_82 = arith.constant 0 : index
      %c0_83 = arith.constant 0 : index
      %c0_84 = arith.constant 0 : index
      %167 = vector.load %arg14[%c0_82, %c0_83, %c0_84] : memref<1x9x128xf32, #tpu.memory_space<vmem>>, vector<1x9x128xf32>
      %168 = vector.shape_cast %167 : vector<1x9x128xf32> to vector<9x128xf32>
      %169 = vector.shape_cast %166 : vector<9x128xf32> to vector<1x9x128xf32>
      tpu.vector_store %arg14[%c0_82, %c0_83, %c0_84], %169 {strides = array<i32>} : memref<1x9x128xf32, #tpu.memory_space<vmem>>, vector<1x9x128xf32>,
    } else {
    }
    return
  }
  func.func @transform_0(%arg0: i32, %arg1: i32) -> (i32, i32, i32) {
    %c0_i32 = arith.constant 0 : i32
    %c0_i32_0 = arith.constant 0 : i32
    return %arg0, %arg1, %c0_i32 : i32, i32, i32
  }
  func.func @transform_1(%arg0: i32, %arg1: i32) -> (i32, i32) {
    %c0_i32 = arith.constant 0 : i32
    %c0_i32_0 = arith.constant 0 : i32
    %c0_i32_1 = arith.constant 0 : i32
    return %c0_i32, %c0_i32_0 : i32, i32
  }
  func.func @transform_2(%arg0: i32, %arg1: i32) -> (i32, i32) {
    %c0_i32 = arith.constant 0 : i32
    %c0_i32_0 = arith.constant 0 : i32
    %c0_i32_1 = arith.constant 0 : i32
    return %c0_i32, %c0_i32_0 : i32, i32
  }
  func.func @transform_3(%arg0: i32, %arg1: i32) -> (i32, i32) {
    %c0_i32 = arith.constant 0 : i32
    %c0_i32_0 = arith.constant 0 : i32
    %c0_i32_1 = arith.constant 0 : i32
    return %c0_i32, %c0_i32_0 : i32, i32
  }
  func.func @transform_4(%arg0: i32, %arg1: i32) -> (i32, i32) {
    %c0_i32 = arith.constant 0 : i32
    %c0_i32_0 = arith.constant 0 : i32
    %c0_i32_1 = arith.constant 0 : i32
    return %c0_i32, %c0_i32_0 : i32, i32
  }
  func.func @transform_5(%arg0: i32, %arg1: i32) -> (i32, i32) {
    %c0_i32 = arith.constant 0 : i32
    %c0_i32_0 = arith.constant 0 : i32
    %c0_i32_1 = arith.constant 0 : i32
    return %c0_i32, %c0_i32_0 : i32, i32
  }
  func.func @transform_6(%arg0: i32, %arg1: i32) -> (i32, i32) {
    %c0_i32 = arith.constant 0 : i32
    %c0_i32_0 = arith.constant 0 : i32
    %c0_i32_1 = arith.constant 0 : i32
    return %c0_i32, %c0_i32_0 : i32, i32
  }
  func.func @transform_7(%arg0: i32, %arg1: i32) -> (i32, i32) {
    %c0_i32 = arith.constant 0 : i32
    %c0_i32_0 = arith.constant 0 : i32
    %c0_i32_1 = arith.constant 0 : i32
    return %c0_i32, %c0_i32_0 : i32, i32
  }
  func.func @transform_8(%arg0: i32, %arg1: i32) -> (i32, i32) {
    %c0_i32 = arith.constant 0 : i32
    %c0_i32_0 = arith.constant 0 : i32
    %c0_i32_1 = arith.constant 0 : i32
    return %c0_i32, %c0_i32_0 : i32, i32
  }
  func.func @transform_9(%arg0: i32, %arg1: i32) -> (i32, i32) {
    %c0_i32 = arith.constant 0 : i32
    %c0_i32_0 = arith.constant 0 : i32
    %c0_i32_1 = arith.constant 0 : i32
    return %c0_i32, %c0_i32_0 : i32, i32
  }
  func.func @transform_10(%arg0: i32, %arg1: i32) -> (i32, i32) {
    %c0_i32 = arith.constant 0 : i32
    %c0_i32_0 = arith.constant 0 : i32
    %c0_i32_1 = arith.constant 0 : i32
    return %c0_i32, %c0_i32_0 : i32, i32
  }
  func.func @transform_11(%arg0: i32, %arg1: i32) -> (i32, i32, i32) {
    %c0_i32 = arith.constant 0 : i32
    %c0_i32_0 = arith.constant 0 : i32
    %c0_i32_1 = arith.constant 0 : i32
    return %arg0, %c0_i32, %c0_i32_0 : i32, i32, i32
  }
  func.func @transform_12(%arg0: i32, %arg1: i32) -> (i32, i32, i32) {
    %c0_i32 = arith.constant 0 : i32
    %c0_i32_0 = arith.constant 0 : i32
    %c0_i32_1 = arith.constant 0 : i32
    return %arg0, %c0_i32, %c0_i32_0 : i32, i32, i32
  }
}

</mosaic_0001>

<llo_original>
// kernel: tcnn_auxcl_forward.1
$region0: #{tcnn_auxcl_forward.1}
  #allocation0 [shape = 'u32[]', space=smem, size = 0x4, offset = 0x4, fixed_abs, tag = 'smem constant byte address 0x4 - core index']
  #allocation1 [shape = 'u32[144,128]{1,0:T(1,128)}', space=vmem, size = 0x12000, scoped, tag = 'internal scratch']
  %s0 = inlined_call_operand.hbm [shape: f32[2,64,60], index: 0, kind: input, shape index: {}]
  %s1 = inlined_call_operand.hbm [shape: f32[60,60], index: 1, kind: input, shape index: {}]
  %s2 = inlined_call_operand.vmem [shape: f32[1,60], index: 2, kind: input, shape index: {}]
  %s3 = inlined_call_operand.hbm [shape: f32[60,512], index: 3, kind: input, shape index: {}]
  %s4 = inlined_call_operand.vmem [shape: f32[1,512], index: 4, kind: input, shape index: {}]
  %s5 = inlined_call_operand.hbm [shape: f32[512,256], index: 5, kind: input, shape index: {}]
  %s6 = inlined_call_operand.vmem [shape: f32[1,256], index: 6, kind: input, shape index: {}]
  %s7 = inlined_call_operand.hbm [shape: f32[256,128], index: 7, kind: input, shape index: {}]
  %s8 = inlined_call_operand.vmem [shape: f32[1,128], index: 8, kind: input, shape index: {}]
  %s9 = inlined_call_operand.hbm [shape: f32[128,128], index: 9, kind: input, shape index: {}]
  %s10 = inlined_call_operand.vmem [shape: f32[1,128], index: 10, kind: input, shape index: {}]
  %s11 = inlined_call_operand.vmem [shape: f32[2,9,60], index: 11, kind: output, shape index: {0}]
  %s12 = inlined_call_operand.vmem [shape: f32[2,9,128], index: 12, kind: output, shape index: {1}]
  %13 = xla_tuple %s11, %s12
  %s14 = sld [smem:[#allocation0]]
  $region121: #{tcnn_auxcl_forward.1} parent=0
    _
  %s16 = ssub.s32 1, %s14
  %s17 = scalar_select 0, %s16, %s14
  $region1: #{tcnn_auxcl_forward.1} parent=0
    #allocation2 [shape = 'u8[65536]{0}', space=vmem, size = 0x10000, scoped, tag = 'input window, operand 0']
    #allocation3 [shape = 's32[2]{0}', space=sflag, size = 0x8, scoped, tag = 'scoped memory for tcnn_auxcl_forward.1']
    #allocation4 [shape = 'u8[32768]{0}', space=vmem, size = 0x8000, scoped, tag = 'input window, operand 1, single buffered']
    #allocation5 [shape = 's32[1]{0}', space=sflag, size = 0x4, scoped, tag = 'scoped memory for tcnn_auxcl_forward.1']
    #allocation6 [shape = 'u8[131072]{0}', space=vmem, size = 0x20000, scoped, tag = 'input window, operand 3, single buffered']
    #allocation7 [shape = 'u8[524288]{0}', space=vmem, size = 0x80000, scoped, tag = 'input window, operand 5, single buffered']
    #allocation8 [shape = 's32[1]{0}', space=sflag, size = 0x4, scoped, tag = 'scoped memory for tcnn_auxcl_forward.1']
    #allocation9 [shape = 'u8[131072]{0}', space=vmem, size = 0x20000, scoped, tag = 'input window, operand 7, single buffered']
    #allocation10 [shape = 'u8[65536]{0}', space=vmem, size = 0x10000, scoped, tag = 'input window, operand 9, single buffered']
    #allocation11 [shape = 's32[1]{0}', space=sflag, size = 0x4, scoped, tag = 'scoped memory for tcnn_auxcl_forward.1']
    %18 = vsyncpa [#allocation3], 0
    %s19 = scalar_lea.sflag [#allocation3], 1
    %20 = vsyncpa %s19, 0
    %21 = vsyncpa [#allocation5], 0
    %22 = vsyncpa [#allocation8], 0
    %23 = vsyncpa [#allocation11], 0
    loop: start=0, step=1, limit=4
    $region2: #{tcnn_auxcl_forward.1} parent=1 // loop_pre_header
      _
    $region3: #{tcnn_auxcl_forward.1} parent=1 // loop_header
      %s25 = sphi 0, %s29
      %p26 = scmp.ge.s32.totalorder %s25, 4
      %s32 = sphi 0, %s44
      %s33 = sphi 0, %s40
      %s34 = sphi 0, %s32
      %s35 = sphi 0, %s33
      %s36 = sphi 0, %s34
      %s37 = sphi 0, %s35
      %s49 = sphi 0, %s51
      %s52 = sphi 0, %s49
      %s53 = sphi 0, %s52
      %s69 = sphi 0, %s53
      %s73 = sphi 0, %s73
      %s75 = sphi 0, %s73
      %s76 = sphi 0, %s75
      %s90 = sphi 0, %s76
      %s94 = sphi 0, %s94
      %s96 = sphi 0, %s94
      %s97 = sphi 0, %s96
      %s111 = sphi 0, %s97
      %s115 = sphi 0, %s115
      %s117 = sphi 0, %s115
      %s118 = sphi 0, %s117
      %s132 = sphi 0, %s118
      %s136 = sphi 0, %s136
      %s138 = sphi 0, %s136
      %s139 = sphi 0, %s138
      %s153 = sphi 0, %s139
      %s157 = sphi 0, %s157
      %s159 = sphi 0, %s157
      %s160 = sphi 0, %s159
      %s174 = sphi 0, %s160
      %s178 = sphi 0, %s178
      %s180 = sphi 0, %s178
      %s181 = sphi 0, %s180
      %s195 = sphi 0, %s181
      %s199 = sphi 0, %s199
      %s201 = sphi 0, %s199
      %s202 = sphi 0, %s201
      %s216 = sphi 0, %s202
      %s220 = sphi 0, %s220
      %s222 = sphi 0, %s220
      %s223 = sphi 0, %s222
      %s237 = sphi 0, %s223
      %s241 = sphi 0, %s241
      %s243 = sphi 0, %s241
      %s244 = sphi 0, %s243
      %s258 = sphi 0, %s244
      %s262 = sphi 0, %s262
      %s264 = sphi 0, %s262
      %s265 = sphi 0, %s264
      %s279 = sphi 0, %s265
      %s285 = sphi 0, %s287
      %s288 = sphi 0, %s285
      %s289 = sphi 0, %s288
      %s305 = sphi 0, %s289
      %s311 = sphi 0, %s313
      %s314 = sphi 0, %s311
      %s315 = sphi 0, %s314
      %s331 = sphi 0, %s315
    $region4: #{tcnn_auxcl_forward.1} parent=1 // loop_header_branch
      %28 = sbr.rel (%p26) target = $region8
    $region5: #{tcnn_auxcl_forward.1} parent=1 // loop_body
      %s30 = ssub.s32 %s25, 1
      %s31 = ssub.s32 %s25, 2
      %s38 = sadd.s32 1, %s33
      %p39 = scmp.ge.s32.totalorder %s38, 1
      %s40 = scalar_select %p39, 0, %s38
      %s41 = sadd.s32 1, %s32
      %s42 = scalar_select %p39, %s41, %s32
      %p43 = scmp.ge.s32.totalorder %s42, 2
      %s44 = scalar_select %p43, 0, %s42
      %s45 = ssub.s32 %s32, %s44
      %s46 = ssub.s32 %s33, %s40
      %s47 = sor.u32 %s45, %s46
      %p48 = scmp.eq.s32.totalorder %s47, 0
      %s50 = sadd.s32 %s49, 1
      %s51 = scalar_select %p48, %s49, %s50
      %p54 = pneg %p48
      %p55 = scmp.eq.s32.totalorder %s25, 1
      %p56 = por %p54, %p55
      %p57 = scmp.ne.s32.totalorder %s49, %s52
      %p58 = scmp.eq.s32.totalorder %s25, 0
      %p59 = por %p57, %p58
      %p60 = scmp.ne.s32.totalorder %s49, %s52
      %p61 = scmp.eq.s32.totalorder %s30, 1
      %p62 = por %p60, %p61
      %p63 = scmp.ne.s32.totalorder %s52, %s53
      %p64 = scmp.eq.s32.totalorder %s30, 0
      %p65 = por %p63, %p64
      %p66 = scmp.ne.s32.totalorder %s52, %s53
      %p67 = scmp.eq.s32.totalorder %s31, 1
      %p68 = por %p66, %p67
      %p70 = scmp.ne.s32.totalorder %s53, %s69
      %p71 = scmp.eq.s32.totalorder %s31, 0
      %p72 = por %p70, %p71
      %s74 = sadd.s32 %s73, 1
      %p77 = scmp.eq.s32.totalorder %s25, 1
      %p78 = scmp.ne.s32.totalorder %s73, %s75
      %p79 = scmp.eq.s32.totalorder %s25, 0
      %p80 = por %p78, %p79
      %p81 = scmp.ne.s32.totalorder %s73, %s75
      %p82 = scmp.eq.s32.totalorder %s30, 1
      %p83 = por %p81, %p82
      %p84 = scmp.ne.s32.totalorder %s75, %s76
      %p85 = scmp.eq.s32.totalorder %s30, 0
      %p86 = por %p84, %p85
      %p87 = scmp.ne.s32.totalorder %s75, %s76
      %p88 = scmp.eq.s32.totalorder %s31, 1
      %p89 = por %p87, %p88
      %p91 = scmp.ne.s32.totalorder %s76, %s90
      %p92 = scmp.eq.s32.totalorder %s31, 0
      %p93 = por %p91, %p92
      %s95 = sadd.s32 %s94, 1
      %p98 = scmp.eq.s32.totalorder %s25, 1
      %p99 = scmp.ne.s32.totalorder %s94, %s96
      %p100 = scmp.eq.s32.totalorder %s25, 0
      %p101 = por %p99, %p100
      %p102 = scmp.ne.s32.totalorder %s94, %s96
      %p103 = scmp.eq.s32.totalorder %s30, 1
      %p104 = por %p102, %p103
      %p105 = scmp.ne.s32.totalorder %s96, %s97
      %p106 = scmp.eq.s32.totalorder %s30, 0
      %p107 = por %p105, %p106
      %p108 = scmp.ne.s32.totalorder %s96, %s97
      %p109 = scmp.eq.s32.totalorder %s31, 1
      %p110 = por %p108, %p109
      %p112 = scmp.ne.s32.totalorder %s97, %s111
      %p113 = scmp.eq.s32.totalorder %s31, 0
      %p114 = por %p112, %p113
      %s116 = sadd.s32 %s115, 1
      %p119 = scmp.eq.s32.totalorder %s25, 1
      %p120 = scmp.ne.s32.totalorder %s115, %s117
      %p121 = scmp.eq.s32.totalorder %s25, 0
      %p122 = por %p120, %p121
      %p123 = scmp.ne.s32.totalorder %s115, %s117
      %p124 = scmp.eq.s32.totalorder %s30, 1
      %p125 = por %p123, %p124
      %p126 = scmp.ne.s32.totalorder %s117, %s118
      %p127 = scmp.eq.s32.totalorder %s30, 0
      %p128 = por %p126, %p127
      %p129 = scmp.ne.s32.totalorder %s117, %s118
      %p130 = scmp.eq.s32.totalorder %s31, 1
      %p131 = por %p129, %p130
      %p133 = scmp.ne.s32.totalorder %s118, %s132
      %p134 = scmp.eq.s32.totalorder %s31, 0
      %p135 = por %p133, %p134
      %s137 = sadd.s32 %s136, 1
      %p140 = scmp.eq.s32.totalorder %s25, 1
      %p141 = scmp.ne.s32.totalorder %s136, %s138
      %p142 = scmp.eq.s32.totalorder %s25, 0
      %p143 = por %p141, %p142
      %p144 = scmp.ne.s32.totalorder %s136, %s138
      %p145 = scmp.eq.s32.totalorder %s30, 1
      %p146 = por %p144, %p145
      %p147 = scmp.ne.s32.totalorder %s138, %s139
      %p148 = scmp.eq.s32.totalorder %s30, 0
      %p149 = por %p147, %p148
      %p150 = scmp.ne.s32.totalorder %s138, %s139
      %p151 = scmp.eq.s32.totalorder %s31, 1
      %p152 = por %p150, %p151
      %p154 = scmp.ne.s32.totalorder %s139, %s153
      %p155 = scmp.eq.s32.totalorder %s31, 0
      %p156 = por %p154, %p155
      %s158 = sadd.s32 %s157, 1
      %p161 = scmp.eq.s32.totalorder %s25, 1
      %p162 = scmp.ne.s32.totalorder %s157, %s159
      %p163 = scmp.eq.s32.totalorder %s25, 0
      %p164 = por %p162, %p163
      %p165 = scmp.ne.s32.totalorder %s157, %s159
      %p166 = scmp.eq.s32.totalorder %s30, 1
      %p167 = por %p165, %p166
      %p168 = scmp.ne.s32.totalorder %s159, %s160
      %p169 = scmp.eq.s32.totalorder %s30, 0
      %p170 = por %p168, %p169
      %p171 = scmp.ne.s32.totalorder %s159, %s160
      %p172 = scmp.eq.s32.totalorder %s31, 1
      %p173 = por %p171, %p172
      %p175 = scmp.ne.s32.totalorder %s160, %s174
      %p176 = scmp.eq.s32.totalorder %s31, 0
      %p177 = por %p175, %p176
      %s179 = sadd.s32 %s178, 1
      %p182 = scmp.eq.s32.totalorder %s25, 1
      %p183 = scmp.ne.s32.totalorder %s178, %s180
      %p184 = scmp.eq.s32.totalorder %s25, 0
      %p185 = por %p183, %p184
      %p186 = scmp.ne.s32.totalorder %s178, %s180
      %p187 = scmp.eq.s32.totalorder %s30, 1
      %p188 = por %p186, %p187
      %p189 = scmp.ne.s32.totalorder %s180, %s181
      %p190 = scmp.eq.s32.totalorder %s30, 0
      %p191 = por %p189, %p190
      %p192 = scmp.ne.s32.totalorder %s180, %s181
      %p193 = scmp.eq.s32.totalorder %s31, 1
      %p194 = por %p192, %p193
      %p196 = scmp.ne.s32.totalorder %s181, %s195
      %p197 = scmp.eq.s32.totalorder %s31, 0
      %p198 = por %p196, %p197
      %s200 = sadd.s32 %s199, 1
      %p203 = scmp.eq.s32.totalorder %s25, 1
      %p204 = scmp.ne.s32.totalorder %s199, %s201
      %p205 = scmp.eq.s32.totalorder %s25, 0
      %p206 = por %p204, %p205
      %p207 = scmp.ne.s32.totalorder %s199, %s201
      %p208 = scmp.eq.s32.totalorder %s30, 1
      %p209 = por %p207, %p208
      %p210 = scmp.ne.s32.totalorder %s201, %s202
      %p211 = scmp.eq.s32.totalorder %s30, 0
      %p212 = por %p210, %p211
      %p213 = scmp.ne.s32.totalorder %s201, %s202
      %p214 = scmp.eq.s32.totalorder %s31, 1
      %p215 = por %p213, %p214
      %p217 = scmp.ne.s32.totalorder %s202, %s216
      %p218 = scmp.eq.s32.totalorder %s31, 0
      %p219 = por %p217, %p218
      %s221 = sadd.s32 %s220, 1
      %p224 = scmp.eq.s32.totalorder %s25, 1
      %p225 = scmp.ne.s32.totalorder %s220, %s222
      %p226 = scmp.eq.s32.totalorder %s25, 0
      %p227 = por %p225, %p226
      %p228 = scmp.ne.s32.totalorder %s220, %s222
      %p229 = scmp.eq.s32.totalorder %s30, 1
      %p230 = por %p228, %p229
      %p231 = scmp.ne.s32.totalorder %s222, %s223
      %p232 = scmp.eq.s32.totalorder %s30, 0
      %p233 = por %p231, %p232
      %p234 = scmp.ne.s32.totalorder %s222, %s223
      %p235 = scmp.eq.s32.totalorder %s31, 1
      %p236 = por %p234, %p235
      %p238 = scmp.ne.s32.totalorder %s223, %s237
      %p239 = scmp.eq.s32.totalorder %s31, 0
      %p240 = por %p238, %p239
      %s242 = sadd.s32 %s241, 1
      %p245 = scmp.eq.s32.totalorder %s25, 1
      %p246 = scmp.ne.s32.totalorder %s241, %s243
      %p247 = scmp.eq.s32.totalorder %s25, 0
      %p248 = por %p246, %p247
      %p249 = scmp.ne.s32.totalorder %s241, %s243
      %p250 = scmp.eq.s32.totalorder %s30, 1
      %p251 = por %p249, %p250
      %p252 = scmp.ne.s32.totalorder %s243, %s244
      %p253 = scmp.eq.s32.totalorder %s30, 0
      %p254 = por %p252, %p253
      %p255 = scmp.ne.s32.totalorder %s243, %s244
      %p256 = scmp.eq.s32.totalorder %s31, 1
      %p257 = por %p255, %p256
      %p259 = scmp.ne.s32.totalorder %s244, %s258
      %p260 = scmp.eq.s32.totalorder %s31, 0
      %p261 = por %p259, %p260
      %s263 = sadd.s32 %s262, 1
      %p266 = scmp.eq.s32.totalorder %s25, 1
      %p267 = scmp.ne.s32.totalorder %s262, %s264
      %p268 = scmp.eq.s32.totalorder %s25, 0
      %p269 = por %p267, %p268
      %p270 = scmp.ne.s32.totalorder %s262, %s264
      %p271 = scmp.eq.s32.totalorder %s30, 1
      %p272 = por %p270, %p271
      %p273 = scmp.ne.s32.totalorder %s264, %s265
      %p274 = scmp.eq.s32.totalorder %s30, 0
      %p275 = por %p273, %p274
      %p276 = scmp.ne.s32.totalorder %s264, %s265
      %p277 = scmp.eq.s32.totalorder %s31, 1
      %p278 = por %p276, %p277
      %p280 = scmp.ne.s32.totalorder %s265, %s279
      %p281 = scmp.eq.s32.totalorder %s31, 0
      %p282 = por %p280, %p281
      %s283 = ssub.s32 %s32, %s44
      %p284 = scmp.eq.s32.totalorder %s283, 0
      %s286 = sadd.s32 %s285, 1
      %s287 = scalar_select %p284, %s285, %s286
      %p290 = pneg %p284
      %p291 = scmp.eq.s32.totalorder %s25, 1
      %p292 = por %p290, %p291
      %p293 = scmp.ne.s32.totalorder %s285, %s288
      %p294 = scmp.eq.s32.totalorder %s25, 0
      %p295 = por %p293, %p294
      %p296 = scmp.ne.s32.totalorder %s285, %s288
      %p297 = scmp.eq.s32.totalorder %s30, 1
      %p298 = por %p296, %p297
      %p299 = scmp.ne.s32.totalorder %s288, %s289
      %p300 = scmp.eq.s32.totalorder %s30, 0
      %p301 = por %p299, %p300
      %p302 = scmp.ne.s32.totalorder %s288, %s289
      %p303 = scmp.eq.s32.totalorder %s31, 1
      %p304 = por %p302, %p303
      %p306 = scmp.ne.s32.totalorder %s289, %s305
      %p307 = scmp.eq.s32.totalorder %s31, 0
      %p308 = por %p306, %p307
      %s309 = ssub.s32 %s32, %s44
      %p310 = scmp.eq.s32.totalorder %s309, 0
      %s312 = sadd.s32 %s311, 1
      %s313 = scalar_select %p310, %s311, %s312
      %p316 = pneg %p310
      %p317 = scmp.eq.s32.totalorder %s25, 1
      %p318 = por %p316, %p317
      %p319 = scmp.ne.s32.totalorder %s311, %s314
      %p320 = scmp.eq.s32.totalorder %s25, 0
      %p321 = por %p319, %p320
      %p322 = scmp.ne.s32.totalorder %s311, %s314
      %p323 = scmp.eq.s32.totalorder %s30, 1
      %p324 = por %p322, %p323
      %p325 = scmp.ne.s32.totalorder %s314, %s315
      %p326 = scmp.eq.s32.totalorder %s30, 0
      %p327 = por %p325, %p326
      %p328 = scmp.ne.s32.totalorder %s314, %s315
      %p329 = scmp.eq.s32.totalorder %s31, 1
      %p330 = por %p328, %p329
      %p332 = scmp.ne.s32.totalorder %s315, %s331
      %p333 = scmp.eq.s32.totalorder %s31, 0
      %p334 = por %p332, %p333
      %p335 = scmp.le.s32.totalorder 1, %s25
      %p336 = scmp.lt.s32.totalorder %s25, 3
      %p337 = pnand %p335, %p336
      %p338 = pneg %p337
      // Predicated region
      $region9: #{tcnn_auxcl_forward.1} parent=5 // pred_check
        _
      $region10: #{tcnn_auxcl_forward.1} parent=5 // pred_check_branch
        %340 = sbr.rel (%p337) target = $region12
      $region11: #{tcnn_auxcl_forward.1} parent=5 // pred_region
        %s341 = ssub.s32 %s25, 1
        // Predicated region
        $region13: #{tcnn_auxcl_forward.1} parent=11 // pred_check
          %p342 = pneg %p86
        $region14: #{tcnn_auxcl_forward.1} parent=11 // pred_check_branch
          %344 = sbr.rel (%p342) target = $region16
        $region15: #{tcnn_auxcl_forward.1} parent=11 // pred_region
          %s346 = ssub.s32 1024, 1024
          %347 = vsyncadd [#allocation5], %s346
          %s348 = sshll.u32 [#allocation4], 4
          %s349 = int_to_ptr.vmem [resolvable:$true] %s348
          %354 = dma.hbm_to_vmem [thread:$0]  %s1, 1024, %s349, [#allocation5], 128, 128, 8
        $region16: #{tcnn_auxcl_forward.1} parent=11 // pred_fallthru
          _
        // Predicated region
        $region17: #{tcnn_auxcl_forward.1} parent=11 // pred_check
          %p355 = pneg %p107
        $region18: #{tcnn_auxcl_forward.1} parent=11 // pred_check_branch
          %357 = sbr.rel (%p355) target = $region20
        $region19: #{tcnn_auxcl_forward.1} parent=11 // pred_region
          _
        $region20: #{tcnn_auxcl_forward.1} parent=11 // pred_fallthru
          _
        // Predicated region
        $region21: #{tcnn_auxcl_forward.1} parent=11 // pred_check
          %p358 = pneg %p128
        $region22: #{tcnn_auxcl_forward.1} parent=11 // pred_check_branch
          %360 = sbr.rel (%p358) target = $region24
        $region23: #{tcnn_auxcl_forward.1} parent=11 // pred_region
          %s362 = ssub.s32 4096, 4096
          %363 = vsyncadd [#allocation5], %s362
          %s364 = sshll.u32 [#allocation6], 4
          %s365 = int_to_ptr.vmem [resolvable:$true] %s364
          %370 = dma.hbm_to_vmem [thread:$0]  %s3, 4096, %s365, [#allocation5], 512, 512, 32
        $region24: #{tcnn_auxcl_forward.1} parent=11 // pred_fallthru
          _
        // Predicated region
        $region25: #{tcnn_auxcl_forward.1} parent=11 // pred_check
          %p371 = pneg %p149
        $region26: #{tcnn_auxcl_forward.1} parent=11 // pred_check_branch
          %373 = sbr.rel (%p371) target = $region28
        $region27: #{tcnn_auxcl_forward.1} parent=11 // pred_region
          _
        $region28: #{tcnn_auxcl_forward.1} parent=11 // pred_fallthru
          _
        // Predicated region
        $region29: #{tcnn_auxcl_forward.1} parent=11 // pred_check
          %p374 = pneg %p170
        $region30: #{tcnn_auxcl_forward.1} parent=11 // pred_check_branch
          %376 = sbr.rel (%p374) target = $region32
        $region31: #{tcnn_auxcl_forward.1} parent=11 // pred_region
          %s378 = ssub.s32 16384, 16384
          %379 = vsyncadd [#allocation8], %s378
          %s380 = sshll.u32 [#allocation7], 4
          %s381 = int_to_ptr.vmem [resolvable:$true] %s380
          %386 = dma.hbm_to_vmem [thread:$0]  %s5, 16384, %s381, [#allocation8], 256, 256, 16
        $region32: #{tcnn_auxcl_forward.1} parent=11 // pred_fallthru
          _
        // Predicated region
        $region33: #{tcnn_auxcl_forward.1} parent=11 // pred_check
          %p387 = pneg %p191
        $region34: #{tcnn_auxcl_forward.1} parent=11 // pred_check_branch
          %389 = sbr.rel (%p387) target = $region36
        $region35: #{tcnn_auxcl_forward.1} parent=11 // pred_region
          _
        $region36: #{tcnn_auxcl_forward.1} parent=11 // pred_fallthru
          _
        // Predicated region
        $region37: #{tcnn_auxcl_forward.1} parent=11 // pred_check
          %p390 = pneg %p212
        $region38: #{tcnn_auxcl_forward.1} parent=11 // pred_check_branch
          %392 = sbr.rel (%p390) target = $region40
        $region39: #{tcnn_auxcl_forward.1} parent=11 // pred_region
          %s394 = ssub.s32 4096, 4096
          %395 = vsyncadd [#allocation8], %s394
          %s396 = sshll.u32 [#allocation9], 4
          %s397 = int_to_ptr.vmem [resolvable:$true] %s396
          %402 = dma.hbm_to_vmem [thread:$0]  %s7, 4096, %s397, [#allocation8], 128, 128, 8
        $region40: #{tcnn_auxcl_forward.1} parent=11 // pred_fallthru
          _
        // Predicated region
        $region41: #{tcnn_auxcl_forward.1} parent=11 // pred_check
          %p403 = pneg %p233
        $region42: #{tcnn_auxcl_forward.1} parent=11 // pred_check_branch
          %405 = sbr.rel (%p403) target = $region44
        $region43: #{tcnn_auxcl_forward.1} parent=11 // pred_region
          _
        $region44: #{tcnn_auxcl_forward.1} parent=11 // pred_fallthru
          _
        // Predicated region
        $region45: #{tcnn_auxcl_forward.1} parent=11 // pred_check
          %p406 = pneg %p254
        $region46: #{tcnn_auxcl_forward.1} parent=11 // pred_check_branch
          %408 = sbr.rel (%p406) target = $region48
        $region47: #{tcnn_auxcl_forward.1} parent=11 // pred_region
          %s410 = ssub.s32 2048, 2048
          %411 = vsyncadd [#allocation11], %s410
          %s412 = sshll.u32 [#allocation10], 4
          %s413 = int_to_ptr.vmem [resolvable:$true] %s412
          %418 = dma.hbm_to_vmem [thread:$0]  %s9, 2048, %s413, [#allocation11], 128, 128, 8
        $region48: #{tcnn_auxcl_forward.1} parent=11 // pred_fallthru
          _
        // Predicated region
        $region49: #{tcnn_auxcl_forward.1} parent=11 // pred_check
          %p419 = pneg %p275
        $region50: #{tcnn_auxcl_forward.1} parent=11 // pred_check_branch
          %421 = sbr.rel (%p419) target = $region52
        $region51: #{tcnn_auxcl_forward.1} parent=11 // pred_region
          _
        $region52: #{tcnn_auxcl_forward.1} parent=11 // pred_fallthru
          _
      $region12: #{tcnn_auxcl_forward.1} parent=5 // pred_fallthru
        _
      %p422 = scmp.lt.s32.totalorder %s25, 2
      // Predicated region
      $region53: #{tcnn_auxcl_forward.1} parent=5 // pred_check
        %p423 = pneg %p422
      $region54: #{tcnn_auxcl_forward.1} parent=5 // pred_check_branch
        %425 = sbr.rel (%p423) target = $region56
      $region55: #{tcnn_auxcl_forward.1} parent=5 // pred_region
        // Predicated region
        $region57: #{tcnn_auxcl_forward.1} parent=55 // pred_check
          %p426 = pneg %p59
        $region58: #{tcnn_auxcl_forward.1} parent=55 // pred_check_branch
          %428 = sbr.rel (%p426) target = $region60
        $region59: #{tcnn_auxcl_forward.1} parent=55 // pred_region
          %s429 = sand.u32 %s49, 1
          %s430 = scalar_lea.sflag [#allocation3], %s429
          %s431 = sand.u32 %s49, 1
          %s432 = smul.addr %s431, 64
          %s433 = scalar_lea.vmem [#allocation2], %s432
          %s434 = smul.u32 8, %s33
          %s436 = ssub.s32 1024, 1024
          %437 = vsyncadd %s430, %s436
          %s438 = smul.addr %s32, 8
          %s439 = sadd.s32 %s434, %s438
          %s440 = smul.addr %s439, 128
          %s441 = scalar_lea.hbm %s0, %s440
          %s442 = sshll.u32 %s433, 4
          %s443 = int_to_ptr.vmem [resolvable:$true] %s442
          %448 = dma.hbm_to_vmem [thread:$0]  %s441, 1024, %s443, %s430, 128, 128, 8
        $region60: #{tcnn_auxcl_forward.1} parent=55 // pred_fallthru
          _
      $region56: #{tcnn_auxcl_forward.1} parent=5 // pred_fallthru
        _
      %p449 = scmp.le.s32.totalorder 1, %s25
      %p450 = scmp.lt.s32.totalorder %s25, 3
      %p451 = pnand %p449, %p450
      %p452 = pneg %p451
      // Predicated region
      $region61: #{tcnn_auxcl_forward.1} parent=5 // pred_check
        _
      $region62: #{tcnn_auxcl_forward.1} parent=5 // pred_check_branch
        %454 = sbr.rel (%p451) target = $region64
      $region63: #{tcnn_auxcl_forward.1} parent=5 // pred_region
        %s455 = ssub.s32 %s25, 1
        %s456 = sand.u32 %s52, 1
        %s457 = scalar_lea.sflag [#allocation3], %s456
        %s458 = sand.u32 %s52, 1
        %s459 = smul.addr %s458, 64
        %s460 = scalar_lea.vmem [#allocation2], %s459
        // Predicated region
        $region65: #{tcnn_auxcl_forward.1} parent=63 // pred_check
          %p461 = pneg %p65
        $region66: #{tcnn_auxcl_forward.1} parent=63 // pred_check_branch
          %463 = sbr.rel (%p461) target = $region68
        $region67: #{tcnn_auxcl_forward.1} parent=63 // pred_region
          %464 = dma.done %s457, 1024
        $region68: #{tcnn_auxcl_forward.1} parent=63 // pred_fallthru
          _
        // Predicated region
        $region69: #{tcnn_auxcl_forward.1} parent=63 // pred_check
          %p465 = pneg %p86
        $region70: #{tcnn_auxcl_forward.1} parent=63 // pred_check_branch
          %467 = sbr.rel (%p465) target = $region72
        $region71: #{tcnn_auxcl_forward.1} parent=63 // pred_region
          %468 = dma.done [#allocation5], 1024
        $region72: #{tcnn_auxcl_forward.1} parent=63 // pred_fallthru
          _
        // Predicated region
        $region73: #{tcnn_auxcl_forward.1} parent=63 // pred_check
          %p469 = pneg %p128
        $region74: #{tcnn_auxcl_forward.1} parent=63 // pred_check_branch
          %471 = sbr.rel (%p469) target = $region76
        $region75: #{tcnn_auxcl_forward.1} parent=63 // pred_region
          %472 = dma.done [#allocation5], 4096
        $region76: #{tcnn_auxcl_forward.1} parent=63 // pred_fallthru
          _
        // Predicated region
        $region77: #{tcnn_auxcl_forward.1} parent=63 // pred_check
          %p473 = pneg %p170
        $region78: #{tcnn_auxcl_forward.1} parent=63 // pred_check_branch
          %475 = sbr.rel (%p473) target = $region80
        $region79: #{tcnn_auxcl_forward.1} parent=63 // pred_region
          %476 = dma.done [#allocation8], 16384
        $region80: #{tcnn_auxcl_forward.1} parent=63 // pred_fallthru
          _
        // Predicated region
        $region81: #{tcnn_auxcl_forward.1} parent=63 // pred_check
          %p477 = pneg %p212
        $region82: #{tcnn_auxcl_forward.1} parent=63 // pred_check_branch
          %479 = sbr.rel (%p477) target = $region84
        $region83: #{tcnn_auxcl_forward.1} parent=63 // pred_region
          %480 = dma.done [#allocation8], 4096
        $region84: #{tcnn_auxcl_forward.1} parent=63 // pred_fallthru
          _
        // Predicated region
        $region85: #{tcnn_auxcl_forward.1} parent=63 // pred_check
          %p481 = pneg %p254
        $region86: #{tcnn_auxcl_forward.1} parent=63 // pred_check_branch
          %483 = sbr.rel (%p481) target = $region88
        $region87: #{tcnn_auxcl_forward.1} parent=63 // pred_region
          %484 = dma.done [#allocation11], 2048
        $region88: #{tcnn_auxcl_forward.1} parent=63 // pred_fallthru
          _
        %s485 = sand.u32 %s52, 1
        %s486 = scalar_lea.sflag [#allocation3], %s485
        %s487 = sand.u32 %s52, 1
        %s488 = smul.addr %s487, 64
        %s489 = scalar_lea.vmem [#allocation2], %s488
        %p490 = pneg %p65
        %p491 = pneg %p62
        %p492 = pneg %p86
        %p493 = pneg %p83
        %p494 = pneg %p107
        %p495 = pneg %p104
        %p496 = pneg %p128
        %p497 = pneg %p125
        %p498 = pneg %p149
        %p499 = pneg %p146
        %p500 = pneg %p170
        %p501 = pneg %p167
        %p502 = pneg %p191
        %p503 = pneg %p188
        %p504 = pneg %p212
        %p505 = pneg %p209
        %p506 = pneg %p233
        %p507 = pneg %p230
        %p508 = pneg %p254
        %p509 = pneg %p251
        %p510 = pneg %p275
        %p511 = pneg %p272
        %p512 = pneg %p301
        %p513 = pneg %p298
        %p514 = scmp.lt.s32.totalorder %s34, 1
        %s515 = scalar_select %p514, %s34, 1
        %s516 = smul.addr %s515, 2
        %s517 = smul.addr %s516, 8
        %s518 = scalar_lea.vmem %s11, %s517
        %p519 = pneg %p327
        %p520 = pneg %p324
        %p521 = scmp.lt.s32.totalorder %s34, 1
        %s522 = scalar_select %p521, %s34, 1
        %s523 = smul.addr %s522, 2
        %s524 = smul.addr %s523, 8
        %s525 = scalar_lea.vmem %s12, %s524
        %s526 = smul.u32 8, %s35
        %p527 = scmp.lt.s32.totalorder %s34, 1
        %s528 = scalar_select %p527, %s34, 1
        %s529 = smul.addr %s528, 2
        %s530 = smul.addr %s529, 8
        %s531 = scalar_lea.vmem %s11, %s530
        %p532 = scmp.lt.s32.totalorder %s34, 1
        %s533 = scalar_select %p532, %s34, 1
        %s534 = smul.addr %s533, 2
        %s535 = smul.addr %s534, 8
        %s536 = scalar_lea.vmem %s12, %s535
        %v537 = vld [vmem:[%s460] sm:$0xff]
        %v538 = vld [vmem:[%s460 + $0x8] sm:$0xff]
        %v539 = vld [vmem:[%s460 + $0x10] sm:$0xff]
        %v540 = vld [vmem:[%s460 + $0x18] sm:$0xff]
        %v541 = vld [vmem:[%s460 + $0x20] sm:$0xff]
        %v542 = vld [vmem:[%s460 + $0x28] sm:$0xff]
        %v543 = vld [vmem:[%s460 + $0x30] sm:$0xff]
        %v544 = vld [vmem:[%s460 + $0x38] sm:$0xff]
        %v545 = vld [vmem:[#allocation4] sm:$0xff]
        %v546 = vld [vmem:[#allocation4 + $0x8] sm:$0xff]
        %v547 = vld [vmem:[#allocation4 + $0x10] sm:$0xff]
        %v548 = vld [vmem:[#allocation4 + $0x18] sm:$0xff]
        %v549 = vld [vmem:[#allocation4 + $0x20] sm:$0xff]
        %v550 = vld [vmem:[#allocation4 + $0x28] sm:$0xff]
        %v551 = vld [vmem:[#allocation4 + $0x30] sm:$0xff]
        %v552 = vld [vmem:[#allocation4 + $0x38] sm:$0xf]
        %v553 = vld [vmem:[%s2] sm:$0x1]
        %v555 = vlaneseq
        %v556 = vshrl.u32 %v555, 7
        %v557 = vsub.s32 0, %v556
        %v558 = vrot.slane %v553, %v557
        %vm560 = vcmask 490496
        %v562 = vsel %vm560, %v537, 0
        %v565 = vsel %vm560, %v538, 0
        %v568 = vsel %vm560, %v539, 0
        %v571 = vsel %vm560, %v540, 0
        %v574 = vsel %vm560, %v541, 0
        %v577 = vsel %vm560, %v542, 0
        %v580 = vsel %vm560, %v543, 0
        %v583 = vsel %vm560, %v544, 0
        %vm585 = vcmask 1043456
        %v587 = vsel %vm585, %v552, 0
        %589 = vmatprep.subr.mxu0 0.0
        %590 = vmatpush1.msra.mxu0 %v545
        %591 = vmatprep.subr.mxu0 0.0
        %592 = vmatpush1.msra.mxu0 %v546
        %593 = vmatprep.subr.mxu0 0.0
        %594 = vmatpush1.msra.mxu0 %v547
        %595 = vmatprep.subr.mxu0 0.0
        %596 = vmatpush1.msra.mxu0 %v548
        %597 = vmatprep.subr.mxu0 0.0
        %598 = vmatpush1.msra.mxu0 %v549
        %599 = vmatprep.subr.mxu0 0.0
        %600 = vmatpush1.msra.mxu0 %v550
        %601 = vmatprep.subr.mxu0 0.0
        %602 = vmatpush1.msra.mxu0 %v551
        %603 = vmatprep.subr.mxu0 0.0
        %604 = vmatpush1.msra.mxu0 %v587
        %605 = vmatprep.subr.mxu0 0.0
        %606 = vmatpush1.msra.mxu0 0.0
        %607 = vmatprep.subr.mxu0 0.0
        %608 = vmatpush1.msra.mxu0 0.0
        %609 = vmatprep.subr.mxu0 0.0
        %610 = vmatpush1.msra.mxu0 0.0
        %611 = vmatprep.subr.mxu0 0.0
        %612 = vmatpush1.msra.mxu0 0.0
        %613 = vmatprep.subr.mxu0 0.0
        %614 = vmatpush1.msra.mxu0 0.0
        %615 = vmatprep.subr.mxu0 0.0
        %616 = vmatpush1.msra.mxu0 0.0
        %617 = vmatprep.subr.mxu0 0.0
        %618 = vmatpush1.msra.mxu0 0.0
        %619 = vmatprep.subr.mxu0 0.0
        %620 = vmatpush1.msra.mxu0 0.0
        %621 = vmatprep.subr.mxu0 0.0
        %622 = vmatpush1.msra.mxu0 0.0
        %623 = vmatprep.subr.mxu0 0.0
        %624 = vmatpush1.msra.mxu0 0.0
        %625 = vmatprep.subr.mxu0 0.0
        %626 = vmatpush1.msra.mxu0 0.0
        %627 = vmatprep.subr.mxu0 0.0
        %628 = vmatpush1.msra.mxu0 0.0
        %629 = vmatprep.subr.mxu0 0.0
        %630 = vmatpush1.msra.mxu0 0.0
        %631 = vmatprep.subr.mxu0 0.0
        %632 = vmatpush1.msra.mxu0 0.0
        %633 = vmatprep.subr.mxu0 0.0
        %634 = vmatpush1.msra.mxu0 0.0
        %635 = vmatprep.subr.mxu0 0.0
        %636 = vmatpush1.msra.mxu0 0.0
        %637 = vmatprep.subr.mxu0 0.0
        %638 = vmatpush1.msra.mxu0 0.0
        %639 = vmatprep.subr.mxu0 0.0
        %640 = vmatpush1.msra.mxu0 0.0
        %641 = vmatprep.subr.mxu0 0.0
        %642 = vmatpush1.msra.mxu0 0.0
        %643 = vmatprep.subr.mxu0 0.0
        %644 = vmatpush1.msra.mxu0 0.0
        %645 = vmatprep.subr.mxu0 0.0
        %646 = vmatpush1.msra.mxu0 0.0
        %647 = vmatprep.subr.mxu0 0.0
        %648 = vmatpush1.msra.mxu0 0.0
        %649 = vmatprep.subr.mxu0 0.0
        %650 = vmatpush1.msra.mxu0 0.0
        %651 = vmatprep.subr.mxu0 0.0
        %652 = vmatpush1.msra.mxu0 0.0
        %653 = vmatprep.mubr.f32.mxu0 0.0
        %654 = vmatmul.mubr.f32.gmra.mrb[0].mxu0 %v562
        %v655 = vpop.f32.mrb[0].mxu0
        %v656 = vadd.f32 %v558, %v655
        %v657 = vpop.f32.mrb[0].mxu0
        %658 = vmatprep.mubr.f32.mxu0 0.0
        %659 = vmatmul.mubr.f32.gmra.mrb[0].mxu0 %v565
        %v660 = vpop.f32.mrb[0].mxu0
        %v661 = vadd.f32 %v558, %v660
        %v662 = vpop.f32.mrb[0].mxu0
        %663 = vmatprep.mubr.f32.mxu0 0.0
        %664 = vmatmul.mubr.f32.gmra.mrb[0].mxu0 %v568
        %v665 = vpop.f32.mrb[0].mxu0
        %v666 = vadd.f32 %v558, %v665
        %v667 = vpop.f32.mrb[0].mxu0
        %668 = vmatprep.mubr.f32.mxu0 0.0
        %669 = vmatmul.mubr.f32.gmra.mrb[0].mxu0 %v571
        %v670 = vpop.f32.mrb[0].mxu0
        %v671 = vadd.f32 %v558, %v670
        %v672 = vpop.f32.mrb[0].mxu0
        %673 = vmatprep.mubr.f32.mxu0 0.0
        %674 = vmatmul.mubr.f32.gmra.mrb[0].mxu0 %v574
        %v675 = vpop.f32.mrb[0].mxu0
        %v676 = vadd.f32 %v558, %v675
        %v677 = vpop.f32.mrb[0].mxu0
        %678 = vmatprep.mubr.f32.mxu0 0.0
        %679 = vmatmul.mubr.f32.gmra.mrb[0].mxu0 %v577
        %v680 = vpop.f32.mrb[0].mxu0
        %v681 = vadd.f32 %v558, %v680
        %v682 = vpop.f32.mrb[0].mxu0
        %683 = vmatprep.mubr.f32.mxu0 0.0
        %684 = vmatmul.mubr.f32.gmra.mrb[0].mxu0 %v580
        %v685 = vpop.f32.mrb[0].mxu0
        %v686 = vadd.f32 %v558, %v685
        %v687 = vpop.f32.mrb[0].mxu0
        %688 = vmatprep.mubr.f32.mxu0 0.0
        %689 = vmatmul.mubr.f32.gmra.mrb[0].mxu0 %v583
        %v690 = vpop.f32.mrb[0].mxu0
        %v691 = vadd.f32 %v558, %v690
        %v692 = vpop.f32.mrb[0].mxu0
        %693 = vdwg.mxu0
        %vm694 = vcmp.gt.f32.partialorder %v656, 0.0
        %vm695 = vcmp.gt.f32.partialorder %v661, 0.0
        %vm696 = vcmp.gt.f32.partialorder %v666, 0.0
        %vm697 = vcmp.gt.f32.partialorder %v671, 0.0
        %vm698 = vcmp.gt.f32.partialorder %v676, 0.0
        %vm699 = vcmp.gt.f32.partialorder %v681, 0.0
        %vm700 = vcmp.gt.f32.partialorder %v686, 0.0
        %vm701 = vcmp.gt.f32.partialorder %v691, 0.0
        %v702 = vmul.f32 %v656, 0.01
        %v703 = vmul.f32 %v661, 0.01
        %v704 = vmul.f32 %v666, 0.01
        %v705 = vmul.f32 %v671, 0.01
        %v706 = vmul.f32 %v676, 0.01
        %v707 = vmul.f32 %v681, 0.01
        %v708 = vmul.f32 %v686, 0.01
        %v709 = vmul.f32 %v691, 0.01
        %v710 = vsel %vm694, %v656, %v702
        %v711 = vsel %vm695, %v661, %v703
        %v712 = vsel %vm696, %v666, %v704
        %v713 = vsel %vm697, %v671, %v705
        %v714 = vsel %vm698, %v676, %v706
        %v715 = vsel %vm699, %v681, %v707
        %v716 = vsel %vm700, %v686, %v708
        %v717 = vsel %vm701, %v691, %v709
        %v718 = vsel %vm560, %v710, 0.0
        %v719 = vsel %vm560, %v711, 0.0
        %v720 = vadd.f32 %v718, %v719
        %v721 = vsel %vm560, %v712, 0.0
        %v722 = vadd.f32 %v720, %v721
        %v723 = vsel %vm560, %v713, 0.0
        %v724 = vadd.f32 %v722, %v723
        %v725 = vsel %vm560, %v714, 0.0
        %v726 = vadd.f32 %v724, %v725
        %v727 = vsel %vm560, %v715, 0.0
        %v728 = vadd.f32 %v726, %v727
        %v729 = vsel %vm560, %v716, 0.0
        %v730 = vadd.f32 %v728, %v729
        %v731 = vsel %vm560, %v717, 0.0
        %v732 = vadd.f32 %v730, %v731
        %v733 = vrot.slane %v732, 4
        %v734 = vadd.f32 %v732, %v733
        %v735 = vrot.slane %v734, 2
        %v736 = vadd.f32 %v734, %v735
        %v737 = vrot.slane %v736, 1
        %v738 = vadd.f32 %v736, %v737
        %v740 = vsel %vm560, %v710, 0
        %v743 = vsel %vm560, %v711, 0
        %v746 = vsel %vm560, %v712, 0
        %v749 = vsel %vm560, %v713, 0
        %v752 = vsel %vm560, %v714, 0
        %v755 = vsel %vm560, %v715, 0
        %v758 = vsel %vm560, %v716, 0
        %v761 = vsel %vm560, %v717, 0
        %763 = vmatprep.subr.mxu0 0.0
        %764 = vmatpush1.msra.mxu0 %v545
        %765 = vmatprep.subr.mxu0 0.0
        %766 = vmatpush1.msra.mxu0 %v546
        %767 = vmatprep.subr.mxu0 0.0
        %768 = vmatpush1.msra.mxu0 %v547
        %769 = vmatprep.subr.mxu0 0.0
        %770 = vmatpush1.msra.mxu0 %v548
        %771 = vmatprep.subr.mxu0 0.0
        %772 = vmatpush1.msra.mxu0 %v549
        %773 = vmatprep.subr.mxu0 0.0
        %774 = vmatpush1.msra.mxu0 %v550
        %775 = vmatprep.subr.mxu0 0.0
        %776 = vmatpush1.msra.mxu0 %v551
        %777 = vmatprep.subr.mxu0 0.0
        %778 = vmatpush1.msra.mxu0 %v587
        %779 = vmatprep.subr.mxu0 0.0
        %780 = vmatpush1.msra.mxu0 0.0
        %781 = vmatprep.subr.mxu0 0.0
        %782 = vmatpush1.msra.mxu0 0.0
        %783 = vmatprep.subr.mxu0 0.0
        %784 = vmatpush1.msra.mxu0 0.0
        %785 = vmatprep.subr.mxu0 0.0
        %786 = vmatpush1.msra.mxu0 0.0
        %787 = vmatprep.subr.mxu0 0.0
        %788 = vmatpush1.msra.mxu0 0.0
        %789 = vmatprep.subr.mxu0 0.0
        %790 = vmatpush1.msra.mxu0 0.0
        %791 = vmatprep.subr.mxu0 0.0
        %792 = vmatpush1.msra.mxu0 0.0
        %793 = vmatprep.subr.mxu0 0.0
        %794 = vmatpush1.msra.mxu0 0.0
        %795 = vmatprep.subr.mxu0 0.0
        %796 = vmatpush1.msra.mxu0 0.0
        %797 = vmatprep.subr.mxu0 0.0
        %798 = vmatpush1.msra.mxu0 0.0
        %799 = vmatprep.subr.mxu0 0.0
        %800 = vmatpush1.msra.mxu0 0.0
        %801 = vmatprep.subr.mxu0 0.0
        %802 = vmatpush1.msra.mxu0 0.0
        %803 = vmatprep.subr.mxu0 0.0
        %804 = vmatpush1.msra.mxu0 0.0
        %805 = vmatprep.subr.mxu0 0.0
        %806 = vmatpush1.msra.mxu0 0.0
        %807 = vmatprep.subr.mxu0 0.0
        %808 = vmatpush1.msra.mxu0 0.0
        %809 = vmatprep.subr.mxu0 0.0
        %810 = vmatpush1.msra.mxu0 0.0
        %811 = vmatprep.subr.mxu0 0.0
        %812 = vmatpush1.msra.mxu0 0.0
        %813 = vmatprep.subr.mxu0 0.0
        %814 = vmatpush1.msra.mxu0 0.0
        %815 = vmatprep.subr.mxu0 0.0
        %816 = vmatpush1.msra.mxu0 0.0
        %817 = vmatprep.subr.mxu0 0.0
        %818 = vmatpush1.msra.mxu0 0.0
        %819 = vmatprep.subr.mxu0 0.0
        %820 = vmatpush1.msra.mxu0 0.0
        %821 = vmatprep.subr.mxu0 0.0
        %822 = vmatpush1.msra.mxu0 0.0
        %823 = vmatprep.subr.mxu0 0.0
        %824 = vmatpush1.msra.mxu0 0.0
        %825 = vmatprep.subr.mxu0 0.0
        %826 = vmatpush1.msra.mxu0 0.0
        %827 = vmatprep.mubr.f32.mxu0 0.0
        %828 = vmatmul.mubr.f32.gmra.mrb[0].mxu0 %v740
        %v829 = vpop.f32.mrb[0].mxu0
        %v830 = vadd.f32 %v558, %v829
        %v831 = vpop.f32.mrb[0].mxu0
        %832 = vmatprep.mubr.f32.mxu0 0.0
        %833 = vmatmul.mubr.f32.gmra.mrb[0].mxu0 %v743
        %v834 = vpop.f32.mrb[0].mxu0
        %v835 = vadd.f32 %v558, %v834
        %v836 = vpop.f32.mrb[0].mxu0
        %837 = vmatprep.mubr.f32.mxu0 0.0
        %838 = vmatmul.mubr.f32.gmra.mrb[0].mxu0 %v746
        %v839 = vpop.f32.mrb[0].mxu0
        %v840 = vadd.f32 %v558, %v839
        %v841 = vpop.f32.mrb[0].mxu0
        %842 = vmatprep.mubr.f32.mxu0 0.0
        %843 = vmatmul.mubr.f32.gmra.mrb[0].mxu0 %v749
        %v844 = vpop.f32.mrb[0].mxu0
        %v845 = vadd.f32 %v558, %v844
        %v846 = vpop.f32.mrb[0].mxu0
        %847 = vmatprep.mubr.f32.mxu0 0.0
        %848 = vmatmul.mubr.f32.gmra.mrb[0].mxu0 %v752
        %v849 = vpop.f32.mrb[0].mxu0
        %v850 = vadd.f32 %v558, %v849
        %v851 = vpop.f32.mrb[0].mxu0
        %852 = vmatprep.mubr.f32.mxu0 0.0
        %853 = vmatmul.mubr.f32.gmra.mrb[0].mxu0 %v755
        %v854 = vpop.f32.mrb[0].mxu0
        %v855 = vadd.f32 %v558, %v854
        %v856 = vpop.f32.mrb[0].mxu0
        %857 = vmatprep.mubr.f32.mxu0 0.0
        %858 = vmatmul.mubr.f32.gmra.mrb[0].mxu0 %v758
        %v859 = vpop.f32.mrb[0].mxu0
        %v860 = vadd.f32 %v558, %v859
        %v861 = vpop.f32.mrb[0].mxu0
        %862 = vmatprep.mubr.f32.mxu0 0.0
        %863 = vmatmul.mubr.f32.gmra.mrb[0].mxu0 %v761
        %v864 = vpop.f32.mrb[0].mxu0
        %v865 = vadd.f32 %v558, %v864
        %v866 = vpop.f32.mrb[0].mxu0
        %867 = vdwg.mxu0
        %vm868 = vcmp.gt.f32.partialorder %v830, 0.0
        %vm869 = vcmp.gt.f32.partialorder %v835, 0.0
        %vm870 = vcmp.gt.f32.partialorder %v840, 0.0
        %vm871 = vcmp.gt.f32.partialorder %v845, 0.0
        %vm872 = vcmp.gt.f32.partialorder %v850, 0.0
        %vm873 = vcmp.gt.f32.partialorder %v855, 0.0
        %vm874 = vcmp.gt.f32.partialorder %v860, 0.0
        %vm875 = vcmp.gt.f32.partialorder %v865, 0.0
        %v876 = vmul.f32 %v830, 0.01
        %v877 = vmul.f32 %v835, 0.01
        %v878 = vmul.f32 %v840, 0.01
        %v879 = vmul.f32 %v845, 0.01
        %v880 = vmul.f32 %v850, 0.01
        %v881 = vmul.f32 %v855, 0.01
        %v882 = vmul.f32 %v860, 0.01
        %v883 = vmul.f32 %v865, 0.01
        %v884 = vsel %vm868, %v830, %v876
        %v885 = vsel %vm869, %v835, %v877
        %v886 = vsel %vm870, %v840, %v878
        %v887 = vsel %vm871, %v845, %v879
        %v888 = vsel %vm872, %v850, %v880
        %v889 = vsel %vm873, %v855, %v881
        %v890 = vsel %vm874, %v860, %v882
        %v891 = vsel %vm875, %v865, %v883
        %v892 = vsel %vm560, %v884, 0.0
        %v893 = vsel %vm560, %v885, 0.0
        %v894 = vadd.f32 %v892, %v893
        %v895 = vsel %vm560, %v886, 0.0
        %v896 = vadd.f32 %v894, %v895
        %v897 = vsel %vm560, %v887, 0.0
        %v898 = vadd.f32 %v896, %v897
        %v899 = vsel %vm560, %v888, 0.0
        %v900 = vadd.f32 %v898, %v899
        %v901 = vsel %vm560, %v889, 0.0
        %v902 = vadd.f32 %v900, %v901
        %v903 = vsel %vm560, %v890, 0.0
        %v904 = vadd.f32 %v902, %v903
        %v905 = vsel %vm560, %v891, 0.0
        %v906 = vadd.f32 %v904, %v905
        %v907 = vrot.slane %v906, 4
        %v908 = vadd.f32 %v906, %v907
        %v909 = vrot.slane %v908, 2
        %v910 = vadd.f32 %v908, %v909
        %v911 = vrot.slane %v910, 1
        %v912 = vadd.f32 %v910, %v911
        %v914 = vsel %vm560, %v884, 0
        %v917 = vsel %vm560, %v885, 0
        %v920 = vsel %vm560, %v886, 0
        %v923 = vsel %vm560, %v887, 0
        %v926 = vsel %vm560, %v888, 0
        %v929 = vsel %vm560, %v889, 0
        %v932 = vsel %vm560, %v890, 0
        %v935 = vsel %vm560, %v891, 0
        %937 = vmatprep.subr.mxu0 0.0
        %938 = vmatpush1.msra.mxu0 %v545
        %939 = vmatprep.subr.mxu0 0.0
        %940 = vmatpush1.msra.mxu0 %v546
        %941 = vmatprep.subr.mxu0 0.0
        %942 = vmatpush1.msra.mxu0 %v547
        %943 = vmatprep.subr.mxu0 0.0
        %944 = vmatpush1.msra.mxu0 %v548
        %945 = vmatprep.subr.mxu0 0.0
        %946 = vmatpush1.msra.mxu0 %v549
        %947 = vmatprep.subr.mxu0 0.0
        %948 = vmatpush1.msra.mxu0 %v550
        %949 = vmatprep.subr.mxu0 0.0
        %950 = vmatpush1.msra.mxu0 %v551
        %951 = vmatprep.subr.mxu0 0.0
        %952 = vmatpush1.msra.mxu0 %v587
        %953 = vmatprep.subr.mxu0 0.0
        %954 = vmatpush1.msra.mxu0 0.0
        %955 = vmatprep.subr.mxu0 0.0
        %956 = vmatpush1.msra.mxu0 0.0
        %957 = vmatprep.subr.mxu0 0.0
        %958 = vmatpush1.msra.mxu0 0.0
        %959 = vmatprep.subr.mxu0 0.0
        %960 = vmatpush1.msra.mxu0 0.0
        %961 = vmatprep.subr.mxu0 0.0
        %962 = vmatpush1.msra.mxu0 0.0
        %963 = vmatprep.subr.mxu0 0.0
        %964 = vmatpush1.msra.mxu0 0.0
        %965 = vmatprep.subr.mxu0 0.0
        %966 = vmatpush1.msra.mxu0 0.0
        %967 = vmatprep.subr.mxu0 0.0
        %968 = vmatpush1.msra.mxu0 0.0
        %969 = vmatprep.subr.mxu0 0.0
        %970 = vmatpush1.msra.mxu0 0.0
        %971 = vmatprep.subr.mxu0 0.0
        %972 = vmatpush1.msra.mxu0 0.0
        %973 = vmatprep.subr.mxu0 0.0
        %974 = vmatpush1.msra.mxu0 0.0
        %975 = vmatprep.subr.mxu0 0.0
        %976 = vmatpush1.msra.mxu0 0.0
        %977 = vmatprep.subr.mxu0 0.0
        %978 = vmatpush1.msra.mxu0 0.0
        %979 = vmatprep.subr.mxu0 0.0
        %980 = vmatpush1.msra.mxu0 0.0
        %981 = vmatprep.subr.mxu0 0.0
        %982 = vmatpush1.msra.mxu0 0.0
        %983 = vmatprep.subr.mxu0 0.0
        %984 = vmatpush1.msra.mxu0 0.0
        %985 = vmatprep.subr.mxu0 0.0
        %986 = vmatpush1.msra.mxu0 0.0
        %987 = vmatprep.subr.mxu0 0.0
        %988 = vmatpush1.msra.mxu0 0.0
        %989 = vmatprep.subr.mxu0 0.0
        %990 = vmatpush1.msra.mxu0 0.0
        %991 = vmatprep.subr.mxu0 0.0
        %992 = vmatpush1.msra.mxu0 0.0
        %993 = vmatprep.subr.mxu0 0.0
        %994 = vmatpush1.msra.mxu0 0.0
        %995 = vmatprep.subr.mxu0 0.0
        %996 = vmatpush1.msra.mxu0 0.0
        %997 = vmatprep.subr.mxu0 0.0
        %998 = vmatpush1.msra.mxu0 0.0
        %999 = vmatprep.subr.mxu0 0.0
        %1000 = vmatpush1.msra.mxu0 0.0
        %1001 = vmatprep.mubr.f32.mxu0 0.0
        %1002 = vmatmul.mubr.f32.gmra.mrb[0].mxu0 %v914
        %v1003 = vpop.f32.mrb[0].mxu0
        %v1004 = vadd.f32 %v558, %v1003
        %v1005 = vpop.f32.mrb[0].mxu0
        %1006 = vmatprep.mubr.f32.mxu0 0.0
        %1007 = vmatmul.mubr.f32.gmra.mrb[0].mxu0 %v917
        %v1008 = vpop.f32.mrb[0].mxu0
        %v1009 = vadd.f32 %v558, %v1008
        %v1010 = vpop.f32.mrb[0].mxu0
        %1011 = vmatprep.mubr.f32.mxu0 0.0
        %1012 = vmatmul.mubr.f32.gmra.mrb[0].mxu0 %v920
        %v1013 = vpop.f32.mrb[0].mxu0
        %v1014 = vadd.f32 %v558, %v1013
        %v1015 = vpop.f32.mrb[0].mxu0
        %1016 = vmatprep.mubr.f32.mxu0 0.0
        %1017 = vmatmul.mubr.f32.gmra.mrb[0].mxu0 %v923
        %v1018 = vpop.f32.mrb[0].mxu0
        %v1019 = vadd.f32 %v558, %v1018
        %v1020 = vpop.f32.mrb[0].mxu0
        %1021 = vmatprep.mubr.f32.mxu0 0.0
        %1022 = vmatmul.mubr.f32.gmra.mrb[0].mxu0 %v926
        %v1023 = vpop.f32.mrb[0].mxu0
        %v1024 = vadd.f32 %v558, %v1023
        %v1025 = vpop.f32.mrb[0].mxu0
        %1026 = vmatprep.mubr.f32.mxu0 0.0
        %1027 = vmatmul.mubr.f32.gmra.mrb[0].mxu0 %v929
        %v1028 = vpop.f32.mrb[0].mxu0
        %v1029 = vadd.f32 %v558, %v1028
        %v1030 = vpop.f32.mrb[0].mxu0
        %1031 = vmatprep.mubr.f32.mxu0 0.0
        %1032 = vmatmul.mubr.f32.gmra.mrb[0].mxu0 %v932
        %v1033 = vpop.f32.mrb[0].mxu0
        %v1034 = vadd.f32 %v558, %v1033
        %v1035 = vpop.f32.mrb[0].mxu0
        %1036 = vmatprep.mubr.f32.mxu0 0.0
        %1037 = vmatmul.mubr.f32.gmra.mrb[0].mxu0 %v935
        %v1038 = vpop.f32.mrb[0].mxu0
        %v1039 = vadd.f32 %v558, %v1038
        %v1040 = vpop.f32.mrb[0].mxu0
        %1041 = vdwg.mxu0
        %vm1042 = vcmp.gt.f32.partialorder %v1004, 0.0
        %vm1043 = vcmp.gt.f32.partialorder %v1009, 0.0
        %vm1044 = vcmp.gt.f32.partialorder %v1014, 0.0
        %vm1045 = vcmp.gt.f32.partialorder %v1019, 0.0
        %vm1046 = vcmp.gt.f32.partialorder %v1024, 0.0
        %vm1047 = vcmp.gt.f32.partialorder %v1029, 0.0
        %vm1048 = vcmp.gt.f32.partialorder %v1034, 0.0
        %vm1049 = vcmp.gt.f32.partialorder %v1039, 0.0
        %v1050 = vmul.f32 %v1004, 0.01
        %v1051 = vmul.f32 %v1009, 0.01
        %v1052 = vmul.f32 %v1014, 0.01
        %v1053 = vmul.f32 %v1019, 0.01
        %v1054 = vmul.f32 %v1024, 0.01
        %v1055 = vmul.f32 %v1029, 0.01
        %v1056 = vmul.f32 %v1034, 0.01
        %v1057 = vmul.f32 %v1039, 0.01
        %v1058 = vsel %vm1042, %v1004, %v1050
        %v1059 = vsel %vm1043, %v1009, %v1051
        %v1060 = vsel %vm1044, %v1014, %v1052
        %v1061 = vsel %vm1045, %v1019, %v1053
        %v1062 = vsel %vm1046, %v1024, %v1054
        %v1063 = vsel %vm1047, %v1029, %v1055
        %v1064 = vsel %vm1048, %v1034, %v1056
        %v1065 = vsel %vm1049, %v1039, %v1057
        %v1066 = vsel %vm560, %v1058, 0.0
        %v1067 = vsel %vm560, %v1059, 0.0
        %v1068 = vadd.f32 %v1066, %v1067
        %v1069 = vsel %vm560, %v1060, 0.0
        %v1070 = vadd.f32 %v1068, %v1069
        %v1071 = vsel %vm560, %v1061, 0.0
        %v1072 = vadd.f32 %v1070, %v1071
        %v1073 = vsel %vm560, %v1062, 0.0
        %v1074 = vadd.f32 %v1072, %v1073
        %v1075 = vsel %vm560, %v1063, 0.0
        %v1076 = vadd.f32 %v1074, %v1075
        %v1077 = vsel %vm560, %v1064, 0.0
        %v1078 = vadd.f32 %v1076, %v1077
        %v1079 = vsel %vm560, %v1065, 0.0
        %v1080 = vadd.f32 %v1078, %v1079
        %v1081 = vrot.slane %v1080, 4
        %v1082 = vadd.f32 %v1080, %v1081
        %v1083 = vrot.slane %v1082, 2
        %v1084 = vadd.f32 %v1082, %v1083
        %v1085 = vrot.slane %v1084, 1
        %v1086 = vadd.f32 %v1084, %v1085
        %v1088 = vsel %vm560, %v1058, 0
        %v1091 = vsel %vm560, %v1059, 0
        %v1094 = vsel %vm560, %v1060, 0
        %v1097 = vsel %vm560, %v1061, 0
        %v1100 = vsel %vm560, %v1062, 0
        %v1103 = vsel %vm560, %v1063, 0
        %v1106 = vsel %vm560, %v1064, 0
        %v1109 = vsel %vm560, %v1065, 0
        %1111 = vmatprep.subr.mxu0 0.0
        %1112 = vmatpush1.msra.mxu0 %v545
        %1113 = vmatprep.subr.mxu0 0.0
        %1114 = vmatpush1.msra.mxu0 %v546
        %1115 = vmatprep.subr.mxu0 0.0
        %1116 = vmatpush1.msra.mxu0 %v547
        %1117 = vmatprep.subr.mxu0 0.0
        %1118 = vmatpush1.msra.mxu0 %v548
        %1119 = vmatprep.subr.mxu0 0.0
        %1120 = vmatpush1.msra.mxu0 %v549
        %1121 = vmatprep.subr.mxu0 0.0
        %1122 = vmatpush1.msra.mxu0 %v550
        %1123 = vmatprep.subr.mxu0 0.0
        %1124 = vmatpush1.msra.mxu0 %v551
        %1125 = vmatprep.subr.mxu0 0.0
        %1126 = vmatpush1.msra.mxu0 %v587
        %1127 = vmatprep.subr.mxu0 0.0
        %1128 = vmatpush1.msra.mxu0 0.0
        %1129 = vmatprep.subr.mxu0 0.0
        %1130 = vmatpush1.msra.mxu0 0.0
        %1131 = vmatprep.subr.mxu0 0.0
        %1132 = vmatpush1.msra.mxu0 0.0
        %1133 = vmatprep.subr.mxu0 0.0
        %1134 = vmatpush1.msra.mxu0 0.0
        %1135 = vmatprep.subr.mxu0 0.0
        %1136 = vmatpush1.msra.mxu0 0.0
        %1137 = vmatprep.subr.mxu0 0.0
        %1138 = vmatpush1.msra.mxu0 0.0
        %1139 = vmatprep.subr.mxu0 0.0
        %1140 = vmatpush1.msra.mxu0 0.0
        %1141 = vmatprep.subr.mxu0 0.0
        %1142 = vmatpush1.msra.mxu0 0.0
        %1143 = vmatprep.subr.mxu0 0.0
        %1144 = vmatpush1.msra.mxu0 0.0
        %1145 = vmatprep.subr.mxu0 0.0
        %1146 = vmatpush1.msra.mxu0 0.0
        %1147 = vmatprep.subr.mxu0 0.0
        %1148 = vmatpush1.msra.mxu0 0.0
        %1149 = vmatprep.subr.mxu0 0.0
        %1150 = vmatpush1.msra.mxu0 0.0
        %1151 = vmatprep.subr.mxu0 0.0
        %1152 = vmatpush1.msra.mxu0 0.0
        %1153 = vmatprep.subr.mxu0 0.0
        %1154 = vmatpush1.msra.mxu0 0.0
        %1155 = vmatprep.subr.mxu0 0.0
        %1156 = vmatpush1.msra.mxu0 0.0
        %1157 = vmatprep.subr.mxu0 0.0
        %1158 = vmatpush1.msra.mxu0 0.0
        %1159 = vmatprep.subr.mxu0 0.0
        %1160 = vmatpush1.msra.mxu0 0.0
        %1161 = vmatprep.subr.mxu0 0.0
        %1162 = vmatpush1.msra.mxu0 0.0
        %1163 = vmatprep.subr.mxu0 0.0
        %1164 = vmatpush1.msra.mxu0 0.0
        %1165 = vmatprep.subr.mxu0 0.0
        %1166 = vmatpush1.msra.mxu0 0.0
        %1167 = vmatprep.subr.mxu0 0.0
        %1168 = vmatpush1.msra.mxu0 0.0
        %1169 = vmatprep.subr.mxu0 0.0
        %1170 = vmatpush1.msra.mxu0 0.0
        %1171 = vmatprep.subr.mxu0 0.0
        %1172 = vmatpush1.msra.mxu0 0.0
        %1173 = vmatprep.subr.mxu0 0.0
        %1174 = vmatpush1.msra.mxu0 0.0
        %1175 = vmatprep.mubr.f32.mxu0 0.0
        %1176 = vmatmul.mubr.f32.gmra.mrb[0].mxu0 %v1088
        %v1177 = vpop.f32.mrb[0].mxu0
        %v1178 = vadd.f32 %v558, %v1177
        %v1179 = vpop.f32.mrb[0].mxu0
        %1180 = vmatprep.mubr.f32.mxu0 0.0
        %1181 = vmatmul.mubr.f32.gmra.mrb[0].mxu0 %v1091
        %v1182 = vpop.f32.mrb[0].mxu0
        %v1183 = vadd.f32 %v558, %v1182
        %v1184 = vpop.f32.mrb[0].mxu0
        %1185 = vmatprep.mubr.f32.mxu0 0.0
        %1186 = vmatmul.mubr.f32.gmra.mrb[0].mxu0 %v1094
        %v1187 = vpop.f32.mrb[0].mxu0
        %v1188 = vadd.f32 %v558, %v1187
        %v1189 = vpop.f32.mrb[0].mxu0
        %1190 = vmatprep.mubr.f32.mxu0 0.0
        %1191 = vmatmul.mubr.f32.gmra.mrb[0].mxu0 %v1097
        %v1192 = vpop.f32.mrb[0].mxu0
        %v1193 = vadd.f32 %v558, %v1192
        %v1194 = vpop.f32.mrb[0].mxu0
        %1195 = vmatprep.mubr.f32.mxu0 0.0
        %1196 = vmatmul.mubr.f32.gmra.mrb[0].mxu0 %v1100
        %v1197 = vpop.f32.mrb[0].mxu0
        %v1198 = vadd.f32 %v558, %v1197
        %v1199 = vpop.f32.mrb[0].mxu0
        %1200 = vmatprep.mubr.f32.mxu0 0.0
        %1201 = vmatmul.mubr.f32.gmra.mrb[0].mxu0 %v1103
        %v1202 = vpop.f32.mrb[0].mxu0
        %v1203 = vadd.f32 %v558, %v1202
        %v1204 = vpop.f32.mrb[0].mxu0
        %1205 = vmatprep.mubr.f32.mxu0 0.0
        %1206 = vmatmul.mubr.f32.gmra.mrb[0].mxu0 %v1106
        %v1207 = vpop.f32.mrb[0].mxu0
        %v1208 = vadd.f32 %v558, %v1207
        %v1209 = vpop.f32.mrb[0].mxu0
        %1210 = vmatprep.mubr.f32.mxu0 0.0
        %1211 = vmatmul.mubr.f32.gmra.mrb[0].mxu0 %v1109
        %v1212 = vpop.f32.mrb[0].mxu0
        %v1213 = vadd.f32 %v558, %v1212
        %v1214 = vpop.f32.mrb[0].mxu0
        %1215 = vdwg.mxu0
        %vm1216 = vcmp.gt.f32.partialorder %v1178, 0.0
        %vm1217 = vcmp.gt.f32.partialorder %v1183, 0.0
        %vm1218 = vcmp.gt.f32.partialorder %v1188, 0.0
        %vm1219 = vcmp.gt.f32.partialorder %v1193, 0.0
        %vm1220 = vcmp.gt.f32.partialorder %v1198, 0.0
        %vm1221 = vcmp.gt.f32.partialorder %v1203, 0.0
        %vm1222 = vcmp.gt.f32.partialorder %v1208, 0.0
        %vm1223 = vcmp.gt.f32.partialorder %v1213, 0.0
        %v1224 = vmul.f32 %v1178, 0.01
        %v1225 = vmul.f32 %v1183, 0.01
        %v1226 = vmul.f32 %v1188, 0.01
        %v1227 = vmul.f32 %v1193, 0.01
        %v1228 = vmul.f32 %v1198, 0.01
        %v1229 = vmul.f32 %v1203, 0.01
        %v1230 = vmul.f32 %v1208, 0.01
        %v1231 = vmul.f32 %v1213, 0.01
        %v1232 = vsel %vm1216, %v1178, %v1224
        %v1233 = vsel %vm1217, %v1183, %v1225
        %v1234 = vsel %vm1218, %v1188, %v1226
        %v1235 = vsel %vm1219, %v1193, %v1227
        %v1236 = vsel %vm1220, %v1198, %v1228
        %v1237 = vsel %vm1221, %v1203, %v1229
        %v1238 = vsel %vm1222, %v1208, %v1230
        %v1239 = vsel %vm1223, %v1213, %v1231
        %v1240 = vsel %vm560, %v1232, 0.0
        %v1241 = vsel %vm560, %v1233, 0.0
        %v1242 = vadd.f32 %v1240, %v1241
        %v1243 = vsel %vm560, %v1234, 0.0
        %v1244 = vadd.f32 %v1242, %v1243
        %v1245 = vsel %vm560, %v1235, 0.0
        %v1246 = vadd.f32 %v1244, %v1245
        %v1247 = vsel %vm560, %v1236, 0.0
        %v1248 = vadd.f32 %v1246, %v1247
        %v1249 = vsel %vm560, %v1237, 0.0
        %v1250 = vadd.f32 %v1248, %v1249
        %v1251 = vsel %vm560, %v1238, 0.0
        %v1252 = vadd.f32 %v1250, %v1251
        %v1253 = vsel %vm560, %v1239, 0.0
        %v1254 = vadd.f32 %v1252, %v1253
        %v1255 = vrot.slane %v1254, 4
        %v1256 = vadd.f32 %v1254, %v1255
        %v1257 = vrot.slane %v1256, 2
        %v1258 = vadd.f32 %v1256, %v1257
        %v1259 = vrot.slane %v1258, 1
        %v1260 = vadd.f32 %v1258, %v1259
        %v1262 = vsel %vm560, %v1232, 0
        %v1265 = vsel %vm560, %v1233, 0
        %v1268 = vsel %vm560, %v1234, 0
        %v1271 = vsel %vm560, %v1235, 0
        %v1274 = vsel %vm560, %v1236, 0
        %v1277 = vsel %vm560, %v1237, 0
        %v1280 = vsel %vm560, %v1238, 0
        %v1283 = vsel %vm560, %v1239, 0
        %1285 = vmatprep.subr.mxu0 0.0
        %1286 = vmatpush1.msra.mxu0 %v545
        %1287 = vmatprep.subr.mxu0 0.0
        %1288 = vmatpush1.msra.mxu0 %v546
        %1289 = vmatprep.subr.mxu0 0.0
        %1290 = vmatpush1.msra.mxu0 %v547
        %1291 = vmatprep.subr.mxu0 0.0
        %1292 = vmatpush1.msra.mxu0 %v548
        %1293 = vmatprep.subr.mxu0 0.0
        %1294 = vmatpush1.msra.mxu0 %v549
        %1295 = vmatprep.subr.mxu0 0.0
        %1296 = vmatpush1.msra.mxu0 %v550
        %1297 = vmatprep.subr.mxu0 0.0
        %1298 = vmatpush1.msra.mxu0 %v551
        %1299 = vmatprep.subr.mxu0 0.0
        %1300 = vmatpush1.msra.mxu0 %v587
        %1301 = vmatprep.subr.mxu0 0.0
        %1302 = vmatpush1.msra.mxu0 0.0
        %1303 = vmatprep.subr.mxu0 0.0
        %1304 = vmatpush1.msra.mxu0 0.0
        %1305 = vmatprep.subr.mxu0 0.0
        %1306 = vmatpush1.msra.mxu0 0.0
        %1307 = vmatprep.subr.mxu0 0.0
        %1308 = vmatpush1.msra.mxu0 0.0
        %1309 = vmatprep.subr.mxu0 0.0
        %1310 = vmatpush1.msra.mxu0 0.0
        %1311 = vmatprep.subr.mxu0 0.0
        %1312 = vmatpush1.msra.mxu0 0.0
        %1313 = vmatprep.subr.mxu0 0.0
        %1314 = vmatpush1.msra.mxu0 0.0
        %1315 = vmatprep.subr.mxu0 0.0
        %1316 = vmatpush1.msra.mxu0 0.0
        %1317 = vmatprep.subr.mxu0 0.0
        %1318 = vmatpush1.msra.mxu0 0.0
        %1319 = vmatprep.subr.mxu0 0.0
        %1320 = vmatpush1.msra.mxu0 0.0
        %1321 = vmatprep.subr.mxu0 0.0
        %1322 = vmatpush1.msra.mxu0 0.0
        %1323 = vmatprep.subr.mxu0 0.0
        %1324 = vmatpush1.msra.mxu0 0.0
        %1325 = vmatprep.subr.mxu0 0.0
        %1326 = vmatpush1.msra.mxu0 0.0
        %1327 = vmatprep.subr.mxu0 0.0
        %1328 = vmatpush1.msra.mxu0 0.0
        %1329 = vmatprep.subr.mxu0 0.0
        %1330 = vmatpush1.msra.mxu0 0.0
        %1331 = vmatprep.subr.mxu0 0.0
        %1332 = vmatpush1.msra.mxu0 0.0
        %1333 = vmatprep.subr.mxu0 0.0
        %1334 = vmatpush1.msra.mxu0 0.0
        %1335 = vmatprep.subr.mxu0 0.0
        %1336 = vmatpush1.msra.mxu0 0.0
        %1337 = vmatprep.subr.mxu0 0.0
        %1338 = vmatpush1.msra.mxu0 0.0
        %1339 = vmatprep.subr.mxu0 0.0
        %1340 = vmatpush1.msra.mxu0 0.0
        %1341 = vmatprep.subr.mxu0 0.0
        %1342 = vmatpush1.msra.mxu0 0.0
        %1343 = vmatprep.subr.mxu0 0.0
        %1344 = vmatpush1.msra.mxu0 0.0
        %1345 = vmatprep.subr.mxu0 0.0
        %1346 = vmatpush1.msra.mxu0 0.0
        %1347 = vmatprep.subr.mxu0 0.0
        %1348 = vmatpush1.msra.mxu0 0.0
        %1349 = vmatprep.mubr.f32.mxu0 0.0
        %1350 = vmatmul.mubr.f32.gmra.mrb[0].mxu0 %v1262
        %v1351 = vpop.f32.mrb[0].mxu0
        %v1352 = vadd.f32 %v558, %v1351
        %v1353 = vpop.f32.mrb[0].mxu0
        %1354 = vmatprep.mubr.f32.mxu0 0.0
        %1355 = vmatmul.mubr.f32.gmra.mrb[0].mxu0 %v1265
        %v1356 = vpop.f32.mrb[0].mxu0
        %v1357 = vadd.f32 %v558, %v1356
        %v1358 = vpop.f32.mrb[0].mxu0
        %1359 = vmatprep.mubr.f32.mxu0 0.0
        %1360 = vmatmul.mubr.f32.gmra.mrb[0].mxu0 %v1268
        %v1361 = vpop.f32.mrb[0].mxu0
        %v1362 = vadd.f32 %v558, %v1361
        %v1363 = vpop.f32.mrb[0].mxu0
        %1364 = vmatprep.mubr.f32.mxu0 0.0
        %1365 = vmatmul.mubr.f32.gmra.mrb[0].mxu0 %v1271
        %v1366 = vpop.f32.mrb[0].mxu0
        %v1367 = vadd.f32 %v558, %v1366
        %v1368 = vpop.f32.mrb[0].mxu0
        %1369 = vmatprep.mubr.f32.mxu0 0.0
        %1370 = vmatmul.mubr.f32.gmra.mrb[0].mxu0 %v1274
        %v1371 = vpop.f32.mrb[0].mxu0
        %v1372 = vadd.f32 %v558, %v1371
        %v1373 = vpop.f32.mrb[0].mxu0
        %1374 = vmatprep.mubr.f32.mxu0 0.0
        %1375 = vmatmul.mubr.f32.gmra.mrb[0].mxu0 %v1277
        %v1376 = vpop.f32.mrb[0].mxu0
        %v1377 = vadd.f32 %v558, %v1376
        %v1378 = vpop.f32.mrb[0].mxu0
        %1379 = vmatprep.mubr.f32.mxu0 0.0
        %1380 = vmatmul.mubr.f32.gmra.mrb[0].mxu0 %v1280
        %v1381 = vpop.f32.mrb[0].mxu0
        %v1382 = vadd.f32 %v558, %v1381
        %v1383 = vpop.f32.mrb[0].mxu0
        %1384 = vmatprep.mubr.f32.mxu0 0.0
        %1385 = vmatmul.mubr.f32.gmra.mrb[0].mxu0 %v1283
        %v1386 = vpop.f32.mrb[0].mxu0
        %v1387 = vadd.f32 %v558, %v1386
        %v1388 = vpop.f32.mrb[0].mxu0
        %1389 = vdwg.mxu0
        %vm1390 = vcmp.gt.f32.partialorder %v1352, 0.0
        %vm1391 = vcmp.gt.f32.partialorder %v1357, 0.0
        %vm1392 = vcmp.gt.f32.partialorder %v1362, 0.0
        %vm1393 = vcmp.gt.f32.partialorder %v1367, 0.0
        %vm1394 = vcmp.gt.f32.partialorder %v1372, 0.0
        %vm1395 = vcmp.gt.f32.partialorder %v1377, 0.0
        %vm1396 = vcmp.gt.f32.partialorder %v1382, 0.0
        %vm1397 = vcmp.gt.f32.partialorder %v1387, 0.0
        %v1398 = vmul.f32 %v1352, 0.01
        %v1399 = vmul.f32 %v1357, 0.01
        %v1400 = vmul.f32 %v1362, 0.01
        %v1401 = vmul.f32 %v1367, 0.01
        %v1402 = vmul.f32 %v1372, 0.01
        %v1403 = vmul.f32 %v1377, 0.01
        %v1404 = vmul.f32 %v1382, 0.01
        %v1405 = vmul.f32 %v1387, 0.01
        %v1406 = vsel %vm1390, %v1352, %v1398
        %v1407 = vsel %vm1391, %v1357, %v1399
        %v1408 = vsel %vm1392, %v1362, %v1400
        %v1409 = vsel %vm1393, %v1367, %v1401
        %v1410 = vsel %vm1394, %v1372, %v1402
        %v1411 = vsel %vm1395, %v1377, %v1403
        %v1412 = vsel %vm1396, %v1382, %v1404
        %v1413 = vsel %vm1397, %v1387, %v1405
        %v1414 = vsel %vm560, %v1406, 0.0
        %v1415 = vsel %vm560, %v1407, 0.0
        %v1416 = vadd.f32 %v1414, %v1415
        %v1417 = vsel %vm560, %v1408, 0.0
        %v1418 = vadd.f32 %v1416, %v1417
        %v1419 = vsel %vm560, %v1409, 0.0
        %v1420 = vadd.f32 %v1418, %v1419
        %v1421 = vsel %vm560, %v1410, 0.0
        %v1422 = vadd.f32 %v1420, %v1421
        %v1423 = vsel %vm560, %v1411, 0.0
        %v1424 = vadd.f32 %v1422, %v1423
        %v1425 = vsel %vm560, %v1412, 0.0
        %v1426 = vadd.f32 %v1424, %v1425
        %v1427 = vsel %vm560, %v1413, 0.0
        %v1428 = vadd.f32 %v1426, %v1427
        %v1429 = vrot.slane %v1428, 4
        %v1430 = vadd.f32 %v1428, %v1429
        %v1431 = vrot.slane %v1430, 2
        %v1432 = vadd.f32 %v1430, %v1431
        %v1433 = vrot.slane %v1432, 1
        %v1434 = vadd.f32 %v1432, %v1433
        %v1436 = vsel %vm560, %v1406, 0
        %v1439 = vsel %vm560, %v1407, 0
        %v1442 = vsel %vm560, %v1408, 0
        %v1445 = vsel %vm560, %v1409, 0
        %v1448 = vsel %vm560, %v1410, 0
        %v1451 = vsel %vm560, %v1411, 0
        %v1454 = vsel %vm560, %v1412, 0
        %v1457 = vsel %vm560, %v1413, 0
        %1459 = vmatprep.subr.mxu0 0.0
        %1460 = vmatpush1.msra.mxu0 %v545
        %1461 = vmatprep.subr.mxu0 0.0
        %1462 = vmatpush1.msra.mxu0 %v546
        %1463 = vmatprep.subr.mxu0 0.0
        %1464 = vmatpush1.msra.mxu0 %v547
        %1465 = vmatprep.subr.mxu0 0.0
        %1466 = vmatpush1.msra.mxu0 %v548
        %1467 = vmatprep.subr.mxu0 0.0
        %1468 = vmatpush1.msra.mxu0 %v549
        %1469 = vmatprep.subr.mxu0 0.0
        %1470 = vmatpush1.msra.mxu0 %v550
        %1471 = vmatprep.subr.mxu0 0.0
        %1472 = vmatpush1.msra.mxu0 %v551
        %1473 = vmatprep.subr.mxu0 0.0
        %1474 = vmatpush1.msra.mxu0 %v587
        %1475 = vmatprep.subr.mxu0 0.0
        %1476 = vmatpush1.msra.mxu0 0.0
        %1477 = vmatprep.subr.mxu0 0.0
        %1478 = vmatpush1.msra.mxu0 0.0
        %1479 = vmatprep.subr.mxu0 0.0
        %1480 = vmatpush1.msra.mxu0 0.0
        %1481 = vmatprep.subr.mxu0 0.0
        %1482 = vmatpush1.msra.mxu0 0.0
        %1483 = vmatprep.subr.mxu0 0.0
        %1484 = vmatpush1.msra.mxu0 0.0
        %1485 = vmatprep.subr.mxu0 0.0
        %1486 = vmatpush1.msra.mxu0 0.0
        %1487 = vmatprep.subr.mxu0 0.0
        %1488 = vmatpush1.msra.mxu0 0.0
        %1489 = vmatprep.subr.mxu0 0.0
        %1490 = vmatpush1.msra.mxu0 0.0
        %1491 = vmatprep.subr.mxu0 0.0
        %1492 = vmatpush1.msra.mxu0 0.0
        %1493 = vmatprep.subr.mxu0 0.0
        %1494 = vmatpush1.msra.mxu0 0.0
        %1495 = vmatprep.subr.mxu0 0.0
        %1496 = vmatpush1.msra.mxu0 0.0
        %1497 = vmatprep.subr.mxu0 0.0
        %1498 = vmatpush1.msra.mxu0 0.0
        %1499 = vmatprep.subr.mxu0 0.0
        %1500 = vmatpush1.msra.mxu0 0.0
        %1501 = vmatprep.subr.mxu0 0.0
        %1502 = vmatpush1.msra.mxu0 0.0
        %1503 = vmatprep.subr.mxu0 0.0
        %1504 = vmatpush1.msra.mxu0 0.0
        %1505 = vmatprep.subr.mxu0 0.0
        %1506 = vmatpush1.msra.mxu0 0.0
        %1507 = vmatprep.subr.mxu0 0.0
        %1508 = vmatpush1.msra.mxu0 0.0
        %1509 = vmatprep.subr.mxu0 0.0
        %1510 = vmatpush1.msra.mxu0 0.0
        %1511 = vmatprep.subr.mxu0 0.0
        %1512 = vmatpush1.msra.mxu0 0.0
        %1513 = vmatprep.subr.mxu0 0.0
        %1514 = vmatpush1.msra.mxu0 0.0
        %1515 = vmatprep.subr.mxu0 0.0
        %1516 = vmatpush1.msra.mxu0 0.0
        %1517 = vmatprep.subr.mxu0 0.0
        %1518 = vmatpush1.msra.mxu0 0.0
        %1519 = vmatprep.subr.mxu0 0.0
        %1520 = vmatpush1.msra.mxu0 0.0
        %1521 = vmatprep.subr.mxu0 0.0
        %1522 = vmatpush1.msra.mxu0 0.0
        %1523 = vmatprep.mubr.f32.mxu0 0.0
        %1524 = vmatmul.mubr.f32.gmra.mrb[0].mxu0 %v1436
        %v1525 = vpop.f32.mrb[0].mxu0
        %v1526 = vadd.f32 %v558, %v1525
        %v1527 = vpop.f32.mrb[0].mxu0
        %1528 = vmatprep.mubr.f32.mxu0 0.0
        %1529 = vmatmul.mubr.f32.gmra.mrb[0].mxu0 %v1439
        %v1530 = vpop.f32.mrb[0].mxu0
        %v1531 = vadd.f32 %v558, %v1530
        %v1532 = vpop.f32.mrb[0].mxu0
        %1533 = vmatprep.mubr.f32.mxu0 0.0
        %1534 = vmatmul.mubr.f32.gmra.mrb[0].mxu0 %v1442
        %v1535 = vpop.f32.mrb[0].mxu0
        %v1536 = vadd.f32 %v558, %v1535
        %v1537 = vpop.f32.mrb[0].mxu0
        %1538 = vmatprep.mubr.f32.mxu0 0.0
        %1539 = vmatmul.mubr.f32.gmra.mrb[0].mxu0 %v1445
        %v1540 = vpop.f32.mrb[0].mxu0
        %v1541 = vadd.f32 %v558, %v1540
        %v1542 = vpop.f32.mrb[0].mxu0
        %1543 = vmatprep.mubr.f32.mxu0 0.0
        %1544 = vmatmul.mubr.f32.gmra.mrb[0].mxu0 %v1448
        %v1545 = vpop.f32.mrb[0].mxu0
        %v1546 = vadd.f32 %v558, %v1545
        %v1547 = vpop.f32.mrb[0].mxu0
        %1548 = vmatprep.mubr.f32.mxu0 0.0
        %1549 = vmatmul.mubr.f32.gmra.mrb[0].mxu0 %v1451
        %v1550 = vpop.f32.mrb[0].mxu0
        %v1551 = vadd.f32 %v558, %v1550
        %v1552 = vpop.f32.mrb[0].mxu0
        %1553 = vmatprep.mubr.f32.mxu0 0.0
        %1554 = vmatmul.mubr.f32.gmra.mrb[0].mxu0 %v1454
        %v1555 = vpop.f32.mrb[0].mxu0
        %v1556 = vadd.f32 %v558, %v1555
        %v1557 = vpop.f32.mrb[0].mxu0
        %1558 = vmatprep.mubr.f32.mxu0 0.0
        %1559 = vmatmul.mubr.f32.gmra.mrb[0].mxu0 %v1457
        %v1560 = vpop.f32.mrb[0].mxu0
        %v1561 = vadd.f32 %v558, %v1560
        %v1562 = vpop.f32.mrb[0].mxu0
        %1563 = vdwg.mxu0
        %vm1564 = vcmp.gt.f32.partialorder %v1526, 0.0
        %vm1565 = vcmp.gt.f32.partialorder %v1531, 0.0
        %vm1566 = vcmp.gt.f32.partialorder %v1536, 0.0
        %vm1567 = vcmp.gt.f32.partialorder %v1541, 0.0
        %vm1568 = vcmp.gt.f32.partialorder %v1546, 0.0
        %vm1569 = vcmp.gt.f32.partialorder %v1551, 0.0
        %vm1570 = vcmp.gt.f32.partialorder %v1556, 0.0
        %vm1571 = vcmp.gt.f32.partialorder %v1561, 0.0
        %v1572 = vmul.f32 %v1526, 0.01
        %v1573 = vmul.f32 %v1531, 0.01
        %v1574 = vmul.f32 %v1536, 0.01
        %v1575 = vmul.f32 %v1541, 0.01
        %v1576 = vmul.f32 %v1546, 0.01
        %v1577 = vmul.f32 %v1551, 0.01
        %v1578 = vmul.f32 %v1556, 0.01
        %v1579 = vmul.f32 %v1561, 0.01
        %v1580 = vsel %vm1564, %v1526, %v1572
        %v1581 = vsel %vm1565, %v1531, %v1573
        %v1582 = vsel %vm1566, %v1536, %v1574
        %v1583 = vsel %vm1567, %v1541, %v1575
        %v1584 = vsel %vm1568, %v1546, %v1576
        %v1585 = vsel %vm1569, %v1551, %v1577
        %v1586 = vsel %vm1570, %v1556, %v1578
        %v1587 = vsel %vm1571, %v1561, %v1579
        %v1588 = vsel %vm560, %v1580, 0.0
        %v1589 = vsel %vm560, %v1581, 0.0
        %v1590 = vadd.f32 %v1588, %v1589
        %v1591 = vsel %vm560, %v1582, 0.0
        %v1592 = vadd.f32 %v1590, %v1591
        %v1593 = vsel %vm560, %v1583, 0.0
        %v1594 = vadd.f32 %v1592, %v1593
        %v1595 = vsel %vm560, %v1584, 0.0
        %v1596 = vadd.f32 %v1594, %v1595
        %v1597 = vsel %vm560, %v1585, 0.0
        %v1598 = vadd.f32 %v1596, %v1597
        %v1599 = vsel %vm560, %v1586, 0.0
        %v1600 = vadd.f32 %v1598, %v1599
        %v1601 = vsel %vm560, %v1587, 0.0
        %v1602 = vadd.f32 %v1600, %v1601
        %v1603 = vrot.slane %v1602, 4
        %v1604 = vadd.f32 %v1602, %v1603
        %v1605 = vrot.slane %v1604, 2
        %v1606 = vadd.f32 %v1604, %v1605
        %v1607 = vrot.slane %v1606, 1
        %v1608 = vadd.f32 %v1606, %v1607
        %v1610 = vsel %vm560, %v1580, 0
        %v1613 = vsel %vm560, %v1581, 0
        %v1616 = vsel %vm560, %v1582, 0
        %v1619 = vsel %vm560, %v1583, 0
        %v1622 = vsel %vm560, %v1584, 0
        %v1625 = vsel %vm560, %v1585, 0
        %v1628 = vsel %vm560, %v1586, 0
        %v1631 = vsel %vm560, %v1587, 0
        %1633 = vmatprep.subr.mxu0 0.0
        %1634 = vmatpush1.msra.mxu0 %v545
        %1635 = vmatprep.subr.mxu0 0.0
        %1636 = vmatpush1.msra.mxu0 %v546
        %1637 = vmatprep.subr.mxu0 0.0
        %1638 = vmatpush1.msra.mxu0 %v547
        %1639 = vmatprep.subr.mxu0 0.0
        %1640 = vmatpush1.msra.mxu0 %v548
        %1641 = vmatprep.subr.mxu0 0.0
        %1642 = vmatpush1.msra.mxu0 %v549
        %1643 = vmatprep.subr.mxu0 0.0
        %1644 = vmatpush1.msra.mxu0 %v550
        %1645 = vmatprep.subr.mxu0 0.0
        %1646 = vmatpush1.msra.mxu0 %v551
        %1647 = vmatprep.subr.mxu0 0.0
        %1648 = vmatpush1.msra.mxu0 %v587
        %1649 = vmatprep.subr.mxu0 0.0
        %1650 = vmatpush1.msra.mxu0 0.0
        %1651 = vmatprep.subr.mxu0 0.0
        %1652 = vmatpush1.msra.mxu0 0.0
        %1653 = vmatprep.subr.mxu0 0.0
        %1654 = vmatpush1.msra.mxu0 0.0
        %1655 = vmatprep.subr.mxu0 0.0
        %1656 = vmatpush1.msra.mxu0 0.0
        %1657 = vmatprep.subr.mxu0 0.0
        %1658 = vmatpush1.msra.mxu0 0.0
        %1659 = vmatprep.subr.mxu0 0.0
        %1660 = vmatpush1.msra.mxu0 0.0
        %1661 = vmatprep.subr.mxu0 0.0
        %1662 = vmatpush1.msra.mxu0 0.0
        %1663 = vmatprep.subr.mxu0 0.0
        %1664 = vmatpush1.msra.mxu0 0.0
        %1665 = vmatprep.subr.mxu0 0.0
        %1666 = vmatpush1.msra.mxu0 0.0
        %1667 = vmatprep.subr.mxu0 0.0
        %1668 = vmatpush1.msra.mxu0 0.0
        %1669 = vmatprep.subr.mxu0 0.0
        %1670 = vmatpush1.msra.mxu0 0.0
        %1671 = vmatprep.subr.mxu0 0.0
        %1672 = vmatpush1.msra.mxu0 0.0
        %1673 = vmatprep.subr.mxu0 0.0
        %1674 = vmatpush1.msra.mxu0 0.0
        %1675 = vmatprep.subr.mxu0 0.0
        %1676 = vmatpush1.msra.mxu0 0.0
        %1677 = vmatprep.subr.mxu0 0.0
        %1678 = vmatpush1.msra.mxu0 0.0
        %1679 = vmatprep.subr.mxu0 0.0
        %1680 = vmatpush1.msra.mxu0 0.0
        %1681 = vmatprep.subr.mxu0 0.0
        %1682 = vmatpush1.msra.mxu0 0.0
        %1683 = vmatprep.subr.mxu0 0.0
        %1684 = vmatpush1.msra.mxu0 0.0
        %1685 = vmatprep.subr.mxu0 0.0
        %1686 = vmatpush1.msra.mxu0 0.0
        %1687 = vmatprep.subr.mxu0 0.0
        %1688 = vmatpush1.msra.mxu0 0.0
        %1689 = vmatprep.subr.mxu0 0.0
        %1690 = vmatpush1.msra.mxu0 0.0
        %1691 = vmatprep.subr.mxu0 0.0
        %1692 = vmatpush1.msra.mxu0 0.0
        %1693 = vmatprep.subr.mxu0 0.0
        %1694 = vmatpush1.msra.mxu0 0.0
        %1695 = vmatprep.subr.mxu0 0.0
        %1696 = vmatpush1.msra.mxu0 0.0
        %1697 = vmatprep.mubr.f32.mxu0 0.0
        %1698 = vmatmul.mubr.f32.gmra.mrb[0].mxu0 %v1610
        %v1699 = vpop.f32.mrb[0].mxu0
        %v1700 = vadd.f32 %v558, %v1699
        %v1701 = vpop.f32.mrb[0].mxu0
        %1702 = vmatprep.mubr.f32.mxu0 0.0
        %1703 = vmatmul.mubr.f32.gmra.mrb[0].mxu0 %v1613
        %v1704 = vpop.f32.mrb[0].mxu0
        %v1705 = vadd.f32 %v558, %v1704
        %v1706 = vpop.f32.mrb[0].mxu0
        %1707 = vmatprep.mubr.f32.mxu0 0.0
        %1708 = vmatmul.mubr.f32.gmra.mrb[0].mxu0 %v1616
        %v1709 = vpop.f32.mrb[0].mxu0
        %v1710 = vadd.f32 %v558, %v1709
        %v1711 = vpop.f32.mrb[0].mxu0
        %1712 = vmatprep.mubr.f32.mxu0 0.0
        %1713 = vmatmul.mubr.f32.gmra.mrb[0].mxu0 %v1619
        %v1714 = vpop.f32.mrb[0].mxu0
        %v1715 = vadd.f32 %v558, %v1714
        %v1716 = vpop.f32.mrb[0].mxu0
        %1717 = vmatprep.mubr.f32.mxu0 0.0
        %1718 = vmatmul.mubr.f32.gmra.mrb[0].mxu0 %v1622
        %v1719 = vpop.f32.mrb[0].mxu0
        %v1720 = vadd.f32 %v558, %v1719
        %v1721 = vpop.f32.mrb[0].mxu0
        %1722 = vmatprep.mubr.f32.mxu0 0.0
        %1723 = vmatmul.mubr.f32.gmra.mrb[0].mxu0 %v1625
        %v1724 = vpop.f32.mrb[0].mxu0
        %v1725 = vadd.f32 %v558, %v1724
        %v1726 = vpop.f32.mrb[0].mxu0
        %1727 = vmatprep.mubr.f32.mxu0 0.0
        %1728 = vmatmul.mubr.f32.gmra.mrb[0].mxu0 %v1628
        %v1729 = vpop.f32.mrb[0].mxu0
        %v1730 = vadd.f32 %v558, %v1729
        %v1731 = vpop.f32.mrb[0].mxu0
        %1732 = vmatprep.mubr.f32.mxu0 0.0
        %1733 = vmatmul.mubr.f32.gmra.mrb[0].mxu0 %v1631
        %v1734 = vpop.f32.mrb[0].mxu0
        %v1735 = vadd.f32 %v558, %v1734
        %v1736 = vpop.f32.mrb[0].mxu0
        %1737 = vdwg.mxu0
        %vm1738 = vcmp.gt.f32.partialorder %v1700, 0.0
        %vm1739 = vcmp.gt.f32.partialorder %v1705, 0.0
        %vm1740 = vcmp.gt.f32.partialorder %v1710, 0.0
        %vm1741 = vcmp.gt.f32.partialorder %v1715, 0.0
        %vm1742 = vcmp.gt.f32.partialorder %v1720, 0.0
        %vm1743 = vcmp.gt.f32.partialorder %v1725, 0.0
        %vm1744 = vcmp.gt.f32.partialorder %v1730, 0.0
        %vm1745 = vcmp.gt.f32.partialorder %v1735, 0.0
        %v1746 = vmul.f32 %v1700, 0.01
        %v1747 = vmul.f32 %v1705, 0.01
        %v1748 = vmul.f32 %v1710, 0.01
        %v1749 = vmul.f32 %v1715, 0.01
        %v1750 = vmul.f32 %v1720, 0.01
        %v1751 = vmul.f32 %v1725, 0.01
        %v1752 = vmul.f32 %v1730, 0.01
        %v1753 = vmul.f32 %v1735, 0.01
        %v1754 = vsel %vm1738, %v1700, %v1746
        %v1755 = vsel %vm1739, %v1705, %v1747
        %v1756 = vsel %vm1740, %v1710, %v1748
        %v1757 = vsel %vm1741, %v1715, %v1749
        %v1758 = vsel %vm1742, %v1720, %v1750
        %v1759 = vsel %vm1743, %v1725, %v1751
        %v1760 = vsel %vm1744, %v1730, %v1752
        %v1761 = vsel %vm1745, %v1735, %v1753
        %v1762 = vsel %vm560, %v1754, 0.0
        %v1763 = vsel %vm560, %v1755, 0.0
        %v1764 = vadd.f32 %v1762, %v1763
        %v1765 = vsel %vm560, %v1756, 0.0
        %v1766 = vadd.f32 %v1764, %v1765
        %v1767 = vsel %vm560, %v1757, 0.0
        %v1768 = vadd.f32 %v1766, %v1767
        %v1769 = vsel %vm560, %v1758, 0.0
        %v1770 = vadd.f32 %v1768, %v1769
        %v1771 = vsel %vm560, %v1759, 0.0
        %v1772 = vadd.f32 %v1770, %v1771
        %v1773 = vsel %vm560, %v1760, 0.0
        %v1774 = vadd.f32 %v1772, %v1773
        %v1775 = vsel %vm560, %v1761, 0.0
        %v1776 = vadd.f32 %v1774, %v1775
        %v1777 = vrot.slane %v1776, 4
        %v1778 = vadd.f32 %v1776, %v1777
        %v1779 = vrot.slane %v1778, 2
        %v1780 = vadd.f32 %v1778, %v1779
        %v1781 = vrot.slane %v1780, 1
        %v1782 = vadd.f32 %v1780, %v1781
        %v1784 = vsel %vm560, %v1754, 0
        %v1787 = vsel %vm560, %v1755, 0
        %v1790 = vsel %vm560, %v1756, 0
        %v1793 = vsel %vm560, %v1757, 0
        %v1796 = vsel %vm560, %v1758, 0
        %v1799 = vsel %vm560, %v1759, 0
        %v1802 = vsel %vm560, %v1760, 0
        %v1805 = vsel %vm560, %v1761, 0
        %1807 = vmatprep.subr.mxu0 0.0
        %1808 = vmatpush1.msra.mxu0 %v545
        %1809 = vmatprep.subr.mxu0 0.0
        %1810 = vmatpush1.msra.mxu0 %v546
        %1811 = vmatprep.subr.mxu0 0.0
        %1812 = vmatpush1.msra.mxu0 %v547
        %1813 = vmatprep.subr.mxu0 0.0
        %1814 = vmatpush1.msra.mxu0 %v548
        %1815 = vmatprep.subr.mxu0 0.0
        %1816 = vmatpush1.msra.mxu0 %v549
        %1817 = vmatprep.subr.mxu0 0.0
        %1818 = vmatpush1.msra.mxu0 %v550
        %1819 = vmatprep.subr.mxu0 0.0
        %1820 = vmatpush1.msra.mxu0 %v551
        %1821 = vmatprep.subr.mxu0 0.0
        %1822 = vmatpush1.msra.mxu0 %v587
        %1823 = vmatprep.subr.mxu0 0.0
        %1824 = vmatpush1.msra.mxu0 0.0
        %1825 = vmatprep.subr.mxu0 0.0
        %1826 = vmatpush1.msra.mxu0 0.0
        %1827 = vmatprep.subr.mxu0 0.0
        %1828 = vmatpush1.msra.mxu0 0.0
        %1829 = vmatprep.subr.mxu0 0.0
        %1830 = vmatpush1.msra.mxu0 0.0
        %1831 = vmatprep.subr.mxu0 0.0
        %1832 = vmatpush1.msra.mxu0 0.0
        %1833 = vmatprep.subr.mxu0 0.0
        %1834 = vmatpush1.msra.mxu0 0.0
        %1835 = vmatprep.subr.mxu0 0.0
        %1836 = vmatpush1.msra.mxu0 0.0
        %1837 = vmatprep.subr.mxu0 0.0
        %1838 = vmatpush1.msra.mxu0 0.0
        %1839 = vmatprep.subr.mxu0 0.0
        %1840 = vmatpush1.msra.mxu0 0.0
        %1841 = vmatprep.subr.mxu0 0.0
        %1842 = vmatpush1.msra.mxu0 0.0
        %1843 = vmatprep.subr.mxu0 0.0
        %1844 = vmatpush1.msra.mxu0 0.0
        %1845 = vmatprep.subr.mxu0 0.0
        %1846 = vmatpush1.msra.mxu0 0.0
        %1847 = vmatprep.subr.mxu0 0.0
        %1848 = vmatpush1.msra.mxu0 0.0
        %1849 = vmatprep.subr.mxu0 0.0
        %1850 = vmatpush1.msra.mxu0 0.0
        %1851 = vmatprep.subr.mxu0 0.0
        %1852 = vmatpush1.msra.mxu0 0.0
        %1853 = vmatprep.subr.mxu0 0.0
        %1854 = vmatpush1.msra.mxu0 0.0
        %1855 = vmatprep.subr.mxu0 0.0
        %1856 = vmatpush1.msra.mxu0 0.0
        %1857 = vmatprep.subr.mxu0 0.0
        %1858 = vmatpush1.msra.mxu0 0.0
        %1859 = vmatprep.subr.mxu0 0.0
        %1860 = vmatpush1.msra.mxu0 0.0
        %1861 = vmatprep.subr.mxu0 0.0
        %1862 = vmatpush1.msra.mxu0 0.0
        %1863 = vmatprep.subr.mxu0 0.0
        %1864 = vmatpush1.msra.mxu0 0.0
        %1865 = vmatprep.subr.mxu0 0.0
        %1866 = vmatpush1.msra.mxu0 0.0
        %1867 = vmatprep.subr.mxu0 0.0
        %1868 = vmatpush1.msra.mxu0 0.0
        %1869 = vmatprep.subr.mxu0 0.0
        %1870 = vmatpush1.msra.mxu0 0.0
        %1871 = vmatprep.mubr.f32.mxu0 0.0
        %1872 = vmatmul.mubr.f32.gmra.mrb[0].mxu0 %v1784
        %v1873 = vpop.f32.mrb[0].mxu0
        %v1874 = vadd.f32 %v558, %v1873
        %v1875 = vpop.f32.mrb[0].mxu0
        %1876 = vmatprep.mubr.f32.mxu0 0.0
        %1877 = vmatmul.mubr.f32.gmra.mrb[0].mxu0 %v1787
        %v1878 = vpop.f32.mrb[0].mxu0
        %v1879 = vadd.f32 %v558, %v1878
        %v1880 = vpop.f32.mrb[0].mxu0
        %1881 = vmatprep.mubr.f32.mxu0 0.0
        %1882 = vmatmul.mubr.f32.gmra.mrb[0].mxu0 %v1790
        %v1883 = vpop.f32.mrb[0].mxu0
        %v1884 = vadd.f32 %v558, %v1883
        %v1885 = vpop.f32.mrb[0].mxu0
        %1886 = vmatprep.mubr.f32.mxu0 0.0
        %1887 = vmatmul.mubr.f32.gmra.mrb[0].mxu0 %v1793
        %v1888 = vpop.f32.mrb[0].mxu0
        %v1889 = vadd.f32 %v558, %v1888
        %v1890 = vpop.f32.mrb[0].mxu0
        %1891 = vmatprep.mubr.f32.mxu0 0.0
        %1892 = vmatmul.mubr.f32.gmra.mrb[0].mxu0 %v1796
        %v1893 = vpop.f32.mrb[0].mxu0
        %v1894 = vadd.f32 %v558, %v1893
        %v1895 = vpop.f32.mrb[0].mxu0
        %1896 = vmatprep.mubr.f32.mxu0 0.0
        %1897 = vmatmul.mubr.f32.gmra.mrb[0].mxu0 %v1799
        %v1898 = vpop.f32.mrb[0].mxu0
        %v1899 = vadd.f32 %v558, %v1898
        %v1900 = vpop.f32.mrb[0].mxu0
        %1901 = vmatprep.mubr.f32.mxu0 0.0
        %1902 = vmatmul.mubr.f32.gmra.mrb[0].mxu0 %v1802
        %v1903 = vpop.f32.mrb[0].mxu0
        %v1904 = vadd.f32 %v558, %v1903
        %v1905 = vpop.f32.mrb[0].mxu0
        %1906 = vmatprep.mubr.f32.mxu0 0.0
        %1907 = vmatmul.mubr.f32.gmra.mrb[0].mxu0 %v1805
        %v1908 = vpop.f32.mrb[0].mxu0
        %v1909 = vadd.f32 %v558, %v1908
        %v1910 = vpop.f32.mrb[0].mxu0
        %1911 = vdwg.mxu0
        %vm1912 = vcmp.gt.f32.partialorder %v1874, 0.0
        %vm1913 = vcmp.gt.f32.partialorder %v1879, 0.0
        %vm1914 = vcmp.gt.f32.partialorder %v1884, 0.0
        %vm1915 = vcmp.gt.f32.partialorder %v1889, 0.0
        %vm1916 = vcmp.gt.f32.partialorder %v1894, 0.0
        %vm1917 = vcmp.gt.f32.partialorder %v1899, 0.0
        %vm1918 = vcmp.gt.f32.partialorder %v1904, 0.0
        %vm1919 = vcmp.gt.f32.partialorder %v1909, 0.0
        %v1920 = vmul.f32 %v1874, 0.01
        %v1921 = vmul.f32 %v1879, 0.01
        %v1922 = vmul.f32 %v1884, 0.01
        %v1923 = vmul.f32 %v1889, 0.01
        %v1924 = vmul.f32 %v1894, 0.01
        %v1925 = vmul.f32 %v1899, 0.01
        %v1926 = vmul.f32 %v1904, 0.01
        %v1927 = vmul.f32 %v1909, 0.01
        %v1928 = vsel %vm1912, %v1874, %v1920
        %v1929 = vsel %vm1913, %v1879, %v1921
        %v1930 = vsel %vm1914, %v1884, %v1922
        %v1931 = vsel %vm1915, %v1889, %v1923
        %v1932 = vsel %vm1916, %v1894, %v1924
        %v1933 = vsel %vm1917, %v1899, %v1925
        %v1934 = vsel %vm1918, %v1904, %v1926
        %v1935 = vsel %vm1919, %v1909, %v1927
        %v1936 = vsel %vm560, %v1928, 0.0
        %v1937 = vsel %vm560, %v1929, 0.0
        %v1938 = vadd.f32 %v1936, %v1937
        %v1939 = vsel %vm560, %v1930, 0.0
        %v1940 = vadd.f32 %v1938, %v1939
        %v1941 = vsel %vm560, %v1931, 0.0
        %v1942 = vadd.f32 %v1940, %v1941
        %v1943 = vsel %vm560, %v1932, 0.0
        %v1944 = vadd.f32 %v1942, %v1943
        %v1945 = vsel %vm560, %v1933, 0.0
        %v1946 = vadd.f32 %v1944, %v1945
        %v1947 = vsel %vm560, %v1934, 0.0
        %v1948 = vadd.f32 %v1946, %v1947
        %v1949 = vsel %vm560, %v1935, 0.0
        %v1950 = vadd.f32 %v1948, %v1949
        %v1951 = vrot.slane %v1950, 4
        %v1952 = vadd.f32 %v1950, %v1951
        %v1953 = vrot.slane %v1952, 2
        %v1954 = vadd.f32 %v1952, %v1953
        %v1955 = vrot.slane %v1954, 1
        %v1956 = vadd.f32 %v1954, %v1955
        %v1958 = vsel %vm560, %v1928, 0
        %v1961 = vsel %vm560, %v1929, 0
        %v1964 = vsel %vm560, %v1930, 0
        %v1967 = vsel %vm560, %v1931, 0
        %v1970 = vsel %vm560, %v1932, 0
        %v1973 = vsel %vm560, %v1933, 0
        %v1976 = vsel %vm560, %v1934, 0
        %v1979 = vsel %vm560, %v1935, 0
        %1981 = vmatprep.subr.mxu0 0.0
        %1982 = vmatpush1.msra.mxu0 %v545
        %1983 = vmatprep.subr.mxu0 0.0
        %1984 = vmatpush1.msra.mxu0 %v546
        %1985 = vmatprep.subr.mxu0 0.0
        %1986 = vmatpush1.msra.mxu0 %v547
        %1987 = vmatprep.subr.mxu0 0.0
        %1988 = vmatpush1.msra.mxu0 %v548
        %1989 = vmatprep.subr.mxu0 0.0
        %1990 = vmatpush1.msra.mxu0 %v549
        %1991 = vmatprep.subr.mxu0 0.0
        %1992 = vmatpush1.msra.mxu0 %v550
        %1993 = vmatprep.subr.mxu0 0.0
        %1994 = vmatpush1.msra.mxu0 %v551
        %1995 = vmatprep.subr.mxu0 0.0
        %1996 = vmatpush1.msra.mxu0 %v587
        %1997 = vmatprep.subr.mxu0 0.0
        %1998 = vmatpush1.msra.mxu0 0.0
        %1999 = vmatprep.subr.mxu0 0.0
        %2000 = vmatpush1.msra.mxu0 0.0
        %2001 = vmatprep.subr.mxu0 0.0
        %2002 = vmatpush1.msra.mxu0 0.0
        %2003 = vmatprep.subr.mxu0 0.0
        %2004 = vmatpush1.msra.mxu0 0.0
        %2005 = vmatprep.subr.mxu0 0.0
        %2006 = vmatpush1.msra.mxu0 0.0
        %2007 = vmatprep.subr.mxu0 0.0
        %2008 = vmatpush1.msra.mxu0 0.0
        %2009 = vmatprep.subr.mxu0 0.0
        %2010 = vmatpush1.msra.mxu0 0.0
        %2011 = vmatprep.subr.mxu0 0.0
        %2012 = vmatpush1.msra.mxu0 0.0
        %2013 = vmatprep.subr.mxu0 0.0
        %2014 = vmatpush1.msra.mxu0 0.0
        %2015 = vmatprep.subr.mxu0 0.0
        %2016 = vmatpush1.msra.mxu0 0.0
        %2017 = vmatprep.subr.mxu0 0.0
        %2018 = vmatpush1.msra.mxu0 0.0
        %2019 = vmatprep.subr.mxu0 0.0
        %2020 = vmatpush1.msra.mxu0 0.0
        %2021 = vmatprep.subr.mxu0 0.0
        %2022 = vmatpush1.msra.mxu0 0.0
        %2023 = vmatprep.subr.mxu0 0.0
        %2024 = vmatpush1.msra.mxu0 0.0
        %2025 = vmatprep.subr.mxu0 0.0
        %2026 = vmatpush1.msra.mxu0 0.0
        %2027 = vmatprep.subr.mxu0 0.0
        %2028 = vmatpush1.msra.mxu0 0.0
        %2029 = vmatprep.subr.mxu0 0.0
        %2030 = vmatpush1.msra.mxu0 0.0
        %2031 = vmatprep.subr.mxu0 0.0
        %2032 = vmatpush1.msra.mxu0 0.0
        %2033 = vmatprep.subr.mxu0 0.0
        %2034 = vmatpush1.msra.mxu0 0.0
        %2035 = vmatprep.subr.mxu0 0.0
        %2036 = vmatpush1.msra.mxu0 0.0
        %2037 = vmatprep.subr.mxu0 0.0
        %2038 = vmatpush1.msra.mxu0 0.0
        %2039 = vmatprep.subr.mxu0 0.0
        %2040 = vmatpush1.msra.mxu0 0.0
        %2041 = vmatprep.subr.mxu0 0.0
        %2042 = vmatpush1.msra.mxu0 0.0
        %2043 = vmatprep.subr.mxu0 0.0
        %2044 = vmatpush1.msra.mxu0 0.0
        %2045 = vmatprep.mubr.f32.mxu0 0.0
        %2046 = vmatmul.mubr.f32.gmra.mrb[0].mxu0 %v1958
        %v2047 = vpop.f32.mrb[0].mxu0
        %v2048 = vadd.f32 %v558, %v2047
        %v2049 = vpop.f32.mrb[0].mxu0
        %2050 = vmatprep.mubr.f32.mxu0 0.0
        %2051 = vmatmul.mubr.f32.gmra.mrb[0].mxu0 %v1961
        %v2052 = vpop.f32.mrb[0].mxu0
        %v2053 = vadd.f32 %v558, %v2052
        %v2054 = vpop.f32.mrb[0].mxu0
        %2055 = vmatprep.mubr.f32.mxu0 0.0
        %2056 = vmatmul.mubr.f32.gmra.mrb[0].mxu0 %v1964
        %v2057 = vpop.f32.mrb[0].mxu0
        %v2058 = vadd.f32 %v558, %v2057
        %v2059 = vpop.f32.mrb[0].mxu0
        %2060 = vmatprep.mubr.f32.mxu0 0.0
        %2061 = vmatmul.mubr.f32.gmra.mrb[0].mxu0 %v1967
        %v2062 = vpop.f32.mrb[0].mxu0
        %v2063 = vadd.f32 %v558, %v2062
        %v2064 = vpop.f32.mrb[0].mxu0
        %2065 = vmatprep.mubr.f32.mxu0 0.0
        %2066 = vmatmul.mubr.f32.gmra.mrb[0].mxu0 %v1970
        %v2067 = vpop.f32.mrb[0].mxu0
        %v2068 = vadd.f32 %v558, %v2067
        %v2069 = vpop.f32.mrb[0].mxu0
        %2070 = vmatprep.mubr.f32.mxu0 0.0
        %2071 = vmatmul.mubr.f32.gmra.mrb[0].mxu0 %v1973
        %v2072 = vpop.f32.mrb[0].mxu0
        %v2073 = vadd.f32 %v558, %v2072
        %v2074 = vpop.f32.mrb[0].mxu0
        %2075 = vmatprep.mubr.f32.mxu0 0.0
        %2076 = vmatmul.mubr.f32.gmra.mrb[0].mxu0 %v1976
        %v2077 = vpop.f32.mrb[0].mxu0
        %v2078 = vadd.f32 %v558, %v2077
        %v2079 = vpop.f32.mrb[0].mxu0
        %2080 = vmatprep.mubr.f32.mxu0 0.0
        %2081 = vmatmul.mubr.f32.gmra.mrb[0].mxu0 %v1979
        %v2082 = vpop.f32.mrb[0].mxu0
        %v2083 = vadd.f32 %v558, %v2082
        %v2084 = vpop.f32.mrb[0].mxu0
        %2085 = vdwg.mxu0
        %vm2086 = vcmp.gt.f32.partialorder %v2048, 0.0
        %vm2087 = vcmp.gt.f32.partialorder %v2053, 0.0
        %vm2088 = vcmp.gt.f32.partialorder %v2058, 0.0
        %vm2089 = vcmp.gt.f32.partialorder %v2063, 0.0
        %vm2090 = vcmp.gt.f32.partialorder %v2068, 0.0
        %vm2091 = vcmp.gt.f32.partialorder %v2073, 0.0
        %vm2092 = vcmp.gt.f32.partialorder %v2078, 0.0
        %vm2093 = vcmp.gt.f32.partialorder %v2083, 0.0
        %v2094 = vmul.f32 %v2048, 0.01
        %v2095 = vmul.f32 %v2053, 0.01
        %v2096 = vmul.f32 %v2058, 0.01
        %v2097 = vmul.f32 %v2063, 0.01
        %v2098 = vmul.f32 %v2068, 0.01
        %v2099 = vmul.f32 %v2073, 0.01
        %v2100 = vmul.f32 %v2078, 0.01
        %v2101 = vmul.f32 %v2083, 0.01
        %v2102 = vsel %vm2086, %v2048, %v2094
        %v2103 = vsel %vm2087, %v2053, %v2095
        %v2104 = vsel %vm2088, %v2058, %v2096
        %v2105 = vsel %vm2089, %v2063, %v2097
        %v2106 = vsel %vm2090, %v2068, %v2098
        %v2107 = vsel %vm2091, %v2073, %v2099
        %v2108 = vsel %vm2092, %v2078, %v2100
        %v2109 = vsel %vm2093, %v2083, %v2101
        %v2110 = vsel %vm560, %v2102, 0.0
        %v2111 = vsel %vm560, %v2103, 0.0
        %v2112 = vadd.f32 %v2110, %v2111
        %v2113 = vsel %vm560, %v2104, 0.0
        %v2114 = vadd.f32 %v2112, %v2113
        %v2115 = vsel %vm560, %v2105, 0.0
        %v2116 = vadd.f32 %v2114, %v2115
        %v2117 = vsel %vm560, %v2106, 0.0
        %v2118 = vadd.f32 %v2116, %v2117
        %v2119 = vsel %vm560, %v2107, 0.0
        %v2120 = vadd.f32 %v2118, %v2119
        %v2121 = vsel %vm560, %v2108, 0.0
        %v2122 = vadd.f32 %v2120, %v2121
        %v2123 = vsel %vm560, %v2109, 0.0
        %v2124 = vadd.f32 %v2122, %v2123
        %v2125 = vrot.slane %v2124, 4
        %v2126 = vadd.f32 %v2124, %v2125
        %v2127 = vrot.slane %v2126, 2
        %v2128 = vadd.f32 %v2126, %v2127
        %v2129 = vrot.slane %v2128, 1
        %v2130 = vadd.f32 %v2128, %v2129
        %vm2131 = vcmask 1040384
        %v2132 = vsel %vm2131, %v738, %v912
        %vm2133 = vcmask 1041408
        %v2134 = vsel %vm2133, %v2132, %v1086
        %vm2135 = vcmask 1042432
        %v2136 = vsel %vm2135, %v2134, %v1260
        %v2137 = vsel %vm585, %v2136, %v1434
        %vm2138 = vcmask 1044480
        %v2139 = vsel %vm2138, %v2137, %v1608
        %vm2140 = vcmask 1045504
        %v2141 = vsel %vm2140, %v2139, %v1782
        %vm2142 = vcmask 1046528
        %v2143 = vsel %vm2142, %v2141, %v1956
        %p2144 = scmp.eq.s32.totalorder %s35, 0
        // Predicated region
        $region89: #{tcnn_auxcl_forward.1} parent=63 // pred_check
          %p2145 = pneg %p2144
        $region90: #{tcnn_auxcl_forward.1} parent=63 // pred_check_branch
          %2147 = sbr.rel (%p2145) target = $region92
        $region91: #{tcnn_auxcl_forward.1} parent=63 // pred_region
          %2148 = vst.msk [vmem:[%s531] sm:$0xff] %vm560, %v2143
          %vm2149 = vcmask 483328
          %2150 = vst.msk [vmem:[%s531 + $0x8] sm:$0x1] %vm2149, %v2130
        $region92: #{tcnn_auxcl_forward.1} parent=63 // pred_fallthru
          _
        %p2151 = scmp.gt.s32.totalorder %s35, 0
        // Predicated region
        $region93: #{tcnn_auxcl_forward.1} parent=63 // pred_check
          %p2152 = pneg %p2151
        $region94: #{tcnn_auxcl_forward.1} parent=63 // pred_check_branch
          %2154 = sbr.rel (%p2152) target = $region96
        $region95: #{tcnn_auxcl_forward.1} parent=63 // pred_region
          %v2155 = vld [vmem:[%s531] sm:$0xff]
          %v2156 = vld [vmem:[%s531 + $0x8] sm:$0x1]
          %v2157 = vadd.f32 %v2155, %v2143
          %v2158 = vadd.f32 %v2156, %v2130
          %2159 = vst.msk [vmem:[%s531] sm:$0xff] %vm560, %v2157
          %vm2160 = vcmask 483328
          %2161 = vst.msk [vmem:[%s531 + $0x8] sm:$0x1] %vm2160, %v2158
        $region96: #{tcnn_auxcl_forward.1} parent=63 // pred_fallthru
          _
        // Predicated region
        $region97: #{tcnn_auxcl_forward.1} parent=63 // pred_check
          %p2162 = pneg %p2144
        $region98: #{tcnn_auxcl_forward.1} parent=63 // pred_check_branch
          %2164 = sbr.rel (%p2162) target = $region100
        $region99: #{tcnn_auxcl_forward.1} parent=63 // pred_region
          %v2165 = vld [vmem:[%s531] sm:$0xff]
          %v2166 = vld [vmem:[%s531 + $0x8] sm:$0x1]
          %v2167 = vmul.f32 %v2165, 0.015625
          %v2168 = vmul.f32 %v2166, 0.015625
          %2169 = vst.msk [vmem:[%s531] sm:$0xff] %vm560, %v2167
          %vm2170 = vcmask 483328
          %2171 = vst.msk [vmem:[%s531 + $0x8] sm:$0x1] %vm2170, %v2168
          %v2172 = vld [vmem:[#allocation6] sm:$0xff]
          %v2173 = vld [vmem:[#allocation6 + $0x8] sm:$0xff]
          %v2174 = vld [vmem:[#allocation6 + $0x10] sm:$0xff]
          %v2175 = vld [vmem:[#allocation6 + $0x18] sm:$0xff]
          %v2176 = vld [vmem:[#allocation6 + $0x20] sm:$0xff]
          %v2177 = vld [vmem:[#allocation6 + $0x28] sm:$0xff]
          %v2178 = vld [vmem:[#allocation6 + $0x30] sm:$0xff]
          %v2179 = vld [vmem:[#allocation6 + $0x38] sm:$0xff]
          %v2180 = vld [vmem:[#allocation6 + $0x40] sm:$0xff]
          %v2181 = vld [vmem:[#allocation6 + $0x48] sm:$0xff]
          %v2182 = vld [vmem:[#allocation6 + $0x50] sm:$0xff]
          %v2183 = vld [vmem:[#allocation6 + $0x58] sm:$0xff]
          %v2184 = vld [vmem:[#allocation6 + $0x60] sm:$0xff]
          %v2185 = vld [vmem:[#allocation6 + $0x68] sm:$0xff]
          %v2186 = vld [vmem:[#allocation6 + $0x70] sm:$0xff]
          %v2187 = vld [vmem:[#allocation6 + $0x78] sm:$0xff]
          %v2188 = vld [vmem:[#allocation6 + $0x80] sm:$0xff]
          %v2189 = vld [vmem:[#allocation6 + $0x88] sm:$0xff]
          %v2190 = vld [vmem:[#allocation6 + $0x90] sm:$0xff]
          %v2191 = vld [vmem:[#allocation6 + $0x98] sm:$0xff]
          %v2192 = vld [vmem:[#allocation6 + $0xa0] sm:$0xff]
          %v2193 = vld [vmem:[#allocation6 + $0xa8] sm:$0xff]
          %v2194 = vld [vmem:[#allocation6 + $0xb0] sm:$0xff]
          %v2195 = vld [vmem:[#allocation6 + $0xb8] sm:$0xff]
          %v2196 = vld [vmem:[#allocation6 + $0xc0] sm:$0xff]
          %v2197 = vld [vmem:[#allocation6 + $0xc8] sm:$0xff]
          %v2198 = vld [vmem:[#allocation6 + $0xd0] sm:$0xff]
          %v2199 = vld [vmem:[#allocation6 + $0xd8] sm:$0xff]
          %v2200 = vld [vmem:[#allocation6 + $0xe0] sm:$0xf]
          %v2201 = vld [vmem:[#allocation6 + $0xe8] sm:$0xf]
          %v2202 = vld [vmem:[#allocation6 + $0xf0] sm:$0xf]
          %v2203 = vld [vmem:[#allocation6 + $0xf8] sm:$0xf]
          %v2204 = vld [vmem:[%s4] sm:$0xf]
          %v2206 = vlaneseq
          %v2207 = vshrl.u32 %v2206, 7
          %v2208 = vsub.s32 0, %v2207
          %v2209 = vrot.slane %v2204, %v2208
          %v2210 = vlaneseq
          %v2211 = vshrl.u32 %v2210, 7
          %v2212 = vsub.s32 1, %v2211
          %v2213 = vrot.slane %v2204, %v2212
          %v2214 = vlaneseq
          %v2215 = vshrl.u32 %v2214, 7
          %v2216 = vsub.s32 2, %v2215
          %v2217 = vrot.slane %v2204, %v2216
          %v2218 = vlaneseq
          %v2219 = vshrl.u32 %v2218, 7
          %v2220 = vsub.s32 3, %v2219
          %v2221 = vrot.slane %v2204, %v2220
          %v2227 = vsel %vm560, %v2167, 0
          %v2230 = vsel %vm560, %v2168, 0
          %v2233 = vsel %vm585, %v2200, 0
          %v2236 = vsel %vm585, %v2201, 0
          %v2239 = vsel %vm585, %v2202, 0
          %v2242 = vsel %vm585, %v2203, 0
          %2244 = vmatprep.subr.mxu0 %v2173
          %2245 = vmatpush1.msra.mxu0 %v2172
          %2246 = vmatprep.subr.mxu0 %v2177
          %2247 = vmatpush1.msra.mxu0 %v2176
          %2248 = vmatprep.subr.mxu0 %v2181
          %2249 = vmatpush1.msra.mxu0 %v2180
          %2250 = vmatprep.subr.mxu0 %v2185
          %2251 = vmatpush1.msra.mxu0 %v2184
          %2252 = vmatprep.subr.mxu0 %v2189
          %2253 = vmatpush1.msra.mxu0 %v2188
          %2254 = vmatprep.subr.mxu0 %v2193
          %2255 = vmatpush1.msra.mxu0 %v2192
          %2256 = vmatprep.subr.mxu0 %v2197
          %2257 = vmatpush1.msra.mxu0 %v2196
          %2258 = vmatprep.subr.mxu0 %v2236
          %2259 = vmatpush1.msra.mxu0 %v2233
          %2260 = vmatprep.subr.mxu0 0.0
          %2261 = vmatpush1.msra.mxu0 0.0
          %2262 = vmatprep.subr.mxu0 0.0
          %2263 = vmatpush1.msra.mxu0 0.0
          %2264 = vmatprep.subr.mxu0 0.0
          %2265 = vmatpush1.msra.mxu0 0.0
          %2266 = vmatprep.subr.mxu0 0.0
          %2267 = vmatpush1.msra.mxu0 0.0
          %2268 = vmatprep.subr.mxu0 0.0
          %2269 = vmatpush1.msra.mxu0 0.0
          %2270 = vmatprep.subr.mxu0 0.0
          %2271 = vmatpush1.msra.mxu0 0.0
          %2272 = vmatprep.subr.mxu0 0.0
          %2273 = vmatpush1.msra.mxu0 0.0
          %2274 = vmatprep.subr.mxu0 0.0
          %2275 = vmatpush1.msra.mxu0 0.0
          %2276 = vmatprep.subr.mxu0 0.0
          %2277 = vmatpush1.msra.mxu0 0.0
          %2278 = vmatprep.subr.mxu0 0.0
          %2279 = vmatpush1.msra.mxu0 0.0
          %2280 = vmatprep.subr.mxu0 0.0
          %2281 = vmatpush1.msra.mxu0 0.0
          %2282 = vmatprep.subr.mxu0 0.0
          %2283 = vmatpush1.msra.mxu0 0.0
          %2284 = vmatprep.subr.mxu0 0.0
          %2285 = vmatpush1.msra.mxu0 0.0
          %2286 = vmatprep.subr.mxu0 0.0
          %2287 = vmatpush1.msra.mxu0 0.0
          %2288 = vmatprep.subr.mxu0 0.0
          %2289 = vmatpush1.msra.mxu0 0.0
          %2290 = vmatprep.subr.mxu0 0.0
          %2291 = vmatpush1.msra.mxu0 0.0
          %2292 = vmatprep.subr.mxu0 0.0
          %2293 = vmatpush1.msra.mxu0 0.0
          %2294 = vmatprep.subr.mxu0 0.0
          %2295 = vmatpush1.msra.mxu0 0.0
          %2296 = vmatprep.subr.mxu0 0.0
          %2297 = vmatpush1.msra.mxu0 0.0
          %2298 = vmatprep.subr.mxu0 0.0
          %2299 = vmatpush1.msra.mxu0 0.0
          %2300 = vmatprep.subr.mxu0 0.0
          %2301 = vmatpush1.msra.mxu0 0.0
          %2302 = vmatprep.subr.mxu0 0.0
          %2303 = vmatpush1.msra.mxu0 0.0
          %2304 = vmatprep.subr.mxu0 0.0
          %2305 = vmatpush1.msra.mxu0 0.0
          %2306 = vmatprep.subr.mxu0 0.0
          %2307 = vmatpush1.msra.mxu0 0.0
          %2308 = vmatprep.mubr.f32.mxu0 0.0
          %2309 = vmatmul.mubr.f32.gmra.mrb[0].mxu0 %v2227
          %v2310 = vpop.f32.mrb[0].mxu0
          %v2311 = vadd.f32 %v2209, %v2310
          %v2312 = vpop.f32.mrb[0].mxu0
          %v2313 = vadd.f32 %v2213, %v2312
          %2314 = vmatprep.mubr.f32.mxu0 0.0
          %2315 = vmatmul.mubr.f32.gmra.mrb[0].mxu0 %v2230
          %v2316 = vpop.f32.mrb[0].mxu0
          %v2317 = vadd.f32 %v2209, %v2316
          %v2318 = vpop.f32.mrb[0].mxu0
          %v2319 = vadd.f32 %v2213, %v2318
          %2320 = vdwg.mxu0
          %2321 = vmatprep.subr.mxu0 %v2175
          %2322 = vmatpush1.msra.mxu0 %v2174
          %2323 = vmatprep.subr.mxu0 %v2179
          %2324 = vmatpush1.msra.mxu0 %v2178
          %2325 = vmatprep.subr.mxu0 %v2183
          %2326 = vmatpush1.msra.mxu0 %v2182
          %2327 = vmatprep.subr.mxu0 %v2187
          %2328 = vmatpush1.msra.mxu0 %v2186
          %2329 = vmatprep.subr.mxu0 %v2191
          %2330 = vmatpush1.msra.mxu0 %v2190
          %2331 = vmatprep.subr.mxu0 %v2195
          %2332 = vmatpush1.msra.mxu0 %v2194
          %2333 = vmatprep.subr.mxu0 %v2199
          %2334 = vmatpush1.msra.mxu0 %v2198
          %2335 = vmatprep.subr.mxu0 %v2242
          %2336 = vmatpush1.msra.mxu0 %v2239
          %2337 = vmatprep.subr.mxu0 0.0
          %2338 = vmatpush1.msra.mxu0 0.0
          %2339 = vmatprep.subr.mxu0 0.0
          %2340 = vmatpush1.msra.mxu0 0.0
          %2341 = vmatprep.subr.mxu0 0.0
          %2342 = vmatpush1.msra.mxu0 0.0
          %2343 = vmatprep.subr.mxu0 0.0
          %2344 = vmatpush1.msra.mxu0 0.0
          %2345 = vmatprep.subr.mxu0 0.0
          %2346 = vmatpush1.msra.mxu0 0.0
          %2347 = vmatprep.subr.mxu0 0.0
          %2348 = vmatpush1.msra.mxu0 0.0
          %2349 = vmatprep.subr.mxu0 0.0
          %2350 = vmatpush1.msra.mxu0 0.0
          %2351 = vmatprep.subr.mxu0 0.0
          %2352 = vmatpush1.msra.mxu0 0.0
          %2353 = vmatprep.subr.mxu0 0.0
          %2354 = vmatpush1.msra.mxu0 0.0
          %2355 = vmatprep.subr.mxu0 0.0
          %2356 = vmatpush1.msra.mxu0 0.0
          %2357 = vmatprep.subr.mxu0 0.0
          %2358 = vmatpush1.msra.mxu0 0.0
          %2359 = vmatprep.subr.mxu0 0.0
          %2360 = vmatpush1.msra.mxu0 0.0
          %2361 = vmatprep.subr.mxu0 0.0
          %2362 = vmatpush1.msra.mxu0 0.0
          %2363 = vmatprep.subr.mxu0 0.0
          %2364 = vmatpush1.msra.mxu0 0.0
          %2365 = vmatprep.subr.mxu0 0.0
          %2366 = vmatpush1.msra.mxu0 0.0
          %2367 = vmatprep.subr.mxu0 0.0
          %2368 = vmatpush1.msra.mxu0 0.0
          %2369 = vmatprep.subr.mxu0 0.0
          %2370 = vmatpush1.msra.mxu0 0.0
          %2371 = vmatprep.subr.mxu0 0.0
          %2372 = vmatpush1.msra.mxu0 0.0
          %2373 = vmatprep.subr.mxu0 0.0
          %2374 = vmatpush1.msra.mxu0 0.0
          %2375 = vmatprep.subr.mxu0 0.0
          %2376 = vmatpush1.msra.mxu0 0.0
          %2377 = vmatprep.subr.mxu0 0.0
          %2378 = vmatpush1.msra.mxu0 0.0
          %2379 = vmatprep.subr.mxu0 0.0
          %2380 = vmatpush1.msra.mxu0 0.0
          %2381 = vmatprep.subr.mxu0 0.0
          %2382 = vmatpush1.msra.mxu0 0.0
          %2383 = vmatprep.subr.mxu0 0.0
          %2384 = vmatpush1.msra.mxu0 0.0
          %2385 = vmatprep.mubr.f32.mxu0 0.0
          %2386 = vmatmul.mubr.f32.gmra.mrb[0].mxu0 %v2227
          %v2387 = vpop.f32.mrb[0].mxu0
          %v2388 = vadd.f32 %v2217, %v2387
          %v2389 = vpop.f32.mrb[0].mxu0
          %v2390 = vadd.f32 %v2221, %v2389
          %2391 = vmatprep.mubr.f32.mxu0 0.0
          %2392 = vmatmul.mubr.f32.gmra.mrb[0].mxu0 %v2230
          %v2393 = vpop.f32.mrb[0].mxu0
          %v2394 = vadd.f32 %v2217, %v2393
          %v2395 = vpop.f32.mrb[0].mxu0
          %v2396 = vadd.f32 %v2221, %v2395
          %2397 = vdwg.mxu0
          %vm2398 = vcmp.gt.f32.partialorder %v2311, 0.0
          %vm2399 = vcmp.gt.f32.partialorder %v2313, 0.0
          %vm2400 = vcmp.gt.f32.partialorder %v2388, 0.0
          %vm2401 = vcmp.gt.f32.partialorder %v2390, 0.0
          %vm2402 = vcmp.gt.f32.partialorder %v2317, 0.0
          %vm2403 = vcmp.gt.f32.partialorder %v2319, 0.0
          %vm2404 = vcmp.gt.f32.partialorder %v2394, 0.0
          %vm2405 = vcmp.gt.f32.partialorder %v2396, 0.0
          %v2406 = vmul.f32 %v2311, 0.01
          %v2407 = vmul.f32 %v2313, 0.01
          %v2408 = vmul.f32 %v2388, 0.01
          %v2409 = vmul.f32 %v2390, 0.01
          %v2410 = vmul.f32 %v2317, 0.01
          %v2411 = vmul.f32 %v2319, 0.01
          %v2412 = vmul.f32 %v2394, 0.01
          %v2413 = vmul.f32 %v2396, 0.01
          %v2414 = vsel %vm2398, %v2311, %v2406
          %v2415 = vsel %vm2399, %v2313, %v2407
          %v2416 = vsel %vm2400, %v2388, %v2408
          %v2417 = vsel %vm2401, %v2390, %v2409
          %v2418 = vsel %vm2402, %v2317, %v2410
          %v2419 = vsel %vm2403, %v2319, %v2411
          %v2420 = vsel %vm2404, %v2394, %v2412
          %v2421 = vsel %vm2405, %v2396, %v2413
          %v2422 = vld [vmem:[#allocation7] sm:$0xff]
          %v2423 = vld [vmem:[#allocation7 + $0x8] sm:$0xff]
          %v2424 = vld [vmem:[#allocation7 + $0x10] sm:$0xff]
          %v2425 = vld [vmem:[#allocation7 + $0x18] sm:$0xff]
          %v2426 = vld [vmem:[#allocation7 + $0x20] sm:$0xff]
          %v2427 = vld [vmem:[#allocation7 + $0x28] sm:$0xff]
          %v2428 = vld [vmem:[#allocation7 + $0x30] sm:$0xff]
          %v2429 = vld [vmem:[#allocation7 + $0x38] sm:$0xff]
          %v2430 = vld [vmem:[#allocation7 + $0x40] sm:$0xff]
          %v2431 = vld [vmem:[#allocation7 + $0x48] sm:$0xff]
          %v2432 = vld [vmem:[#allocation7 + $0x50] sm:$0xff]
          %v2433 = vld [vmem:[#allocation7 + $0x58] sm:$0xff]
          %v2434 = vld [vmem:[#allocation7 + $0x60] sm:$0xff]
          %v2435 = vld [vmem:[#allocation7 + $0x68] sm:$0xff]
          %v2436 = vld [vmem:[#allocation7 + $0x70] sm:$0xff]
          %v2437 = vld [vmem:[#allocation7 + $0x78] sm:$0xff]
          %v2438 = vld [vmem:[#allocation7 + $0x80] sm:$0xff]
          %v2439 = vld [vmem:[#allocation7 + $0x88] sm:$0xff]
          %v2440 = vld [vmem:[#allocation7 + $0x90] sm:$0xff]
          %v2441 = vld [vmem:[#allocation7 + $0x98] sm:$0xff]
          %v2442 = vld [vmem:[#allocation7 + $0xa0] sm:$0xff]
          %v2443 = vld [vmem:[#allocation7 + $0xa8] sm:$0xff]
          %v2444 = vld [vmem:[#allocation7 + $0xb0] sm:$0xff]
          %v2445 = vld [vmem:[#allocation7 + $0xb8] sm:$0xff]
          %v2446 = vld [vmem:[#allocation7 + $0xc0] sm:$0xff]
          %v2447 = vld [vmem:[#allocation7 + $0xc8] sm:$0xff]
          %v2448 = vld [vmem:[#allocation7 + $0xd0] sm:$0xff]
          %v2449 = vld [vmem:[#allocation7 + $0xd8] sm:$0xff]
          %v2450 = vld [vmem:[#allocation7 + $0xe0] sm:$0xff]
          %v2451 = vld [vmem:[#allocation7 + $0xe8] sm:$0xff]
          %v2452 = vld [vmem:[#allocation7 + $0xf0] sm:$0xff]
          %v2453 = vld [vmem:[#allocation7 + $0xf8] sm:$0xff]
          %v2454 = vld [vmem:[#allocation7 + $0x100] sm:$0xff]
          %v2455 = vld [vmem:[#allocation7 + $0x108] sm:$0xff]
          %v2456 = vld [vmem:[#allocation7 + $0x110] sm:$0xff]
          %v2457 = vld [vmem:[#allocation7 + $0x118] sm:$0xff]
          %v2458 = vld [vmem:[#allocation7 + $0x120] sm:$0xff]
          %v2459 = vld [vmem:[#allocation7 + $0x128] sm:$0xff]
          %v2460 = vld [vmem:[#allocation7 + $0x130] sm:$0xff]
          %v2461 = vld [vmem:[#allocation7 + $0x138] sm:$0xff]
          %v2462 = vld [vmem:[#allocation7 + $0x140] sm:$0xff]
          %v2463 = vld [vmem:[#allocation7 + $0x148] sm:$0xff]
          %v2464 = vld [vmem:[#allocation7 + $0x150] sm:$0xff]
          %v2465 = vld [vmem:[#allocation7 + $0x158] sm:$0xff]
          %v2466 = vld [vmem:[#allocation7 + $0x160] sm:$0xff]
          %v2467 = vld [vmem:[#allocation7 + $0x168] sm:$0xff]
          %v2468 = vld [vmem:[#allocation7 + $0x170] sm:$0xff]
          %v2469 = vld [vmem:[#allocation7 + $0x178] sm:$0xff]
          %v2470 = vld [vmem:[#allocation7 + $0x180] sm:$0xff]
          %v2471 = vld [vmem:[#allocation7 + $0x188] sm:$0xff]
          %v2472 = vld [vmem:[#allocation7 + $0x190] sm:$0xff]
          %v2473 = vld [vmem:[#allocation7 + $0x198] sm:$0xff]
          %v2474 = vld [vmem:[#allocation7 + $0x1a0] sm:$0xff]
          %v2475 = vld [vmem:[#allocation7 + $0x1a8] sm:$0xff]
          %v2476 = vld [vmem:[#allocation7 + $0x1b0] sm:$0xff]
          %v2477 = vld [vmem:[#allocation7 + $0x1b8] sm:$0xff]
          %v2478 = vld [vmem:[#allocation7 + $0x1c0] sm:$0xff]
          %v2479 = vld [vmem:[#allocation7 + $0x1c8] sm:$0xff]
          %v2480 = vld [vmem:[#allocation7 + $0x1d0] sm:$0xff]
          %v2481 = vld [vmem:[#allocation7 + $0x1d8] sm:$0xff]
          %v2482 = vld [vmem:[#allocation7 + $0x1e0] sm:$0xff]
          %v2483 = vld [vmem:[#allocation7 + $0x1e8] sm:$0xff]
          %v2484 = vld [vmem:[#allocation7 + $0x1f0] sm:$0xff]
          %v2485 = vld [vmem:[#allocation7 + $0x1f8] sm:$0xff]
          %v2486 = vld [vmem:[#allocation7 + $0x200] sm:$0xff]
          %v2487 = vld [vmem:[#allocation7 + $0x208] sm:$0xff]
          %v2488 = vld [vmem:[#allocation7 + $0x210] sm:$0xff]
          %v2489 = vld [vmem:[#allocation7 + $0x218] sm:$0xff]
          %v2490 = vld [vmem:[#allocation7 + $0x220] sm:$0xff]
          %v2491 = vld [vmem:[#allocation7 + $0x228] sm:$0xff]
          %v2492 = vld [vmem:[#allocation7 + $0x230] sm:$0xff]
          %v2493 = vld [vmem:[#allocation7 + $0x238] sm:$0xff]
          %v2494 = vld [vmem:[#allocation7 + $0x240] sm:$0xff]
          %v2495 = vld [vmem:[#allocation7 + $0x248] sm:$0xff]
          %v2496 = vld [vmem:[#allocation7 + $0x250] sm:$0xff]
          %v2497 = vld [vmem:[#allocation7 + $0x258] sm:$0xff]
          %v2498 = vld [vmem:[#allocation7 + $0x260] sm:$0xff]
          %v2499 = vld [vmem:[#allocation7 + $0x268] sm:$0xff]
          %v2500 = vld [vmem:[#allocation7 + $0x270] sm:$0xff]
          %v2501 = vld [vmem:[#allocation7 + $0x278] sm:$0xff]
          %v2502 = vld [vmem:[#allocation7 + $0x280] sm:$0xff]
          %v2503 = vld [vmem:[#allocation7 + $0x288] sm:$0xff]
          %v2504 = vld [vmem:[#allocation7 + $0x290] sm:$0xff]
          %v2505 = vld [vmem:[#allocation7 + $0x298] sm:$0xff]
          %v2506 = vld [vmem:[#allocation7 + $0x2a0] sm:$0xff]
          %v2507 = vld [vmem:[#allocation7 + $0x2a8] sm:$0xff]
          %v2508 = vld [vmem:[#allocation7 + $0x2b0] sm:$0xff]
          %v2509 = vld [vmem:[#allocation7 + $0x2b8] sm:$0xff]
          %v2510 = vld [vmem:[#allocation7 + $0x2c0] sm:$0xff]
          %v2511 = vld [vmem:[#allocation7 + $0x2c8] sm:$0xff]
          %v2512 = vld [vmem:[#allocation7 + $0x2d0] sm:$0xff]
          %v2513 = vld [vmem:[#allocation7 + $0x2d8] sm:$0xff]
          %v2514 = vld [vmem:[#allocation7 + $0x2e0] sm:$0xff]
          %v2515 = vld [vmem:[#allocation7 + $0x2e8] sm:$0xff]
          %v2516 = vld [vmem:[#allocation7 + $0x2f0] sm:$0xff]
          %v2517 = vld [vmem:[#allocation7 + $0x2f8] sm:$0xff]
          %v2518 = vld [vmem:[#allocation7 + $0x300] sm:$0xff]
          %v2519 = vld [vmem:[#allocation7 + $0x308] sm:$0xff]
          %v2520 = vld [vmem:[#allocation7 + $0x310] sm:$0xff]
          %v2521 = vld [vmem:[#allocation7 + $0x318] sm:$0xff]
          %v2522 = vld [vmem:[#allocation7 + $0x320] sm:$0xff]
          %v2523 = vld [vmem:[#allocation7 + $0x328] sm:$0xff]
          %v2524 = vld [vmem:[#allocation7 + $0x330] sm:$0xff]
          %v2525 = vld [vmem:[#allocation7 + $0x338] sm:$0xff]
          %v2526 = vld [vmem:[#allocation7 + $0x340] sm:$0xff]
          %v2527 = vld [vmem:[#allocation7 + $0x348] sm:$0xff]
          %v2528 = vld [vmem:[#allocation7 + $0x350] sm:$0xff]
          %v2529 = vld [vmem:[#allocation7 + $0x358] sm:$0xff]
          %v2530 = vld [vmem:[#allocation7 + $0x360] sm:$0xff]
          %v2531 = vld [vmem:[#allocation7 + $0x368] sm:$0xff]
          %v2532 = vld [vmem:[#allocation7 + $0x370] sm:$0xff]
          %v2533 = vld [vmem:[#allocation7 + $0x378] sm:$0xff]
          %v2534 = vld [vmem:[#allocation7 + $0x380] sm:$0xff]
          %v2535 = vld [vmem:[#allocation7 + $0x388] sm:$0xff]
          %v2536 = vld [vmem:[#allocation7 + $0x390] sm:$0xff]
          %v2537 = vld [vmem:[#allocation7 + $0x398] sm:$0xff]
          %v2538 = vld [vmem:[#allocation7 + $0x3a0] sm:$0xff]
          %v2539 = vld [vmem:[#allocation7 + $0x3a8] sm:$0xff]
          %v2540 = vld [vmem:[#allocation7 + $0x3b0] sm:$0xff]
          %v2541 = vld [vmem:[#allocation7 + $0x3b8] sm:$0xff]
          %v2542 = vld [vmem:[#allocation7 + $0x3c0] sm:$0xff]
          %v2543 = vld [vmem:[#allocation7 + $0x3c8] sm:$0xff]
          %v2544 = vld [vmem:[#allocation7 + $0x3d0] sm:$0xff]
          %v2545 = vld [vmem:[#allocation7 + $0x3d8] sm:$0xff]
          %v2546 = vld [vmem:[#allocation7 + $0x3e0] sm:$0xff]
          %v2547 = vld [vmem:[#allocation7 + $0x3e8] sm:$0xff]
          %v2548 = vld [vmem:[#allocation7 + $0x3f0] sm:$0xff]
          %v2549 = vld [vmem:[#allocation7 + $0x3f8] sm:$0xff]
          %v2550 = vld [vmem:[%s6] sm:$0x3]
          %v2552 = vlaneseq
          %v2553 = vshrl.u32 %v2552, 7
          %v2554 = vsub.s32 0, %v2553
          %v2555 = vrot.slane %v2550, %v2554
          %v2556 = vlaneseq
          %v2557 = vshrl.u32 %v2556, 7
          %v2558 = vsub.s32 1, %v2557
          %v2559 = vrot.slane %v2550, %v2558
          %2562 = vmatprep.subr.mxu0 %v2423
          %2563 = vmatpush1.msra.mxu0 %v2422
          %2564 = vmatprep.subr.mxu0 %v2425
          %2565 = vmatpush1.msra.mxu0 %v2424
          %2566 = vmatprep.subr.mxu0 %v2427
          %2567 = vmatpush1.msra.mxu0 %v2426
          %2568 = vmatprep.subr.mxu0 %v2429
          %2569 = vmatpush1.msra.mxu0 %v2428
          %2570 = vmatprep.subr.mxu0 %v2431
          %2571 = vmatpush1.msra.mxu0 %v2430
          %2572 = vmatprep.subr.mxu0 %v2433
          %2573 = vmatpush1.msra.mxu0 %v2432
          %2574 = vmatprep.subr.mxu0 %v2435
          %2575 = vmatpush1.msra.mxu0 %v2434
          %2576 = vmatprep.subr.mxu0 %v2437
          %2577 = vmatpush1.msra.mxu0 %v2436
          %2578 = vmatprep.subr.mxu0 %v2439
          %2579 = vmatpush1.msra.mxu0 %v2438
          %2580 = vmatprep.subr.mxu0 %v2441
          %2581 = vmatpush1.msra.mxu0 %v2440
          %2582 = vmatprep.subr.mxu0 %v2443
          %2583 = vmatpush1.msra.mxu0 %v2442
          %2584 = vmatprep.subr.mxu0 %v2445
          %2585 = vmatpush1.msra.mxu0 %v2444
          %2586 = vmatprep.subr.mxu0 %v2447
          %2587 = vmatpush1.msra.mxu0 %v2446
          %2588 = vmatprep.subr.mxu0 %v2449
          %2589 = vmatpush1.msra.mxu0 %v2448
          %2590 = vmatprep.subr.mxu0 %v2451
          %2591 = vmatpush1.msra.mxu0 %v2450
          %2592 = vmatprep.subr.mxu0 %v2453
          %2593 = vmatpush1.msra.mxu0 %v2452
          %2594 = vmatprep.subr.mxu0 %v2455
          %2595 = vmatpush1.msra.mxu0 %v2454
          %2596 = vmatprep.subr.mxu0 %v2457
          %2597 = vmatpush1.msra.mxu0 %v2456
          %2598 = vmatprep.subr.mxu0 %v2459
          %2599 = vmatpush1.msra.mxu0 %v2458
          %2600 = vmatprep.subr.mxu0 %v2461
          %2601 = vmatpush1.msra.mxu0 %v2460
          %2602 = vmatprep.subr.mxu0 %v2463
          %2603 = vmatpush1.msra.mxu0 %v2462
          %2604 = vmatprep.subr.mxu0 %v2465
          %2605 = vmatpush1.msra.mxu0 %v2464
          %2606 = vmatprep.subr.mxu0 %v2467
          %2607 = vmatpush1.msra.mxu0 %v2466
          %2608 = vmatprep.subr.mxu0 %v2469
          %2609 = vmatpush1.msra.mxu0 %v2468
          %2610 = vmatprep.subr.mxu0 %v2471
          %2611 = vmatpush1.msra.mxu0 %v2470
          %2612 = vmatprep.subr.mxu0 %v2473
          %2613 = vmatpush1.msra.mxu0 %v2472
          %2614 = vmatprep.subr.mxu0 %v2475
          %2615 = vmatpush1.msra.mxu0 %v2474
          %2616 = vmatprep.subr.mxu0 %v2477
          %2617 = vmatpush1.msra.mxu0 %v2476
          %2618 = vmatprep.subr.mxu0 %v2479
          %2619 = vmatpush1.msra.mxu0 %v2478
          %2620 = vmatprep.subr.mxu0 %v2481
          %2621 = vmatpush1.msra.mxu0 %v2480
          %2622 = vmatprep.subr.mxu0 %v2483
          %2623 = vmatpush1.msra.mxu0 %v2482
          %2624 = vmatprep.subr.mxu0 %v2485
          %2625 = vmatpush1.msra.mxu0 %v2484
          %2626 = vmatprep.mubr.f32.mxu0 %v2415
          %2627 = vmatmul.mubr.f32.gmra.mrb[0].mxu0 %v2414
          %v2628 = vpop.f32.mrb[0].mxu0
          %v2629 = vadd.f32 %v2555, %v2628
          %v2630 = vpop.f32.mrb[0].mxu0
          %v2631 = vadd.f32 %v2559, %v2630
          %2632 = vmatprep.mubr.f32.mxu0 %v2419
          %2633 = vmatmul.mubr.f32.gmra.mrb[0].mxu0 %v2418
          %v2634 = vpop.f32.mrb[0].mxu0
          %v2635 = vadd.f32 %v2555, %v2634
          %v2636 = vpop.f32.mrb[0].mxu0
          %v2637 = vadd.f32 %v2559, %v2636
          %2638 = vdwg.mxu0
          %2639 = vmatprep.subr.mxu0 %v2487
          %2640 = vmatpush1.msra.mxu0 %v2486
          %2641 = vmatprep.subr.mxu0 %v2489
          %2642 = vmatpush1.msra.mxu0 %v2488
          %2643 = vmatprep.subr.mxu0 %v2491
          %2644 = vmatpush1.msra.mxu0 %v2490
          %2645 = vmatprep.subr.mxu0 %v2493
          %2646 = vmatpush1.msra.mxu0 %v2492
          %2647 = vmatprep.subr.mxu0 %v2495
          %2648 = vmatpush1.msra.mxu0 %v2494
          %2649 = vmatprep.subr.mxu0 %v2497
          %2650 = vmatpush1.msra.mxu0 %v2496
          %2651 = vmatprep.subr.mxu0 %v2499
          %2652 = vmatpush1.msra.mxu0 %v2498
          %2653 = vmatprep.subr.mxu0 %v2501
          %2654 = vmatpush1.msra.mxu0 %v2500
          %2655 = vmatprep.subr.mxu0 %v2503
          %2656 = vmatpush1.msra.mxu0 %v2502
          %2657 = vmatprep.subr.mxu0 %v2505
          %2658 = vmatpush1.msra.mxu0 %v2504
          %2659 = vmatprep.subr.mxu0 %v2507
          %2660 = vmatpush1.msra.mxu0 %v2506
          %2661 = vmatprep.subr.mxu0 %v2509
          %2662 = vmatpush1.msra.mxu0 %v2508
          %2663 = vmatprep.subr.mxu0 %v2511
          %2664 = vmatpush1.msra.mxu0 %v2510
          %2665 = vmatprep.subr.mxu0 %v2513
          %2666 = vmatpush1.msra.mxu0 %v2512
          %2667 = vmatprep.subr.mxu0 %v2515
          %2668 = vmatpush1.msra.mxu0 %v2514
          %2669 = vmatprep.subr.mxu0 %v2517
          %2670 = vmatpush1.msra.mxu0 %v2516
          %2671 = vmatprep.subr.mxu0 %v2519
          %2672 = vmatpush1.msra.mxu0 %v2518
          %2673 = vmatprep.subr.mxu0 %v2521
          %2674 = vmatpush1.msra.mxu0 %v2520
          %2675 = vmatprep.subr.mxu0 %v2523
          %2676 = vmatpush1.msra.mxu0 %v2522
          %2677 = vmatprep.subr.mxu0 %v2525
          %2678 = vmatpush1.msra.mxu0 %v2524
          %2679 = vmatprep.subr.mxu0 %v2527
          %2680 = vmatpush1.msra.mxu0 %v2526
          %2681 = vmatprep.subr.mxu0 %v2529
          %2682 = vmatpush1.msra.mxu0 %v2528
          %2683 = vmatprep.subr.mxu0 %v2531
          %2684 = vmatpush1.msra.mxu0 %v2530
          %2685 = vmatprep.subr.mxu0 %v2533
          %2686 = vmatpush1.msra.mxu0 %v2532
          %2687 = vmatprep.subr.mxu0 %v2535
          %2688 = vmatpush1.msra.mxu0 %v2534
          %2689 = vmatprep.subr.mxu0 %v2537
          %2690 = vmatpush1.msra.mxu0 %v2536
          %2691 = vmatprep.subr.mxu0 %v2539
          %2692 = vmatpush1.msra.mxu0 %v2538
          %2693 = vmatprep.subr.mxu0 %v2541
          %2694 = vmatpush1.msra.mxu0 %v2540
          %2695 = vmatprep.subr.mxu0 %v2543
          %2696 = vmatpush1.msra.mxu0 %v2542
          %2697 = vmatprep.subr.mxu0 %v2545
          %2698 = vmatpush1.msra.mxu0 %v2544
          %2699 = vmatprep.subr.mxu0 %v2547
          %2700 = vmatpush1.msra.mxu0 %v2546
          %2701 = vmatprep.subr.mxu0 %v2549
          %2702 = vmatpush1.msra.mxu0 %v2548
          %2703 = vmatprep.mubr.f32.mxu0 %v2417
          %2704 = vmatmul.mubr.f32.gmra.mrb[0].mxu0 %v2416
          %v2705 = vpop.f32.mrb[0].mxu0
          %v2706 = vadd.f32 %v2629, %v2705
          %v2707 = vpop.f32.mrb[0].mxu0
          %v2708 = vadd.f32 %v2631, %v2707
          %2709 = vmatprep.mubr.f32.mxu0 %v2421
          %2710 = vmatmul.mubr.f32.gmra.mrb[0].mxu0 %v2420
          %v2711 = vpop.f32.mrb[0].mxu0
          %v2712 = vadd.f32 %v2635, %v2711
          %v2713 = vpop.f32.mrb[0].mxu0
          %v2714 = vadd.f32 %v2637, %v2713
          %2715 = vdwg.mxu0
          %vm2716 = vcmp.gt.f32.partialorder %v2706, 0.0
          %vm2717 = vcmp.gt.f32.partialorder %v2708, 0.0
          %vm2718 = vcmp.gt.f32.partialorder %v2712, 0.0
          %vm2719 = vcmp.gt.f32.partialorder %v2714, 0.0
          %v2720 = vmul.f32 %v2706, 0.01
          %v2721 = vmul.f32 %v2708, 0.01
          %v2722 = vmul.f32 %v2712, 0.01
          %v2723 = vmul.f32 %v2714, 0.01
          %v2724 = vsel %vm2716, %v2706, %v2720
          %v2725 = vsel %vm2717, %v2708, %v2721
          %v2726 = vsel %vm2718, %v2712, %v2722
          %v2727 = vsel %vm2719, %v2714, %v2723
          %v2728 = vld [vmem:[#allocation9] sm:$0xff]
          %v2729 = vld [vmem:[#allocation9 + $0x8] sm:$0xff]
          %v2730 = vld [vmem:[#allocation9 + $0x10] sm:$0xff]
          %v2731 = vld [vmem:[#allocation9 + $0x18] sm:$0xff]
          %v2732 = vld [vmem:[#allocation9 + $0x20] sm:$0xff]
          %v2733 = vld [vmem:[#allocation9 + $0x28] sm:$0xff]
          %v2734 = vld [vmem:[#allocation9 + $0x30] sm:$0xff]
          %v2735 = vld [vmem:[#allocation9 + $0x38] sm:$0xff]
          %v2736 = vld [vmem:[#allocation9 + $0x40] sm:$0xff]
          %v2737 = vld [vmem:[#allocation9 + $0x48] sm:$0xff]
          %v2738 = vld [vmem:[#allocation9 + $0x50] sm:$0xff]
          %v2739 = vld [vmem:[#allocation9 + $0x58] sm:$0xff]
          %v2740 = vld [vmem:[#allocation9 + $0x60] sm:$0xff]
          %v2741 = vld [vmem:[#allocation9 + $0x68] sm:$0xff]
          %v2742 = vld [vmem:[#allocation9 + $0x70] sm:$0xff]
          %v2743 = vld [vmem:[#allocation9 + $0x78] sm:$0xff]
          %v2744 = vld [vmem:[#allocation9 + $0x80] sm:$0xff]
          %v2745 = vld [vmem:[#allocation9 + $0x88] sm:$0xff]
          %v2746 = vld [vmem:[#allocation9 + $0x90] sm:$0xff]
          %v2747 = vld [vmem:[#allocation9 + $0x98] sm:$0xff]
          %v2748 = vld [vmem:[#allocation9 + $0xa0] sm:$0xff]
          %v2749 = vld [vmem:[#allocation9 + $0xa8] sm:$0xff]
          %v2750 = vld [vmem:[#allocation9 + $0xb0] sm:$0xff]
          %v2751 = vld [vmem:[#allocation9 + $0xb8] sm:$0xff]
          %v2752 = vld [vmem:[#allocation9 + $0xc0] sm:$0xff]
          %v2753 = vld [vmem:[#allocation9 + $0xc8] sm:$0xff]
          %v2754 = vld [vmem:[#allocation9 + $0xd0] sm:$0xff]
          %v2755 = vld [vmem:[#allocation9 + $0xd8] sm:$0xff]
          %v2756 = vld [vmem:[#allocation9 + $0xe0] sm:$0xff]
          %v2757 = vld [vmem:[#allocation9 + $0xe8] sm:$0xff]
          %v2758 = vld [vmem:[#allocation9 + $0xf0] sm:$0xff]
          %v2759 = vld [vmem:[#allocation9 + $0xf8] sm:$0xff]
          %v2760 = vld [vmem:[%s8] sm:$0x1]
          %v2762 = vlaneseq
          %v2763 = vshrl.u32 %v2762, 7
          %v2764 = vsub.s32 0, %v2763
          %v2765 = vrot.slane %v2760, %v2764
          %2767 = vmatprep.subr.mxu0 0.0
          %2768 = vmatpush1.msra.mxu0 %v2728
          %2769 = vmatprep.subr.mxu0 0.0
          %2770 = vmatpush1.msra.mxu0 %v2729
          %2771 = vmatprep.subr.mxu0 0.0
          %2772 = vmatpush1.msra.mxu0 %v2730
          %2773 = vmatprep.subr.mxu0 0.0
          %2774 = vmatpush1.msra.mxu0 %v2731
          %2775 = vmatprep.subr.mxu0 0.0
          %2776 = vmatpush1.msra.mxu0 %v2732
          %2777 = vmatprep.subr.mxu0 0.0
          %2778 = vmatpush1.msra.mxu0 %v2733
          %2779 = vmatprep.subr.mxu0 0.0
          %2780 = vmatpush1.msra.mxu0 %v2734
          %2781 = vmatprep.subr.mxu0 0.0
          %2782 = vmatpush1.msra.mxu0 %v2735
          %2783 = vmatprep.subr.mxu0 0.0
          %2784 = vmatpush1.msra.mxu0 %v2736
          %2785 = vmatprep.subr.mxu0 0.0
          %2786 = vmatpush1.msra.mxu0 %v2737
          %2787 = vmatprep.subr.mxu0 0.0
          %2788 = vmatpush1.msra.mxu0 %v2738
          %2789 = vmatprep.subr.mxu0 0.0
          %2790 = vmatpush1.msra.mxu0 %v2739
          %2791 = vmatprep.subr.mxu0 0.0
          %2792 = vmatpush1.msra.mxu0 %v2740
          %2793 = vmatprep.subr.mxu0 0.0
          %2794 = vmatpush1.msra.mxu0 %v2741
          %2795 = vmatprep.subr.mxu0 0.0
          %2796 = vmatpush1.msra.mxu0 %v2742
          %2797 = vmatprep.subr.mxu0 0.0
          %2798 = vmatpush1.msra.mxu0 %v2743
          %2799 = vmatprep.subr.mxu0 0.0
          %2800 = vmatpush1.msra.mxu0 %v2744
          %2801 = vmatprep.subr.mxu0 0.0
          %2802 = vmatpush1.msra.mxu0 %v2745
          %2803 = vmatprep.subr.mxu0 0.0
          %2804 = vmatpush1.msra.mxu0 %v2746
          %2805 = vmatprep.subr.mxu0 0.0
          %2806 = vmatpush1.msra.mxu0 %v2747
          %2807 = vmatprep.subr.mxu0 0.0
          %2808 = vmatpush1.msra.mxu0 %v2748
          %2809 = vmatprep.subr.mxu0 0.0
          %2810 = vmatpush1.msra.mxu0 %v2749
          %2811 = vmatprep.subr.mxu0 0.0
          %2812 = vmatpush1.msra.mxu0 %v2750
          %2813 = vmatprep.subr.mxu0 0.0
          %2814 = vmatpush1.msra.mxu0 %v2751
          %2815 = vmatprep.subr.mxu0 0.0
          %2816 = vmatpush1.msra.mxu0 %v2752
          %2817 = vmatprep.subr.mxu0 0.0
          %2818 = vmatpush1.msra.mxu0 %v2753
          %2819 = vmatprep.subr.mxu0 0.0
          %2820 = vmatpush1.msra.mxu0 %v2754
          %2821 = vmatprep.subr.mxu0 0.0
          %2822 = vmatpush1.msra.mxu0 %v2755
          %2823 = vmatprep.subr.mxu0 0.0
          %2824 = vmatpush1.msra.mxu0 %v2756
          %2825 = vmatprep.subr.mxu0 0.0
          %2826 = vmatpush1.msra.mxu0 %v2757
          %2827 = vmatprep.subr.mxu0 0.0
          %2828 = vmatpush1.msra.mxu0 %v2758
          %2829 = vmatprep.subr.mxu0 0.0
          %2830 = vmatpush1.msra.mxu0 %v2759
          %2831 = vmatprep.mubr.f32.mxu0 %v2725
          %2832 = vmatmul.mubr.f32.gmra.mrb[0].mxu0 %v2724
          %v2833 = vpop.f32.mrb[0].mxu0
          %v2834 = vadd.f32 %v2765, %v2833
          %v2835 = vpop.f32.mrb[0].mxu0
          %2836 = vmatprep.mubr.f32.mxu0 %v2727
          %2837 = vmatmul.mubr.f32.gmra.mrb[0].mxu0 %v2726
          %v2838 = vpop.f32.mrb[0].mxu0
          %v2839 = vadd.f32 %v2765, %v2838
          %v2840 = vpop.f32.mrb[0].mxu0
          %2841 = vdwg.mxu0
          %vm2842 = vcmp.gt.f32.partialorder %v2834, 0.0
          %vm2843 = vcmp.gt.f32.partialorder %v2839, 0.0
          %v2844 = vmul.f32 %v2834, 0.01
          %v2845 = vmul.f32 %v2839, 0.01
          %v2846 = vsel %vm2842, %v2834, %v2844
          %v2847 = vsel %vm2843, %v2839, %v2845
          %v2848 = vld [vmem:[#allocation10] sm:$0xff]
          %v2849 = vld [vmem:[#allocation10 + $0x8] sm:$0xff]
          %v2850 = vld [vmem:[#allocation10 + $0x10] sm:$0xff]
          %v2851 = vld [vmem:[#allocation10 + $0x18] sm:$0xff]
          %v2852 = vld [vmem:[#allocation10 + $0x20] sm:$0xff]
          %v2853 = vld [vmem:[#allocation10 + $0x28] sm:$0xff]
          %v2854 = vld [vmem:[#allocation10 + $0x30] sm:$0xff]
          %v2855 = vld [vmem:[#allocation10 + $0x38] sm:$0xff]
          %v2856 = vld [vmem:[#allocation10 + $0x40] sm:$0xff]
          %v2857 = vld [vmem:[#allocation10 + $0x48] sm:$0xff]
          %v2858 = vld [vmem:[#allocation10 + $0x50] sm:$0xff]
          %v2859 = vld [vmem:[#allocation10 + $0x58] sm:$0xff]
          %v2860 = vld [vmem:[#allocation10 + $0x60] sm:$0xff]
          %v2861 = vld [vmem:[#allocation10 + $0x68] sm:$0xff]
          %v2862 = vld [vmem:[#allocation10 + $0x70] sm:$0xff]
          %v2863 = vld [vmem:[#allocation10 + $0x78] sm:$0xff]
          %v2864 = vld [vmem:[%s10] sm:$0x1]
          %v2866 = vlaneseq
          %v2867 = vshrl.u32 %v2866, 7
          %v2868 = vsub.s32 0, %v2867
          %v2869 = vrot.slane %v2864, %v2868
          %2871 = vmatprep.subr.mxu0 0.0
          %2872 = vmatpush1.msra.mxu0 %v2848
          %2873 = vmatprep.subr.mxu0 0.0
          %2874 = vmatpush1.msra.mxu0 %v2849
          %2875 = vmatprep.subr.mxu0 0.0
          %2876 = vmatpush1.msra.mxu0 %v2850
          %2877 = vmatprep.subr.mxu0 0.0
          %2878 = vmatpush1.msra.mxu0 %v2851
          %2879 = vmatprep.subr.mxu0 0.0
          %2880 = vmatpush1.msra.mxu0 %v2852
          %2881 = vmatprep.subr.mxu0 0.0
          %2882 = vmatpush1.msra.mxu0 %v2853
          %2883 = vmatprep.subr.mxu0 0.0
          %2884 = vmatpush1.msra.mxu0 %v2854
          %2885 = vmatprep.subr.mxu0 0.0
          %2886 = vmatpush1.msra.mxu0 %v2855
          %2887 = vmatprep.subr.mxu0 0.0
          %2888 = vmatpush1.msra.mxu0 %v2856
          %2889 = vmatprep.subr.mxu0 0.0
          %2890 = vmatpush1.msra.mxu0 %v2857
          %2891 = vmatprep.subr.mxu0 0.0
          %2892 = vmatpush1.msra.mxu0 %v2858
          %2893 = vmatprep.subr.mxu0 0.0
          %2894 = vmatpush1.msra.mxu0 %v2859
          %2895 = vmatprep.subr.mxu0 0.0
          %2896 = vmatpush1.msra.mxu0 %v2860
          %2897 = vmatprep.subr.mxu0 0.0
          %2898 = vmatpush1.msra.mxu0 %v2861
          %2899 = vmatprep.subr.mxu0 0.0
          %2900 = vmatpush1.msra.mxu0 %v2862
          %2901 = vmatprep.subr.mxu0 0.0
          %2902 = vmatpush1.msra.mxu0 %v2863
          %2903 = vmatprep.subr.mxu0 0.0
          %2904 = vmatpush1.msra.mxu0 0.0
          %2905 = vmatprep.subr.mxu0 0.0
          %2906 = vmatpush1.msra.mxu0 0.0
          %2907 = vmatprep.subr.mxu0 0.0
          %2908 = vmatpush1.msra.mxu0 0.0
          %2909 = vmatprep.subr.mxu0 0.0
          %2910 = vmatpush1.msra.mxu0 0.0
          %2911 = vmatprep.subr.mxu0 0.0
          %2912 = vmatpush1.msra.mxu0 0.0
          %2913 = vmatprep.subr.mxu0 0.0
          %2914 = vmatpush1.msra.mxu0 0.0
          %2915 = vmatprep.subr.mxu0 0.0
          %2916 = vmatpush1.msra.mxu0 0.0
          %2917 = vmatprep.subr.mxu0 0.0
          %2918 = vmatpush1.msra.mxu0 0.0
          %2919 = vmatprep.subr.mxu0 0.0
          %2920 = vmatpush1.msra.mxu0 0.0
          %2921 = vmatprep.subr.mxu0 0.0
          %2922 = vmatpush1.msra.mxu0 0.0
          %2923 = vmatprep.subr.mxu0 0.0
          %2924 = vmatpush1.msra.mxu0 0.0
          %2925 = vmatprep.subr.mxu0 0.0
          %2926 = vmatpush1.msra.mxu0 0.0
          %2927 = vmatprep.subr.mxu0 0.0
          %2928 = vmatpush1.msra.mxu0 0.0
          %2929 = vmatprep.subr.mxu0 0.0
          %2930 = vmatpush1.msra.mxu0 0.0
          %2931 = vmatprep.subr.mxu0 0.0
          %2932 = vmatpush1.msra.mxu0 0.0
          %2933 = vmatprep.subr.mxu0 0.0
          %2934 = vmatpush1.msra.mxu0 0.0
          %2935 = vmatprep.mubr.f32.mxu0 0.0
          %2936 = vmatmul.mubr.f32.gmra.mrb[0].mxu0 %v2846
          %v2937 = vpop.f32.mrb[0].mxu0
          %v2938 = vadd.f32 %v2869, %v2937
          %v2939 = vpop.f32.mrb[0].mxu0
          %2940 = vmatprep.mubr.f32.mxu0 0.0
          %2941 = vmatmul.mubr.f32.gmra.mrb[0].mxu0 %v2847
          %v2942 = vpop.f32.mrb[0].mxu0
          %v2943 = vadd.f32 %v2869, %v2942
          %v2944 = vpop.f32.mrb[0].mxu0
          %2945 = vdwg.mxu0
          %v2946 = vlaneseq
          %v2947 = vand.u32 %v2946, 127
          %vm2948 = vcmp.lt.s32.totalorder %v2947, 10
          %v2949 = vsel %vm2948, %v2938, -1e+30
          %v2950 = vsel %vm2948, %v2943, -1e+30
          %2951 = vmax.xlane.f32.xlu0 %v2949
          %v2952 = vpop.xlane.xlu0 %2951
          %v2953 = vsel %vm2131, %v2950, -inf
          %2954 = vmax.xlane.f32.xlu0 %v2953
          %v2955 = vpop.xlane.xlu0 %2954
          %v2956 = vsub.f32 %v2949, %v2952
          %v2957 = vsub.f32 %v2950, %v2955
          %v2958 = vmul.f32 %v2956, 1.442695
          %v2959 = vpow.pop %v2958
          %v2960 = vmul.f32 %v2957, 1.442695
          %v2961 = vpow.pop %v2960
          %2962 = vadd.xlane.f32.xlu0 %v2959
          %v2963 = vpop.xlane.xlu0 %2962
          %v2964 = vsel %vm2131, %v2961, 0.0
          %2965 = vadd.xlane.f32.xlu0 %v2964
          %v2966 = vpop.xlane.xlu0 %2965
          %v2967 = vrcp.pop %v2963
          %v2968 = vmul.f32 %v2959, %v2967
          %v2969 = vrcp.pop %v2966
          %v2970 = vmul.f32 %v2961, %v2969
          %2971 = vst [vmem:[%s536] sm:$0xff] %v2968
          %2972 = vst [vmem:[%s536 + $0x8] sm:$0x1] %v2970
        $region100: #{tcnn_auxcl_forward.1} parent=63 // pred_fallthru
          _
        %p2973 = scmp.lt.s32.totalorder %s34, 1
        %s2974 = scalar_select %p2973, %s34, 1
        %s2975 = smul.addr %s2974, 2
        %s2976 = smul.addr %s2975, 8
        %s2977 = scalar_lea.vmem %s11, %s2976
        %p2978 = scmp.lt.s32.totalorder %s34, 1
        %s2979 = scalar_select %p2978, %s34, 1
        %s2980 = smul.addr %s2979, 2
        %s2981 = smul.addr %s2980, 8
        %s2982 = scalar_lea.vmem %s12, %s2981
        // Predicated region
        $region101: #{tcnn_auxcl_forward.1} parent=63 // pred_check
          %p2983 = pneg %p298
        $region102: #{tcnn_auxcl_forward.1} parent=63 // pred_check_branch
          %2985 = sbr.rel (%p2983) target = $region104
        $region103: #{tcnn_auxcl_forward.1} parent=63 // pred_region
          _
        $region104: #{tcnn_auxcl_forward.1} parent=63 // pred_fallthru
          _
        // Predicated region
        $region105: #{tcnn_auxcl_forward.1} parent=63 // pred_check
          %p2986 = pneg %p324
        $region106: #{tcnn_auxcl_forward.1} parent=63 // pred_check_branch
          %2988 = sbr.rel (%p2986) target = $region108
        $region107: #{tcnn_auxcl_forward.1} parent=63 // pred_region
          _
        $region108: #{tcnn_auxcl_forward.1} parent=63 // pred_fallthru
          _
      $region64: #{tcnn_auxcl_forward.1} parent=5 // pred_fallthru
        _
      %p2989 = scmp.le.s32.totalorder 2, %s25
      // Predicated region
      $region109: #{tcnn_auxcl_forward.1} parent=5 // pred_check
        %p2990 = pneg %p2989
      $region110: #{tcnn_auxcl_forward.1} parent=5 // pred_check_branch
        %2992 = sbr.rel (%p2990) target = $region112
      $region111: #{tcnn_auxcl_forward.1} parent=5 // pred_region
        %s2993 = ssub.s32 %s25, 2
        // Predicated region
        $region113: #{tcnn_auxcl_forward.1} parent=111 // pred_check
          %p2994 = pneg %p304
        $region114: #{tcnn_auxcl_forward.1} parent=111 // pred_check_branch
          %2996 = sbr.rel (%p2994) target = $region116
        $region115: #{tcnn_auxcl_forward.1} parent=111 // pred_region
          %p2997 = scmp.lt.s32.totalorder %s36, 1
          %s2998 = scalar_select %p2997, %s36, 1
          %s2999 = smul.addr %s2998, 2
          %s3000 = smul.addr %s2999, 8
          %s3001 = scalar_lea.vmem %s11, %s3000
        $region116: #{tcnn_auxcl_forward.1} parent=111 // pred_fallthru
          _
        // Predicated region
        $region117: #{tcnn_auxcl_forward.1} parent=111 // pred_check
          %p3002 = pneg %p330
        $region118: #{tcnn_auxcl_forward.1} parent=111 // pred_check_branch
          %3004 = sbr.rel (%p3002) target = $region120
        $region119: #{tcnn_auxcl_forward.1} parent=111 // pred_region
          %p3005 = scmp.lt.s32.totalorder %s36, 1
          %s3006 = scalar_select %p3005, %s36, 1
          %s3007 = smul.addr %s3006, 2
          %s3008 = smul.addr %s3007, 8
          %s3009 = scalar_lea.vmem %s12, %s3008
        $region120: #{tcnn_auxcl_forward.1} parent=111 // pred_fallthru
          _
      $region112: #{tcnn_auxcl_forward.1} parent=5 // pred_fallthru
        _
    $region6: #{tcnn_auxcl_forward.1} parent=1 // loop_footer
      %s29 = sadd.s32 1, %s25
    $region7: #{tcnn_auxcl_forward.1} parent=1 // loop_footer_branch
      %24 = sbr.rel target = $region3
    $region8: #{tcnn_auxcl_forward.1} parent=1 // loop_exit
      _
    %3010 = vsyncpa [#allocation3], 1
    %s3011 = scalar_lea.sflag [#allocation3], 1
    %3012 = vsyncpa %s3011, 1
    %3013 = vsyncpa [#allocation5], 1
    %3014 = vsyncpa [#allocation8], 1
    %3015 = vsyncpa [#allocation11], 1

</llo_original>
